<compile_context>
chip_gen: v6e
topology: v6e:2x2x1
jax: 0.10.0
libtpu: 0.0.40
codegen_flags: <defaults>
</compile_context>

<pallas_src>
import jax
import jax.numpy as jnp
import numpy as np
from jax import lax
from jax.experimental import pallas as pl
from jax.experimental.pallas import tpu as pltpu


def _round_up(x, m):
    return ((x + m - 1) // m) * m


def make_gru_fc_kernel(num_layers, seq_len, batch, gate_pad, small_path, unroll):
    """Kernel body builder. All sizes are static. gate_pad = per-gate column width."""
    GP = gate_pad
    B = batch
    T = seq_len

    def kernel(*refs):
        # ---- unpack refs: inputs, output, (optional) scratch ------------------
        x_ref = refs[0]            # (T*B, F)  bf16, time-major flattened (row = t*B + b)
        s_ref = refs[1]            # (B, S)    f32 summary statistics
        idx = 2
        layer_refs = []
        for _ in range(num_layers):
            # w_i: (in_dim, 3GP) bf16 | w_h: (GP, 3GP) bf16 | b_g: (1, 3GP) f32 | b_hn: (1, GP) f32
            layer_refs.append(refs[idx:idx + 4])
            idx += 4
        fc_wh_ref, fc_ws_ref, fc_b_ref = refs[idx:idx + 3]   # (GP,O), (S,O), (1,O) f32
        idx += 3
        out_ref = refs[idx]        # (B, O)
        seq_scr = refs[idx + 1] if (not small_path and num_layers > 1) else None  # (T*B, GP) bf16

        def gru_step(gi_t, gh, h, b_hn):
            # Fused r/z sigmoid (one EUP issue); slices are lane-aligned since GP % 128 == 0.
            rz = jax.nn.sigmoid(gi_t[:, :2 * GP] + gh[:, :2 * GP])
            r = rz[:, :GP]
            z = rz[:, GP:]
            n = jnp.tanh(gi_t[:, 2 * GP:] + r * (gh[:, 2 * GP:] + b_hn))
            return (1.0 - z) * n + z * h

        layer_in = x_ref[...]      # layer 0 input, (T*B, F) bf16
        h_last = None
        for l in range(num_layers):
            w_i_ref, w_h_ref, b_g_ref, b_hn_ref = layer_refs[l]
            last_layer = (l == num_layers - 1)

            # ---- hoisted input-path projection: ONE big MXU matmul over all T steps ----
            # (b_ir+b_hr, b_iz+b_hz, b_in) are pre-folded into b_g.  The post-dot bias add
            # is negligible at these sizes vs. folding a ones-column into the matmul.
            gi = (jnp.dot(layer_in, w_i_ref[...], preferred_element_type=jnp.float32)
                  + b_g_ref[...])                              # (T*B, 3GP) f32

            b_hn = jnp.broadcast_to(b_hn_ref[...], (B, GP))    # hoisted broadcast, once/layer
            h0 = jnp.zeros((B, GP), jnp.float32)

            if small_path:
                # Fully unrolled: whole per-layer output sequence stays vreg-resident;
                # no VMEM round trip, no per-step dynamic sublane slice.
                h = h0
                outs = []
                for t in range(T):
                    gi_t = gi[t * B:(t + 1) * B, :]            # static slice, off the h-chain
                    gh = jnp.dot(h.astype(jnp.bfloat16), w_h_ref[...],
                                 preferred_element_type=jnp.float32)
                    h = gru_step(gi_t, gh, h, b_hn)
                    if not last_layer:
                        outs.append(h.astype(jnp.bfloat16))
                if not last_layer:
                    layer_in = jnp.concatenate(outs, axis=0)   # (T*B, GP) bf16, time-major
                h_last = h
            else:
                # fori_loop fallback for large shapes; bf16 sequence scratch (no read-side
                # cast next layer).  B is expected to be a sublane multiple here, so the
                # per-step row offset is tile-aligned (hinted with pl.multiple_of).
                def step(t, h):
                    row = t * B
                    if B % 8 == 0:
                        row = pl.multiple_of(row, 8)
                    gi_t = lax.dynamic_slice_in_dim(gi, row, B, axis=0)
                    gh = jnp.dot(h.astype(jnp.bfloat16), w_h_ref[...],
                                 preferred_element_type=jnp.float32)
                    h_new = gru_step(gi_t, gh, h, b_hn)
                    if not last_layer:
                        seq_scr[pl.ds(row, B), :] = h_new.astype(jnp.bfloat16)
                    return h_new

                h_last = lax.fori_loop(0, T, step, h0, unroll=unroll)
                if not last_layer:
                    layer_in = seq_scr[...]                    # bf16, fed straight to the MXU

            # TODO(synk): nn.GRU(dropout=0.1) applies dropout between layers only in
            # training mode; inference semantics (no dropout) here.

        # output[:, -1, :] of the last layer == final hidden state (padded cols are zero,
        # and fc_wh's padded rows are zero, so the fused FC is exact).
        out = (jnp.dot(h_last, fc_wh_ref[...], preferred_element_type=jnp.float32)
               + jnp.dot(s_ref[...], fc_ws_ref[...], preferred_element_type=jnp.float32)
               + fc_b_ref[...])
        out_ref[...] = out.astype(out_ref.dtype)

    return kernel


def gru_network_forward(x, s, params, *, num_layers, hidden_size, out_features):
    """x: (B, T, F) float; s: (B, S) float. Returns (B, out_features) float32."""
    B, T, F = x.shape
    H = hidden_size
    GP = _round_up(H, 128)   # per-gate lane-aligned column width

    def pad_gate_cols(w):    # (rows, 3H) -> (rows, 3GP), zero-pad each gate block
        if GP == H:
            return w
        parts = [jnp.pad(w[:, g * H:(g + 1) * H], ((0, 0), (0, GP - H))) for g in range(3)]
        return jnp.concatenate(parts, axis=1)

    def pad_rows(w):         # (H, cols) -> (GP, cols)
        if GP == H:
            return w
        return jnp.pad(w, ((0, GP - H), (0, 0)))

    # bf16 BEFORE the time-major relayout: halves the wrapper-side HBM pass.
    x_tm = jnp.transpose(x.astype(jnp.bfloat16), (1, 0, 2)).reshape(T * B, F)

    inputs = [x_tm, s.astype(jnp.float32)]
    for l in range(num_layers):
        w_i = pad_gate_cols(params[f"w_i_{l}"])
        if l > 0:
            w_i = pad_rows(w_i)                                 # previous layer output is GP wide
        w_h = pad_rows(pad_gate_cols(params[f"w_h_{l}"]))
        b_g = pad_gate_cols(params[f"b_g_{l}"])
        b_hn = params[f"b_hn_{l}"]
        if GP != H:
            b_hn = jnp.pad(b_hn, ((0, 0), (0, GP - H)))
        inputs += [w_i.astype(jnp.bfloat16), w_h.astype(jnp.bfloat16),
                   b_g.astype(jnp.float32), b_hn.astype(jnp.float32)]
    inputs += [pad_rows(params["fc_wh"]).astype(jnp.float32),
               params["fc_ws"].astype(jnp.float32),
               params["fc_b"].astype(jnp.float32)]

    # Path + unroll selection: keep tiny sequences vreg-resident; gate the fallback's
    # unroll factor on per-step live-vreg pressure (~5 arrays of (B, 3GP) f32 in flight).
    per_step_vregs = max(1, (5 * B * 3 * GP * 4 + 4095) // 4096)
    small_path = (T <= 32) and (per_step_vregs <= 4)
    unroll = max(1, min(8, T, 40 // (2 * per_step_vregs)))

    scratch_shapes = []
    if (not small_path) and num_layers > 1:
        scratch_shapes.append(pltpu.VMEM((T * B, GP), jnp.bfloat16))   # bf16 layer-output sequence

    # Resident-footprint estimate -> scoped VMEM limit (default scoped limit is what breaks
    # first on v5e/v6e for long windows, not physical VMEM).
    est = sum(int(np.prod(a.shape)) * a.dtype.itemsize for a in inputs)
    est += T * B * 3 * GP * 4                                   # hoisted gi value
    if (not small_path) and num_layers > 1:
        est += T * B * GP * 2
    vmem_limit = int(min(120 << 20, max(32 << 20, 2 * est)))
    # TODO(synk): for very long windows on v7x (64 MiB physical VMEM), time-chunk the
    # hoisted input projection over a grid axis instead of keeping gi fully resident.

    vmem = pl.BlockSpec(memory_space=pltpu.MemorySpace.VMEM)
    kernel = make_gru_fc_kernel(num_layers, T, B, GP, small_path, unroll)
    return pl.pallas_call(
        kernel,
        out_shape=jax.ShapeDtypeStruct((B, out_features), jnp.float32),
        in_specs=[vmem] * len(inputs),
        out_specs=vmem,
        scratch_shapes=scratch_shapes,
        compiler_params=pltpu.CompilerParams(vmem_limit_bytes=vmem_limit),
    )(*inputs)


def init_params(key, in_features, hidden_size, num_layers, summary_features, out_features):
    """Deterministic init matching PyTorch shapes/ranges, pre-packed per gate [r|z|n] (unpadded)."""
    H = hidden_size
    params = {}
    keys = jax.random.split(key, num_layers * 4 + 2)
    ki = 0
    k = 1.0 / np.sqrt(H)
    for l in range(num_layers):
        in_dim = in_features if l == 0 else H
        w_ih = jax.random.uniform(keys[ki], (3 * H, in_dim), minval=-k, maxval=k, dtype=jnp.float32); ki += 1
        w_hh = jax.random.uniform(keys[ki], (3 * H, H), minval=-k, maxval=k, dtype=jnp.float32); ki += 1
        b_ih = jax.random.uniform(keys[ki], (3 * H,), minval=-k, maxval=k, dtype=jnp.float32); ki += 1
        b_hh = jax.random.uniform(keys[ki], (3 * H,), minval=-k, maxval=k, dtype=jnp.float32); ki += 1
        # PyTorch gate order is [r, z, n]; transpose so x @ W works, gates concatenated on columns.
        params[f"w_i_{l}"] = w_ih.T                                   # (in_dim, 3H)
        params[f"w_h_{l}"] = w_hh.T                                   # (H, 3H)
        # fold b_ih fully, plus the r/z parts of b_hh; b_hn stays separate (inside r*(...)).
        b_g = jnp.concatenate([b_ih[:2 * H] + b_hh[:2 * H], b_ih[2 * H:]])
        params[f"b_g_{l}"] = b_g.reshape(1, 3 * H)
        params[f"b_hn_{l}"] = b_hh[2 * H:].reshape(1, H)

    fc_in = H + summary_features
    kf = 1.0 / np.sqrt(fc_in)
    fc_w = jax.random.uniform(keys[ki], (out_features, fc_in), minval=-kf, maxval=kf, dtype=jnp.float32); ki += 1
    fc_b = jax.random.uniform(keys[ki], (out_features,), minval=-kf, maxval=kf, dtype=jnp.float32)
    wt = fc_w.T                                    # (H+S, O)
    params["fc_wh"] = wt[:H]                       # (H, O)
    params["fc_ws"] = wt[H:]                       # (S, O)
    params["fc_b"] = fc_b.reshape(1, out_features)
    return params


def reference_forward(x, s, params, *, num_layers, hidden_size):
    """Pure-JAX f32 reference of the PyTorch forward (eval mode), using unpadded params."""
    H = hidden_size
    B, T, _ = x.shape
    inp = x.astype(jnp.float32)
    for l in range(num_layers):
        w_i, w_h = params[f"w_i_{l}"], params[f"w_h_{l}"]
        b_g, b_hn = params[f"b_g_{l}"], params[f"b_hn_{l}"]
        h = jnp.zeros((B, H), jnp.float32)
        outs = []
        for t in range(T):
            x_t = inp[:, t, :]
            gi = x_t @ w_i + b_g
            gh = h @ w_h
            r = jax.nn.sigmoid(gi[:, :H] + gh[:, :H])
            z = jax.nn.sigmoid(gi[:, H:2 * H] + gh[:, H:2 * H])
            n = jnp.tanh(gi[:, 2 * H:] + r * (gh[:, 2 * H:] + b_hn))
            h = (1.0 - z) * n + z * h
            outs.append(h)
        inp = jnp.stack(outs, axis=1)
    return inp[:, -1, :] @ params["fc_wh"] + s.astype(jnp.float32) @ params["fc_ws"] + params["fc_b"]


if __name__ == "__main__":
    # Small shapes consistent with the module's forward:
    B, T, F = 2, 8, 4          # batch, window length, in_features
    H, L = 32, 2               # hidden_size, num_layers
    S, O = 5, 3                # summary-stat features, out_features

    key = jax.random.PRNGKey(0)
    kx, ks, kp = jax.random.split(key, 3)
    x = jax.random.normal(kx, (B, T, F), dtype=jnp.float32)
    s = jax.random.normal(ks, (B, S), dtype=jnp.float32)
    params = init_params(kp, F, H, L, S, O)

    out = gru_network_forward(x, s, params,
                              num_layers=L, hidden_size=H, out_features=O)
    out = jax.block_until_ready(out)

    ref = reference_forward(x, s, params, num_layers=L, hidden_size=H)
    # Kernel uses bf16 matmul operands with f32 accumulation; compare against the
    # pure-f32 reference with a tolerance covering bf16 operand quantization.
    np.testing.assert_allclose(np.asarray(out), np.asarray(ref), rtol=2e-2, atol=2e-2)

    print("KERNEL_OK")
</pallas_src>

<mosaic_0001>
module attributes {stable_mosaic.version = 11 : i64} {
  func.func @kernel(%arg0: memref<16x4xbf16, #tpu.memory_space<vmem>>, %arg1: memref<2x5xf32, #tpu.memory_space<vmem>>, %arg2: memref<4x384xbf16, #tpu.memory_space<vmem>>, %arg3: memref<128x384xbf16, #tpu.memory_space<vmem>>, %arg4: memref<1x384xf32, #tpu.memory_space<vmem>>, %arg5: memref<1x128xf32, #tpu.memory_space<vmem>>, %arg6: memref<128x384xbf16, #tpu.memory_space<vmem>>, %arg7: memref<128x384xbf16, #tpu.memory_space<vmem>>, %arg8: memref<1x384xf32, #tpu.memory_space<vmem>>, %arg9: memref<1x128xf32, #tpu.memory_space<vmem>>, %arg10: memref<128x3xf32, #tpu.memory_space<vmem>>, %arg11: memref<5x3xf32, #tpu.memory_space<vmem>>, %arg12: memref<1x3xf32, #tpu.memory_space<vmem>>, %arg13: memref<2x3xf32, #tpu.memory_space<vmem>>) attributes {dimension_semantics = [], scalar_prefetch = 0 : i64, scratch_operands = 0 : i64, tpu.core_type = #tpu.core_type<tc>} {
    %c0 = arith.constant 0 : index
    %c0_0 = arith.constant 0 : index
    %0 = vector.load %arg0[%c0, %c0_0] : memref<16x4xbf16, #tpu.memory_space<vmem>>, vector<16x4xbf16>
    %c0_1 = arith.constant 0 : index
    %c0_2 = arith.constant 0 : index
    %1 = vector.load %arg2[%c0_1, %c0_2] : memref<4x384xbf16, #tpu.memory_space<vmem>>, vector<4x384xbf16>
    %cst = arith.constant dense<0.000000e+00> : vector<16x384xf32>
    %2 = tpu.matmul %0, %1, %cst {dimension_numbers = #tpu.dot_dimension_numbers<[1], [0], [0], [1], [0, 0, 1, 1], [], []>} : vector<16x4xbf16>, vector<4x384xbf16>, vector<16x384xf32> -> vector<16x384xf32>
    %c0_3 = arith.constant 0 : index
    %c0_4 = arith.constant 0 : index
    %3 = vector.load %arg4[%c0_3, %c0_4] : memref<1x384xf32, #tpu.memory_space<vmem>>, vector<1x384xf32>
    %4 = vector.broadcast %3 : vector<1x384xf32> to vector<16x384xf32>
    %5 = arith.addf %2, %4 : vector<16x384xf32>
    %c0_5 = arith.constant 0 : index
    %c0_6 = arith.constant 0 : index
    %6 = vector.load %arg5[%c0_5, %c0_6] : memref<1x128xf32, #tpu.memory_space<vmem>>, vector<1x128xf32>
    %7 = vector.shape_cast %6 : vector<1x128xf32> to vector<1x128xf32>
    %8 = vector.broadcast %7 : vector<1x128xf32> to vector<2x128xf32>
    %cst_7 = arith.constant 0.000000e+00 : f32
    %9 = vector.broadcast %cst_7 : f32 to vector<2x128xf32>
    %10 = vector.extract_strided_slice %5 {offsets = [0, 0], sizes = [2, 384], strides = [1, 1]} : vector<16x384xf32> to vector<2x384xf32>
    %11 = arith.truncf %9 : vector<2x128xf32> to vector<2x128xbf16>
    %c0_8 = arith.constant 0 : index
    %c0_9 = arith.constant 0 : index
    %12 = vector.load %arg3[%c0_8, %c0_9] : memref<128x384xbf16, #tpu.memory_space<vmem>>, vector<128x384xbf16>
    %cst_10 = arith.constant dense<0.000000e+00> : vector<2x384xf32>
    %13 = tpu.matmul %11, %12, %cst_10 {dimension_numbers = #tpu.dot_dimension_numbers<[1], [0], [0], [1], [0, 0, 1, 1], [], []>} : vector<2x128xbf16>, vector<128x384xbf16>, vector<2x384xf32> -> vector<2x384xf32>
    %14 = vector.extract_strided_slice %10 {offsets = [0, 0], sizes = [2, 256], strides = [1, 1]} : vector<2x384xf32> to vector<2x256xf32>
    %15 = vector.extract_strided_slice %13 {offsets = [0, 0], sizes = [2, 256], strides = [1, 1]} : vector<2x384xf32> to vector<2x256xf32>
    %16 = arith.addf %14, %15 : vector<2x256xf32>
    %17 = arith.negf %16 : vector<2x256xf32>
    %18 = math.exp %17 : vector<2x256xf32>
    %cst_11 = arith.constant 1.000000e+00 : f32
    %19 = vector.broadcast %cst_11 : f32 to vector<2x256xf32>
    %20 = arith.addf %19, %18 : vector<2x256xf32>
    %21 = arith.divf %19, %20 : vector<2x256xf32>
    %22 = vector.extract_strided_slice %21 {offsets = [0, 0], sizes = [2, 128], strides = [1, 1]} : vector<2x256xf32> to vector<2x128xf32>
    %23 = vector.extract_strided_slice %21 {offsets = [0, 128], sizes = [2, 128], strides = [1, 1]} : vector<2x256xf32> to vector<2x128xf32>
    %24 = vector.extract_strided_slice %10 {offsets = [0, 256], sizes = [2, 128], strides = [1, 1]} : vector<2x384xf32> to vector<2x128xf32>
    %25 = vector.extract_strided_slice %13 {offsets = [0, 256], sizes = [2, 128], strides = [1, 1]} : vector<2x384xf32> to vector<2x128xf32>
    %26 = arith.addf %25, %8 : vector<2x128xf32>
    %27 = arith.mulf %22, %26 : vector<2x128xf32>
    %28 = arith.addf %24, %27 : vector<2x128xf32>
    %29 = math.tanh %28 : vector<2x128xf32>
    %cst_12 = arith.constant 1.000000e+00 : f32
    %30 = vector.broadcast %cst_12 : f32 to vector<2x128xf32>
    %31 = arith.subf %30, %23 : vector<2x128xf32>
    %32 = arith.mulf %31, %29 : vector<2x128xf32>
    %33 = arith.mulf %23, %9 : vector<2x128xf32>
    %34 = arith.addf %32, %33 : vector<2x128xf32>
    %35 = arith.truncf %34 : vector<2x128xf32> to vector<2x128xbf16>
    %36 = vector.extract_strided_slice %5 {offsets = [2, 0], sizes = [2, 384], strides = [1, 1]} : vector<16x384xf32> to vector<2x384xf32>
    %37 = arith.truncf %34 : vector<2x128xf32> to vector<2x128xbf16>
    %c0_13 = arith.constant 0 : index
    %c0_14 = arith.constant 0 : index
    %38 = vector.load %arg3[%c0_13, %c0_14] : memref<128x384xbf16, #tpu.memory_space<vmem>>, vector<128x384xbf16>
    %cst_15 = arith.constant dense<0.000000e+00> : vector<2x384xf32>
    %39 = tpu.matmul %37, %38, %cst_15 {dimension_numbers = #tpu.dot_dimension_numbers<[1], [0], [0], [1], [0, 0, 1, 1], [], []>} : vector<2x128xbf16>, vector<128x384xbf16>, vector<2x384xf32> -> vector<2x384xf32>
    %40 = vector.extract_strided_slice %36 {offsets = [0, 0], sizes = [2, 256], strides = [1, 1]} : vector<2x384xf32> to vector<2x256xf32>
    %41 = vector.extract_strided_slice %39 {offsets = [0, 0], sizes = [2, 256], strides = [1, 1]} : vector<2x384xf32> to vector<2x256xf32>
    %42 = arith.addf %40, %41 : vector<2x256xf32>
    %43 = arith.negf %42 : vector<2x256xf32>
    %44 = math.exp %43 : vector<2x256xf32>
    %cst_16 = arith.constant 1.000000e+00 : f32
    %45 = vector.broadcast %cst_16 : f32 to vector<2x256xf32>
    %46 = arith.addf %45, %44 : vector<2x256xf32>
    %47 = arith.divf %45, %46 : vector<2x256xf32>
    %48 = vector.extract_strided_slice %47 {offsets = [0, 0], sizes = [2, 128], strides = [1, 1]} : vector<2x256xf32> to vector<2x128xf32>
    %49 = vector.extract_strided_slice %47 {offsets = [0, 128], sizes = [2, 128], strides = [1, 1]} : vector<2x256xf32> to vector<2x128xf32>
    %50 = vector.extract_strided_slice %36 {offsets = [0, 256], sizes = [2, 128], strides = [1, 1]} : vector<2x384xf32> to vector<2x128xf32>
    %51 = vector.extract_strided_slice %39 {offsets = [0, 256], sizes = [2, 128], strides = [1, 1]} : vector<2x384xf32> to vector<2x128xf32>
    %52 = arith.addf %51, %8 : vector<2x128xf32>
    %53 = arith.mulf %48, %52 : vector<2x128xf32>
    %54 = arith.addf %50, %53 : vector<2x128xf32>
    %55 = math.tanh %54 : vector<2x128xf32>
    %cst_17 = arith.constant 1.000000e+00 : f32
    %56 = vector.broadcast %cst_17 : f32 to vector<2x128xf32>
    %57 = arith.subf %56, %49 : vector<2x128xf32>
    %58 = arith.mulf %57, %55 : vector<2x128xf32>
    %59 = arith.mulf %49, %34 : vector<2x128xf32>
    %60 = arith.addf %58, %59 : vector<2x128xf32>
    %61 = arith.truncf %60 : vector<2x128xf32> to vector<2x128xbf16>
    %62 = vector.extract_strided_slice %5 {offsets = [4, 0], sizes = [2, 384], strides = [1, 1]} : vector<16x384xf32> to vector<2x384xf32>
    %63 = arith.truncf %60 : vector<2x128xf32> to vector<2x128xbf16>
    %c0_18 = arith.constant 0 : index
    %c0_19 = arith.constant 0 : index
    %64 = vector.load %arg3[%c0_18, %c0_19] : memref<128x384xbf16, #tpu.memory_space<vmem>>, vector<128x384xbf16>
    %cst_20 = arith.constant dense<0.000000e+00> : vector<2x384xf32>
    %65 = tpu.matmul %63, %64, %cst_20 {dimension_numbers = #tpu.dot_dimension_numbers<[1], [0], [0], [1], [0, 0, 1, 1], [], []>} : vector<2x128xbf16>, vector<128x384xbf16>, vector<2x384xf32> -> vector<2x384xf32>
    %66 = vector.extract_strided_slice %62 {offsets = [0, 0], sizes = [2, 256], strides = [1, 1]} : vector<2x384xf32> to vector<2x256xf32>
    %67 = vector.extract_strided_slice %65 {offsets = [0, 0], sizes = [2, 256], strides = [1, 1]} : vector<2x384xf32> to vector<2x256xf32>
    %68 = arith.addf %66, %67 : vector<2x256xf32>
    %69 = arith.negf %68 : vector<2x256xf32>
    %70 = math.exp %69 : vector<2x256xf32>
    %cst_21 = arith.constant 1.000000e+00 : f32
    %71 = vector.broadcast %cst_21 : f32 to vector<2x256xf32>
    %72 = arith.addf %71, %70 : vector<2x256xf32>
    %73 = arith.divf %71, %72 : vector<2x256xf32>
    %74 = vector.extract_strided_slice %73 {offsets = [0, 0], sizes = [2, 128], strides = [1, 1]} : vector<2x256xf32> to vector<2x128xf32>
    %75 = vector.extract_strided_slice %73 {offsets = [0, 128], sizes = [2, 128], strides = [1, 1]} : vector<2x256xf32> to vector<2x128xf32>
    %76 = vector.extract_strided_slice %62 {offsets = [0, 256], sizes = [2, 128], strides = [1, 1]} : vector<2x384xf32> to vector<2x128xf32>
    %77 = vector.extract_strided_slice %65 {offsets = [0, 256], sizes = [2, 128], strides = [1, 1]} : vector<2x384xf32> to vector<2x128xf32>
    %78 = arith.addf %77, %8 : vector<2x128xf32>
    %79 = arith.mulf %74, %78 : vector<2x128xf32>
    %80 = arith.addf %76, %79 : vector<2x128xf32>
    %81 = math.tanh %80 : vector<2x128xf32>
    %cst_22 = arith.constant 1.000000e+00 : f32
    %82 = vector.broadcast %cst_22 : f32 to vector<2x128xf32>
    %83 = arith.subf %82, %75 : vector<2x128xf32>
    %84 = arith.mulf %83, %81 : vector<2x128xf32>
    %85 = arith.mulf %75, %60 : vector<2x128xf32>
    %86 = arith.addf %84, %85 : vector<2x128xf32>
    %87 = arith.truncf %86 : vector<2x128xf32> to vector<2x128xbf16>
    %88 = vector.extract_strided_slice %5 {offsets = [6, 0], sizes = [2, 384], strides = [1, 1]} : vector<16x384xf32> to vector<2x384xf32>
    %89 = arith.truncf %86 : vector<2x128xf32> to vector<2x128xbf16>
    %c0_23 = arith.constant 0 : index
    %c0_24 = arith.constant 0 : index
    %90 = vector.load %arg3[%c0_23, %c0_24] : memref<128x384xbf16, #tpu.memory_space<vmem>>, vector<128x384xbf16>
    %cst_25 = arith.constant dense<0.000000e+00> : vector<2x384xf32>
    %91 = tpu.matmul %89, %90, %cst_25 {dimension_numbers = #tpu.dot_dimension_numbers<[1], [0], [0], [1], [0, 0, 1, 1], [], []>} : vector<2x128xbf16>, vector<128x384xbf16>, vector<2x384xf32> -> vector<2x384xf32>
    %92 = vector.extract_strided_slice %88 {offsets = [0, 0], sizes = [2, 256], strides = [1, 1]} : vector<2x384xf32> to vector<2x256xf32>
    %93 = vector.extract_strided_slice %91 {offsets = [0, 0], sizes = [2, 256], strides = [1, 1]} : vector<2x384xf32> to vector<2x256xf32>
    %94 = arith.addf %92, %93 : vector<2x256xf32>
    %95 = arith.negf %94 : vector<2x256xf32>
    %96 = math.exp %95 : vector<2x256xf32>
    %cst_26 = arith.constant 1.000000e+00 : f32
    %97 = vector.broadcast %cst_26 : f32 to vector<2x256xf32>
    %98 = arith.addf %97, %96 : vector<2x256xf32>
    %99 = arith.divf %97, %98 : vector<2x256xf32>
    %100 = vector.extract_strided_slice %99 {offsets = [0, 0], sizes = [2, 128], strides = [1, 1]} : vector<2x256xf32> to vector<2x128xf32>
    %101 = vector.extract_strided_slice %99 {offsets = [0, 128], sizes = [2, 128], strides = [1, 1]} : vector<2x256xf32> to vector<2x128xf32>
    %102 = vector.extract_strided_slice %88 {offsets = [0, 256], sizes = [2, 128], strides = [1, 1]} : vector<2x384xf32> to vector<2x128xf32>
    %103 = vector.extract_strided_slice %91 {offsets = [0, 256], sizes = [2, 128], strides = [1, 1]} : vector<2x384xf32> to vector<2x128xf32>
    %104 = arith.addf %103, %8 : vector<2x128xf32>
    %105 = arith.mulf %100, %104 : vector<2x128xf32>
    %106 = arith.addf %102, %105 : vector<2x128xf32>
    %107 = math.tanh %106 : vector<2x128xf32>
    %cst_27 = arith.constant 1.000000e+00 : f32
    %108 = vector.broadcast %cst_27 : f32 to vector<2x128xf32>
    %109 = arith.subf %108, %101 : vector<2x128xf32>
    %110 = arith.mulf %109, %107 : vector<2x128xf32>
    %111 = arith.mulf %101, %86 : vector<2x128xf32>
    %112 = arith.addf %110, %111 : vector<2x128xf32>
    %113 = arith.truncf %112 : vector<2x128xf32> to vector<2x128xbf16>
    %114 = vector.extract_strided_slice %5 {offsets = [8, 0], sizes = [2, 384], strides = [1, 1]} : vector<16x384xf32> to vector<2x384xf32>
    %115 = arith.truncf %112 : vector<2x128xf32> to vector<2x128xbf16>
    %c0_28 = arith.constant 0 : index
    %c0_29 = arith.constant 0 : index
    %116 = vector.load %arg3[%c0_28, %c0_29] : memref<128x384xbf16, #tpu.memory_space<vmem>>, vector<128x384xbf16>
    %cst_30 = arith.constant dense<0.000000e+00> : vector<2x384xf32>
    %117 = tpu.matmul %115, %116, %cst_30 {dimension_numbers = #tpu.dot_dimension_numbers<[1], [0], [0], [1], [0, 0, 1, 1], [], []>} : vector<2x128xbf16>, vector<128x384xbf16>, vector<2x384xf32> -> vector<2x384xf32>
    %118 = vector.extract_strided_slice %114 {offsets = [0, 0], sizes = [2, 256], strides = [1, 1]} : vector<2x384xf32> to vector<2x256xf32>
    %119 = vector.extract_strided_slice %117 {offsets = [0, 0], sizes = [2, 256], strides = [1, 1]} : vector<2x384xf32> to vector<2x256xf32>
    %120 = arith.addf %118, %119 : vector<2x256xf32>
    %121 = arith.negf %120 : vector<2x256xf32>
    %122 = math.exp %121 : vector<2x256xf32>
    %cst_31 = arith.constant 1.000000e+00 : f32
    %123 = vector.broadcast %cst_31 : f32 to vector<2x256xf32>
    %124 = arith.addf %123, %122 : vector<2x256xf32>
    %125 = arith.divf %123, %124 : vector<2x256xf32>
    %126 = vector.extract_strided_slice %125 {offsets = [0, 0], sizes = [2, 128], strides = [1, 1]} : vector<2x256xf32> to vector<2x128xf32>
    %127 = vector.extract_strided_slice %125 {offsets = [0, 128], sizes = [2, 128], strides = [1, 1]} : vector<2x256xf32> to vector<2x128xf32>
    %128 = vector.extract_strided_slice %114 {offsets = [0, 256], sizes = [2, 128], strides = [1, 1]} : vector<2x384xf32> to vector<2x128xf32>
    %129 = vector.extract_strided_slice %117 {offsets = [0, 256], sizes = [2, 128], strides = [1, 1]} : vector<2x384xf32> to vector<2x128xf32>
    %130 = arith.addf %129, %8 : vector<2x128xf32>
    %131 = arith.mulf %126, %130 : vector<2x128xf32>
    %132 = arith.addf %128, %131 : vector<2x128xf32>
    %133 = math.tanh %132 : vector<2x128xf32>
    %cst_32 = arith.constant 1.000000e+00 : f32
    %134 = vector.broadcast %cst_32 : f32 to vector<2x128xf32>
    %135 = arith.subf %134, %127 : vector<2x128xf32>
    %136 = arith.mulf %135, %133 : vector<2x128xf32>
    %137 = arith.mulf %127, %112 : vector<2x128xf32>
    %138 = arith.addf %136, %137 : vector<2x128xf32>
    %139 = arith.truncf %138 : vector<2x128xf32> to vector<2x128xbf16>
    %140 = vector.extract_strided_slice %5 {offsets = [10, 0], sizes = [2, 384], strides = [1, 1]} : vector<16x384xf32> to vector<2x384xf32>
    %141 = arith.truncf %138 : vector<2x128xf32> to vector<2x128xbf16>
    %c0_33 = arith.constant 0 : index
    %c0_34 = arith.constant 0 : index
    %142 = vector.load %arg3[%c0_33, %c0_34] : memref<128x384xbf16, #tpu.memory_space<vmem>>, vector<128x384xbf16>
    %cst_35 = arith.constant dense<0.000000e+00> : vector<2x384xf32>
    %143 = tpu.matmul %141, %142, %cst_35 {dimension_numbers = #tpu.dot_dimension_numbers<[1], [0], [0], [1], [0, 0, 1, 1], [], []>} : vector<2x128xbf16>, vector<128x384xbf16>, vector<2x384xf32> -> vector<2x384xf32>
    %144 = vector.extract_strided_slice %140 {offsets = [0, 0], sizes = [2, 256], strides = [1, 1]} : vector<2x384xf32> to vector<2x256xf32>
    %145 = vector.extract_strided_slice %143 {offsets = [0, 0], sizes = [2, 256], strides = [1, 1]} : vector<2x384xf32> to vector<2x256xf32>
    %146 = arith.addf %144, %145 : vector<2x256xf32>
    %147 = arith.negf %146 : vector<2x256xf32>
    %148 = math.exp %147 : vector<2x256xf32>
    %cst_36 = arith.constant 1.000000e+00 : f32
    %149 = vector.broadcast %cst_36 : f32 to vector<2x256xf32>
    %150 = arith.addf %149, %148 : vector<2x256xf32>
    %151 = arith.divf %149, %150 : vector<2x256xf32>
    %152 = vector.extract_strided_slice %151 {offsets = [0, 0], sizes = [2, 128], strides = [1, 1]} : vector<2x256xf32> to vector<2x128xf32>
    %153 = vector.extract_strided_slice %151 {offsets = [0, 128], sizes = [2, 128], strides = [1, 1]} : vector<2x256xf32> to vector<2x128xf32>
    %154 = vector.extract_strided_slice %140 {offsets = [0, 256], sizes = [2, 128], strides = [1, 1]} : vector<2x384xf32> to vector<2x128xf32>
    %155 = vector.extract_strided_slice %143 {offsets = [0, 256], sizes = [2, 128], strides = [1, 1]} : vector<2x384xf32> to vector<2x128xf32>
    %156 = arith.addf %155, %8 : vector<2x128xf32>
    %157 = arith.mulf %152, %156 : vector<2x128xf32>
    %158 = arith.addf %154, %157 : vector<2x128xf32>
    %159 = math.tanh %158 : vector<2x128xf32>
    %cst_37 = arith.constant 1.000000e+00 : f32
    %160 = vector.broadcast %cst_37 : f32 to vector<2x128xf32>
    %161 = arith.subf %160, %153 : vector<2x128xf32>
    %162 = arith.mulf %161, %159 : vector<2x128xf32>
    %163 = arith.mulf %153, %138 : vector<2x128xf32>
    %164 = arith.addf %162, %163 : vector<2x128xf32>
    %165 = arith.truncf %164 : vector<2x128xf32> to vector<2x128xbf16>
    %166 = vector.extract_strided_slice %5 {offsets = [12, 0], sizes = [2, 384], strides = [1, 1]} : vector<16x384xf32> to vector<2x384xf32>
    %167 = arith.truncf %164 : vector<2x128xf32> to vector<2x128xbf16>
    %c0_38 = arith.constant 0 : index
    %c0_39 = arith.constant 0 : index
    %168 = vector.load %arg3[%c0_38, %c0_39] : memref<128x384xbf16, #tpu.memory_space<vmem>>, vector<128x384xbf16>
    %cst_40 = arith.constant dense<0.000000e+00> : vector<2x384xf32>
    %169 = tpu.matmul %167, %168, %cst_40 {dimension_numbers = #tpu.dot_dimension_numbers<[1], [0], [0], [1], [0, 0, 1, 1], [], []>} : vector<2x128xbf16>, vector<128x384xbf16>, vector<2x384xf32> -> vector<2x384xf32>
    %170 = vector.extract_strided_slice %166 {offsets = [0, 0], sizes = [2, 256], strides = [1, 1]} : vector<2x384xf32> to vector<2x256xf32>
    %171 = vector.extract_strided_slice %169 {offsets = [0, 0], sizes = [2, 256], strides = [1, 1]} : vector<2x384xf32> to vector<2x256xf32>
    %172 = arith.addf %170, %171 : vector<2x256xf32>
    %173 = arith.negf %172 : vector<2x256xf32>
    %174 = math.exp %173 : vector<2x256xf32>
    %cst_41 = arith.constant 1.000000e+00 : f32
    %175 = vector.broadcast %cst_41 : f32 to vector<2x256xf32>
    %176 = arith.addf %175, %174 : vector<2x256xf32>
    %177 = arith.divf %175, %176 : vector<2x256xf32>
    %178 = vector.extract_strided_slice %177 {offsets = [0, 0], sizes = [2, 128], strides = [1, 1]} : vector<2x256xf32> to vector<2x128xf32>
    %179 = vector.extract_strided_slice %177 {offsets = [0, 128], sizes = [2, 128], strides = [1, 1]} : vector<2x256xf32> to vector<2x128xf32>
    %180 = vector.extract_strided_slice %166 {offsets = [0, 256], sizes = [2, 128], strides = [1, 1]} : vector<2x384xf32> to vector<2x128xf32>
    %181 = vector.extract_strided_slice %169 {offsets = [0, 256], sizes = [2, 128], strides = [1, 1]} : vector<2x384xf32> to vector<2x128xf32>
    %182 = arith.addf %181, %8 : vector<2x128xf32>
    %183 = arith.mulf %178, %182 : vector<2x128xf32>
    %184 = arith.addf %180, %183 : vector<2x128xf32>
    %185 = math.tanh %184 : vector<2x128xf32>
    %cst_42 = arith.constant 1.000000e+00 : f32
    %186 = vector.broadcast %cst_42 : f32 to vector<2x128xf32>
    %187 = arith.subf %186, %179 : vector<2x128xf32>
    %188 = arith.mulf %187, %185 : vector<2x128xf32>
    %189 = arith.mulf %179, %164 : vector<2x128xf32>
    %190 = arith.addf %188, %189 : vector<2x128xf32>
    %191 = arith.truncf %190 : vector<2x128xf32> to vector<2x128xbf16>
    %192 = vector.extract_strided_slice %5 {offsets = [14, 0], sizes = [2, 384], strides = [1, 1]} : vector<16x384xf32> to vector<2x384xf32>
    %193 = arith.truncf %190 : vector<2x128xf32> to vector<2x128xbf16>
    %c0_43 = arith.constant 0 : index
    %c0_44 = arith.constant 0 : index
    %194 = vector.load %arg3[%c0_43, %c0_44] : memref<128x384xbf16, #tpu.memory_space<vmem>>, vector<128x384xbf16>
    %cst_45 = arith.constant dense<0.000000e+00> : vector<2x384xf32>
    %195 = tpu.matmul %193, %194, %cst_45 {dimension_numbers = #tpu.dot_dimension_numbers<[1], [0], [0], [1], [0, 0, 1, 1], [], []>} : vector<2x128xbf16>, vector<128x384xbf16>, vector<2x384xf32> -> vector<2x384xf32>
    %196 = vector.extract_strided_slice %192 {offsets = [0, 0], sizes = [2, 256], strides = [1, 1]} : vector<2x384xf32> to vector<2x256xf32>
    %197 = vector.extract_strided_slice %195 {offsets = [0, 0], sizes = [2, 256], strides = [1, 1]} : vector<2x384xf32> to vector<2x256xf32>
    %198 = arith.addf %196, %197 : vector<2x256xf32>
    %199 = arith.negf %198 : vector<2x256xf32>
    %200 = math.exp %199 : vector<2x256xf32>
    %cst_46 = arith.constant 1.000000e+00 : f32
    %201 = vector.broadcast %cst_46 : f32 to vector<2x256xf32>
    %202 = arith.addf %201, %200 : vector<2x256xf32>
    %203 = arith.divf %201, %202 : vector<2x256xf32>
    %204 = vector.extract_strided_slice %203 {offsets = [0, 0], sizes = [2, 128], strides = [1, 1]} : vector<2x256xf32> to vector<2x128xf32>
    %205 = vector.extract_strided_slice %203 {offsets = [0, 128], sizes = [2, 128], strides = [1, 1]} : vector<2x256xf32> to vector<2x128xf32>
    %206 = vector.extract_strided_slice %192 {offsets = [0, 256], sizes = [2, 128], strides = [1, 1]} : vector<2x384xf32> to vector<2x128xf32>
    %207 = vector.extract_strided_slice %195 {offsets = [0, 256], sizes = [2, 128], strides = [1, 1]} : vector<2x384xf32> to vector<2x128xf32>
    %208 = arith.addf %207, %8 : vector<2x128xf32>
    %209 = arith.mulf %204, %208 : vector<2x128xf32>
    %210 = arith.addf %206, %209 : vector<2x128xf32>
    %211 = math.tanh %210 : vector<2x128xf32>
    %cst_47 = arith.constant 1.000000e+00 : f32
    %212 = vector.broadcast %cst_47 : f32 to vector<2x128xf32>
    %213 = arith.subf %212, %205 : vector<2x128xf32>
    %214 = arith.mulf %213, %211 : vector<2x128xf32>
    %215 = arith.mulf %205, %190 : vector<2x128xf32>
    %216 = arith.addf %214, %215 : vector<2x128xf32>
    %217 = arith.truncf %216 : vector<2x128xf32> to vector<2x128xbf16>
    %218 = tpu.concatenate %35, %61, %87, %113, %139, %165, %191, %217 in 0 : vector<2x128xbf16>, vector<2x128xbf16>, vector<2x128xbf16>, vector<2x128xbf16>, vector<2x128xbf16>, vector<2x128xbf16>, vector<2x128xbf16>, vector<2x128xbf16> -> vector<16x128xbf16>
    %c0_48 = arith.constant 0 : index
    %c0_49 = arith.constant 0 : index
    %219 = vector.load %arg6[%c0_48, %c0_49] : memref<128x384xbf16, #tpu.memory_space<vmem>>, vector<128x384xbf16>
    %cst_50 = arith.constant dense<0.000000e+00> : vector<16x384xf32>
    %220 = tpu.matmul %218, %219, %cst_50 {dimension_numbers = #tpu.dot_dimension_numbers<[1], [0], [0], [1], [0, 0, 1, 1], [], []>} : vector<16x128xbf16>, vector<128x384xbf16>, vector<16x384xf32> -> vector<16x384xf32>
    %c0_51 = arith.constant 0 : index
    %c0_52 = arith.constant 0 : index
    %221 = vector.load %arg8[%c0_51, %c0_52] : memref<1x384xf32, #tpu.memory_space<vmem>>, vector<1x384xf32>
    %222 = vector.broadcast %221 : vector<1x384xf32> to vector<16x384xf32>
    %223 = arith.addf %220, %222 : vector<16x384xf32>
    %c0_53 = arith.constant 0 : index
    %c0_54 = arith.constant 0 : index
    %224 = vector.load %arg9[%c0_53, %c0_54] : memref<1x128xf32, #tpu.memory_space<vmem>>, vector<1x128xf32>
    %225 = vector.shape_cast %224 : vector<1x128xf32> to vector<1x128xf32>
    %226 = vector.broadcast %225 : vector<1x128xf32> to vector<2x128xf32>
    %cst_55 = arith.constant 0.000000e+00 : f32
    %227 = vector.broadcast %cst_55 : f32 to vector<2x128xf32>
    %228 = vector.extract_strided_slice %223 {offsets = [0, 0], sizes = [2, 384], strides = [1, 1]} : vector<16x384xf32> to vector<2x384xf32>
    %229 = arith.truncf %227 : vector<2x128xf32> to vector<2x128xbf16>
    %c0_56 = arith.constant 0 : index
    %c0_57 = arith.constant 0 : index
    %230 = vector.load %arg7[%c0_56, %c0_57] : memref<128x384xbf16, #tpu.memory_space<vmem>>, vector<128x384xbf16>
    %cst_58 = arith.constant dense<0.000000e+00> : vector<2x384xf32>
    %231 = tpu.matmul %229, %230, %cst_58 {dimension_numbers = #tpu.dot_dimension_numbers<[1], [0], [0], [1], [0, 0, 1, 1], [], []>} : vector<2x128xbf16>, vector<128x384xbf16>, vector<2x384xf32> -> vector<2x384xf32>
    %232 = vector.extract_strided_slice %228 {offsets = [0, 0], sizes = [2, 256], strides = [1, 1]} : vector<2x384xf32> to vector<2x256xf32>
    %233 = vector.extract_strided_slice %231 {offsets = [0, 0], sizes = [2, 256], strides = [1, 1]} : vector<2x384xf32> to vector<2x256xf32>
    %234 = arith.addf %232, %233 : vector<2x256xf32>
    %235 = arith.negf %234 : vector<2x256xf32>
    %236 = math.exp %235 : vector<2x256xf32>
    %cst_59 = arith.constant 1.000000e+00 : f32
    %237 = vector.broadcast %cst_59 : f32 to vector<2x256xf32>
    %238 = arith.addf %237, %236 : vector<2x256xf32>
    %239 = arith.divf %237, %238 : vector<2x256xf32>
    %240 = vector.extract_strided_slice %239 {offsets = [0, 0], sizes = [2, 128], strides = [1, 1]} : vector<2x256xf32> to vector<2x128xf32>
    %241 = vector.extract_strided_slice %239 {offsets = [0, 128], sizes = [2, 128], strides = [1, 1]} : vector<2x256xf32> to vector<2x128xf32>
    %242 = vector.extract_strided_slice %228 {offsets = [0, 256], sizes = [2, 128], strides = [1, 1]} : vector<2x384xf32> to vector<2x128xf32>
    %243 = vector.extract_strided_slice %231 {offsets = [0, 256], sizes = [2, 128], strides = [1, 1]} : vector<2x384xf32> to vector<2x128xf32>
    %244 = arith.addf %243, %226 : vector<2x128xf32>
    %245 = arith.mulf %240, %244 : vector<2x128xf32>
    %246 = arith.addf %242, %245 : vector<2x128xf32>
    %247 = math.tanh %246 : vector<2x128xf32>
    %cst_60 = arith.constant 1.000000e+00 : f32
    %248 = vector.broadcast %cst_60 : f32 to vector<2x128xf32>
    %249 = arith.subf %248, %241 : vector<2x128xf32>
    %250 = arith.mulf %249, %247 : vector<2x128xf32>
    %251 = arith.mulf %241, %227 : vector<2x128xf32>
    %252 = arith.addf %250, %251 : vector<2x128xf32>
    %253 = vector.extract_strided_slice %223 {offsets = [2, 0], sizes = [2, 384], strides = [1, 1]} : vector<16x384xf32> to vector<2x384xf32>
    %254 = arith.truncf %252 : vector<2x128xf32> to vector<2x128xbf16>
    %c0_61 = arith.constant 0 : index
    %c0_62 = arith.constant 0 : index
    %255 = vector.load %arg7[%c0_61, %c0_62] : memref<128x384xbf16, #tpu.memory_space<vmem>>, vector<128x384xbf16>
    %cst_63 = arith.constant dense<0.000000e+00> : vector<2x384xf32>
    %256 = tpu.matmul %254, %255, %cst_63 {dimension_numbers = #tpu.dot_dimension_numbers<[1], [0], [0], [1], [0, 0, 1, 1], [], []>} : vector<2x128xbf16>, vector<128x384xbf16>, vector<2x384xf32> -> vector<2x384xf32>
    %257 = vector.extract_strided_slice %253 {offsets = [0, 0], sizes = [2, 256], strides = [1, 1]} : vector<2x384xf32> to vector<2x256xf32>
    %258 = vector.extract_strided_slice %256 {offsets = [0, 0], sizes = [2, 256], strides = [1, 1]} : vector<2x384xf32> to vector<2x256xf32>
    %259 = arith.addf %257, %258 : vector<2x256xf32>
    %260 = arith.negf %259 : vector<2x256xf32>
    %261 = math.exp %260 : vector<2x256xf32>
    %cst_64 = arith.constant 1.000000e+00 : f32
    %262 = vector.broadcast %cst_64 : f32 to vector<2x256xf32>
    %263 = arith.addf %262, %261 : vector<2x256xf32>
    %264 = arith.divf %262, %263 : vector<2x256xf32>
    %265 = vector.extract_strided_slice %264 {offsets = [0, 0], sizes = [2, 128], strides = [1, 1]} : vector<2x256xf32> to vector<2x128xf32>
    %266 = vector.extract_strided_slice %264 {offsets = [0, 128], sizes = [2, 128], strides = [1, 1]} : vector<2x256xf32> to vector<2x128xf32>
    %267 = vector.extract_strided_slice %253 {offsets = [0, 256], sizes = [2, 128], strides = [1, 1]} : vector<2x384xf32> to vector<2x128xf32>
    %268 = vector.extract_strided_slice %256 {offsets = [0, 256], sizes = [2, 128], strides = [1, 1]} : vector<2x384xf32> to vector<2x128xf32>
    %269 = arith.addf %268, %226 : vector<2x128xf32>
    %270 = arith.mulf %265, %269 : vector<2x128xf32>
    %271 = arith.addf %267, %270 : vector<2x128xf32>
    %272 = math.tanh %271 : vector<2x128xf32>
    %cst_65 = arith.constant 1.000000e+00 : f32
    %273 = vector.broadcast %cst_65 : f32 to vector<2x128xf32>
    %274 = arith.subf %273, %266 : vector<2x128xf32>
    %275 = arith.mulf %274, %272 : vector<2x128xf32>
    %276 = arith.mulf %266, %252 : vector<2x128xf32>
    %277 = arith.addf %275, %276 : vector<2x128xf32>
    %278 = vector.extract_strided_slice %223 {offsets = [4, 0], sizes = [2, 384], strides = [1, 1]} : vector<16x384xf32> to vector<2x384xf32>
    %279 = arith.truncf %277 : vector<2x128xf32> to vector<2x128xbf16>
    %c0_66 = arith.constant 0 : index
    %c0_67 = arith.constant 0 : index
    %280 = vector.load %arg7[%c0_66, %c0_67] : memref<128x384xbf16, #tpu.memory_space<vmem>>, vector<128x384xbf16>
    %cst_68 = arith.constant dense<0.000000e+00> : vector<2x384xf32>
    %281 = tpu.matmul %279, %280, %cst_68 {dimension_numbers = #tpu.dot_dimension_numbers<[1], [0], [0], [1], [0, 0, 1, 1], [], []>} : vector<2x128xbf16>, vector<128x384xbf16>, vector<2x384xf32> -> vector<2x384xf32>
    %282 = vector.extract_strided_slice %278 {offsets = [0, 0], sizes = [2, 256], strides = [1, 1]} : vector<2x384xf32> to vector<2x256xf32>
    %283 = vector.extract_strided_slice %281 {offsets = [0, 0], sizes = [2, 256], strides = [1, 1]} : vector<2x384xf32> to vector<2x256xf32>
    %284 = arith.addf %282, %283 : vector<2x256xf32>
    %285 = arith.negf %284 : vector<2x256xf32>
    %286 = math.exp %285 : vector<2x256xf32>
    %cst_69 = arith.constant 1.000000e+00 : f32
    %287 = vector.broadcast %cst_69 : f32 to vector<2x256xf32>
    %288 = arith.addf %287, %286 : vector<2x256xf32>
    %289 = arith.divf %287, %288 : vector<2x256xf32>
    %290 = vector.extract_strided_slice %289 {offsets = [0, 0], sizes = [2, 128], strides = [1, 1]} : vector<2x256xf32> to vector<2x128xf32>
    %291 = vector.extract_strided_slice %289 {offsets = [0, 128], sizes = [2, 128], strides = [1, 1]} : vector<2x256xf32> to vector<2x128xf32>
    %292 = vector.extract_strided_slice %278 {offsets = [0, 256], sizes = [2, 128], strides = [1, 1]} : vector<2x384xf32> to vector<2x128xf32>
    %293 = vector.extract_strided_slice %281 {offsets = [0, 256], sizes = [2, 128], strides = [1, 1]} : vector<2x384xf32> to vector<2x128xf32>
    %294 = arith.addf %293, %226 : vector<2x128xf32>
    %295 = arith.mulf %290, %294 : vector<2x128xf32>
    %296 = arith.addf %292, %295 : vector<2x128xf32>
    %297 = math.tanh %296 : vector<2x128xf32>
    %cst_70 = arith.constant 1.000000e+00 : f32
    %298 = vector.broadcast %cst_70 : f32 to vector<2x128xf32>
    %299 = arith.subf %298, %291 : vector<2x128xf32>
    %300 = arith.mulf %299, %297 : vector<2x128xf32>
    %301 = arith.mulf %291, %277 : vector<2x128xf32>
    %302 = arith.addf %300, %301 : vector<2x128xf32>
    %303 = vector.extract_strided_slice %223 {offsets = [6, 0], sizes = [2, 384], strides = [1, 1]} : vector<16x384xf32> to vector<2x384xf32>
    %304 = arith.truncf %302 : vector<2x128xf32> to vector<2x128xbf16>
    %c0_71 = arith.constant 0 : index
    %c0_72 = arith.constant 0 : index
    %305 = vector.load %arg7[%c0_71, %c0_72] : memref<128x384xbf16, #tpu.memory_space<vmem>>, vector<128x384xbf16>
    %cst_73 = arith.constant dense<0.000000e+00> : vector<2x384xf32>
    %306 = tpu.matmul %304, %305, %cst_73 {dimension_numbers = #tpu.dot_dimension_numbers<[1], [0], [0], [1], [0, 0, 1, 1], [], []>} : vector<2x128xbf16>, vector<128x384xbf16>, vector<2x384xf32> -> vector<2x384xf32>
    %307 = vector.extract_strided_slice %303 {offsets = [0, 0], sizes = [2, 256], strides = [1, 1]} : vector<2x384xf32> to vector<2x256xf32>
    %308 = vector.extract_strided_slice %306 {offsets = [0, 0], sizes = [2, 256], strides = [1, 1]} : vector<2x384xf32> to vector<2x256xf32>
    %309 = arith.addf %307, %308 : vector<2x256xf32>
    %310 = arith.negf %309 : vector<2x256xf32>
    %311 = math.exp %310 : vector<2x256xf32>
    %cst_74 = arith.constant 1.000000e+00 : f32
    %312 = vector.broadcast %cst_74 : f32 to vector<2x256xf32>
    %313 = arith.addf %312, %311 : vector<2x256xf32>
    %314 = arith.divf %312, %313 : vector<2x256xf32>
    %315 = vector.extract_strided_slice %314 {offsets = [0, 0], sizes = [2, 128], strides = [1, 1]} : vector<2x256xf32> to vector<2x128xf32>
    %316 = vector.extract_strided_slice %314 {offsets = [0, 128], sizes = [2, 128], strides = [1, 1]} : vector<2x256xf32> to vector<2x128xf32>
    %317 = vector.extract_strided_slice %303 {offsets = [0, 256], sizes = [2, 128], strides = [1, 1]} : vector<2x384xf32> to vector<2x128xf32>
    %318 = vector.extract_strided_slice %306 {offsets = [0, 256], sizes = [2, 128], strides = [1, 1]} : vector<2x384xf32> to vector<2x128xf32>
    %319 = arith.addf %318, %226 : vector<2x128xf32>
    %320 = arith.mulf %315, %319 : vector<2x128xf32>
    %321 = arith.addf %317, %320 : vector<2x128xf32>
    %322 = math.tanh %321 : vector<2x128xf32>
    %cst_75 = arith.constant 1.000000e+00 : f32
    %323 = vector.broadcast %cst_75 : f32 to vector<2x128xf32>
    %324 = arith.subf %323, %316 : vector<2x128xf32>
    %325 = arith.mulf %324, %322 : vector<2x128xf32>
    %326 = arith.mulf %316, %302 : vector<2x128xf32>
    %327 = arith.addf %325, %326 : vector<2x128xf32>
    %328 = vector.extract_strided_slice %223 {offsets = [8, 0], sizes = [2, 384], strides = [1, 1]} : vector<16x384xf32> to vector<2x384xf32>
    %329 = arith.truncf %327 : vector<2x128xf32> to vector<2x128xbf16>
    %c0_76 = arith.constant 0 : index
    %c0_77 = arith.constant 0 : index
    %330 = vector.load %arg7[%c0_76, %c0_77] : memref<128x384xbf16, #tpu.memory_space<vmem>>, vector<128x384xbf16>
    %cst_78 = arith.constant dense<0.000000e+00> : vector<2x384xf32>
    %331 = tpu.matmul %329, %330, %cst_78 {dimension_numbers = #tpu.dot_dimension_numbers<[1], [0], [0], [1], [0, 0, 1, 1], [], []>} : vector<2x128xbf16>, vector<128x384xbf16>, vector<2x384xf32> -> vector<2x384xf32>
    %332 = vector.extract_strided_slice %328 {offsets = [0, 0], sizes = [2, 256], strides = [1, 1]} : vector<2x384xf32> to vector<2x256xf32>
    %333 = vector.extract_strided_slice %331 {offsets = [0, 0], sizes = [2, 256], strides = [1, 1]} : vector<2x384xf32> to vector<2x256xf32>
    %334 = arith.addf %332, %333 : vector<2x256xf32>
    %335 = arith.negf %334 : vector<2x256xf32>
    %336 = math.exp %335 : vector<2x256xf32>
    %cst_79 = arith.constant 1.000000e+00 : f32
    %337 = vector.broadcast %cst_79 : f32 to vector<2x256xf32>
    %338 = arith.addf %337, %336 : vector<2x256xf32>
    %339 = arith.divf %337, %338 : vector<2x256xf32>
    %340 = vector.extract_strided_slice %339 {offsets = [0, 0], sizes = [2, 128], strides = [1, 1]} : vector<2x256xf32> to vector<2x128xf32>
    %341 = vector.extract_strided_slice %339 {offsets = [0, 128], sizes = [2, 128], strides = [1, 1]} : vector<2x256xf32> to vector<2x128xf32>
    %342 = vector.extract_strided_slice %328 {offsets = [0, 256], sizes = [2, 128], strides = [1, 1]} : vector<2x384xf32> to vector<2x128xf32>
    %343 = vector.extract_strided_slice %331 {offsets = [0, 256], sizes = [2, 128], strides = [1, 1]} : vector<2x384xf32> to vector<2x128xf32>
    %344 = arith.addf %343, %226 : vector<2x128xf32>
    %345 = arith.mulf %340, %344 : vector<2x128xf32>
    %346 = arith.addf %342, %345 : vector<2x128xf32>
    %347 = math.tanh %346 : vector<2x128xf32>
    %cst_80 = arith.constant 1.000000e+00 : f32
    %348 = vector.broadcast %cst_80 : f32 to vector<2x128xf32>
    %349 = arith.subf %348, %341 : vector<2x128xf32>
    %350 = arith.mulf %349, %347 : vector<2x128xf32>
    %351 = arith.mulf %341, %327 : vector<2x128xf32>
    %352 = arith.addf %350, %351 : vector<2x128xf32>
    %353 = vector.extract_strided_slice %223 {offsets = [10, 0], sizes = [2, 384], strides = [1, 1]} : vector<16x384xf32> to vector<2x384xf32>
    %354 = arith.truncf %352 : vector<2x128xf32> to vector<2x128xbf16>
    %c0_81 = arith.constant 0 : index
    %c0_82 = arith.constant 0 : index
    %355 = vector.load %arg7[%c0_81, %c0_82] : memref<128x384xbf16, #tpu.memory_space<vmem>>, vector<128x384xbf16>
    %cst_83 = arith.constant dense<0.000000e+00> : vector<2x384xf32>
    %356 = tpu.matmul %354, %355, %cst_83 {dimension_numbers = #tpu.dot_dimension_numbers<[1], [0], [0], [1], [0, 0, 1, 1], [], []>} : vector<2x128xbf16>, vector<128x384xbf16>, vector<2x384xf32> -> vector<2x384xf32>
    %357 = vector.extract_strided_slice %353 {offsets = [0, 0], sizes = [2, 256], strides = [1, 1]} : vector<2x384xf32> to vector<2x256xf32>
    %358 = vector.extract_strided_slice %356 {offsets = [0, 0], sizes = [2, 256], strides = [1, 1]} : vector<2x384xf32> to vector<2x256xf32>
    %359 = arith.addf %357, %358 : vector<2x256xf32>
    %360 = arith.negf %359 : vector<2x256xf32>
    %361 = math.exp %360 : vector<2x256xf32>
    %cst_84 = arith.constant 1.000000e+00 : f32
    %362 = vector.broadcast %cst_84 : f32 to vector<2x256xf32>
    %363 = arith.addf %362, %361 : vector<2x256xf32>
    %364 = arith.divf %362, %363 : vector<2x256xf32>
    %365 = vector.extract_strided_slice %364 {offsets = [0, 0], sizes = [2, 128], strides = [1, 1]} : vector<2x256xf32> to vector<2x128xf32>
    %366 = vector.extract_strided_slice %364 {offsets = [0, 128], sizes = [2, 128], strides = [1, 1]} : vector<2x256xf32> to vector<2x128xf32>
    %367 = vector.extract_strided_slice %353 {offsets = [0, 256], sizes = [2, 128], strides = [1, 1]} : vector<2x384xf32> to vector<2x128xf32>
    %368 = vector.extract_strided_slice %356 {offsets = [0, 256], sizes = [2, 128], strides = [1, 1]} : vector<2x384xf32> to vector<2x128xf32>
    %369 = arith.addf %368, %226 : vector<2x128xf32>
    %370 = arith.mulf %365, %369 : vector<2x128xf32>
    %371 = arith.addf %367, %370 : vector<2x128xf32>
    %372 = math.tanh %371 : vector<2x128xf32>
    %cst_85 = arith.constant 1.000000e+00 : f32
    %373 = vector.broadcast %cst_85 : f32 to vector<2x128xf32>
    %374 = arith.subf %373, %366 : vector<2x128xf32>
    %375 = arith.mulf %374, %372 : vector<2x128xf32>
    %376 = arith.mulf %366, %352 : vector<2x128xf32>
    %377 = arith.addf %375, %376 : vector<2x128xf32>
    %378 = vector.extract_strided_slice %223 {offsets = [12, 0], sizes = [2, 384], strides = [1, 1]} : vector<16x384xf32> to vector<2x384xf32>
    %379 = arith.truncf %377 : vector<2x128xf32> to vector<2x128xbf16>
    %c0_86 = arith.constant 0 : index
    %c0_87 = arith.constant 0 : index
    %380 = vector.load %arg7[%c0_86, %c0_87] : memref<128x384xbf16, #tpu.memory_space<vmem>>, vector<128x384xbf16>
    %cst_88 = arith.constant dense<0.000000e+00> : vector<2x384xf32>
    %381 = tpu.matmul %379, %380, %cst_88 {dimension_numbers = #tpu.dot_dimension_numbers<[1], [0], [0], [1], [0, 0, 1, 1], [], []>} : vector<2x128xbf16>, vector<128x384xbf16>, vector<2x384xf32> -> vector<2x384xf32>
    %382 = vector.extract_strided_slice %378 {offsets = [0, 0], sizes = [2, 256], strides = [1, 1]} : vector<2x384xf32> to vector<2x256xf32>
    %383 = vector.extract_strided_slice %381 {offsets = [0, 0], sizes = [2, 256], strides = [1, 1]} : vector<2x384xf32> to vector<2x256xf32>
    %384 = arith.addf %382, %383 : vector<2x256xf32>
    %385 = arith.negf %384 : vector<2x256xf32>
    %386 = math.exp %385 : vector<2x256xf32>
    %cst_89 = arith.constant 1.000000e+00 : f32
    %387 = vector.broadcast %cst_89 : f32 to vector<2x256xf32>
    %388 = arith.addf %387, %386 : vector<2x256xf32>
    %389 = arith.divf %387, %388 : vector<2x256xf32>
    %390 = vector.extract_strided_slice %389 {offsets = [0, 0], sizes = [2, 128], strides = [1, 1]} : vector<2x256xf32> to vector<2x128xf32>
    %391 = vector.extract_strided_slice %389 {offsets = [0, 128], sizes = [2, 128], strides = [1, 1]} : vector<2x256xf32> to vector<2x128xf32>
    %392 = vector.extract_strided_slice %378 {offsets = [0, 256], sizes = [2, 128], strides = [1, 1]} : vector<2x384xf32> to vector<2x128xf32>
    %393 = vector.extract_strided_slice %381 {offsets = [0, 256], sizes = [2, 128], strides = [1, 1]} : vector<2x384xf32> to vector<2x128xf32>
    %394 = arith.addf %393, %226 : vector<2x128xf32>
    %395 = arith.mulf %390, %394 : vector<2x128xf32>
    %396 = arith.addf %392, %395 : vector<2x128xf32>
    %397 = math.tanh %396 : vector<2x128xf32>
    %cst_90 = arith.constant 1.000000e+00 : f32
    %398 = vector.broadcast %cst_90 : f32 to vector<2x128xf32>
    %399 = arith.subf %398, %391 : vector<2x128xf32>
    %400 = arith.mulf %399, %397 : vector<2x128xf32>
    %401 = arith.mulf %391, %377 : vector<2x128xf32>
    %402 = arith.addf %400, %401 : vector<2x128xf32>
    %403 = vector.extract_strided_slice %223 {offsets = [14, 0], sizes = [2, 384], strides = [1, 1]} : vector<16x384xf32> to vector<2x384xf32>
    %404 = arith.truncf %402 : vector<2x128xf32> to vector<2x128xbf16>
    %c0_91 = arith.constant 0 : index
    %c0_92 = arith.constant 0 : index
    %405 = vector.load %arg7[%c0_91, %c0_92] : memref<128x384xbf16, #tpu.memory_space<vmem>>, vector<128x384xbf16>
    %cst_93 = arith.constant dense<0.000000e+00> : vector<2x384xf32>
    %406 = tpu.matmul %404, %405, %cst_93 {dimension_numbers = #tpu.dot_dimension_numbers<[1], [0], [0], [1], [0, 0, 1, 1], [], []>} : vector<2x128xbf16>, vector<128x384xbf16>, vector<2x384xf32> -> vector<2x384xf32>
    %407 = vector.extract_strided_slice %403 {offsets = [0, 0], sizes = [2, 256], strides = [1, 1]} : vector<2x384xf32> to vector<2x256xf32>
    %408 = vector.extract_strided_slice %406 {offsets = [0, 0], sizes = [2, 256], strides = [1, 1]} : vector<2x384xf32> to vector<2x256xf32>
    %409 = arith.addf %407, %408 : vector<2x256xf32>
    %410 = arith.negf %409 : vector<2x256xf32>
    %411 = math.exp %410 : vector<2x256xf32>
    %cst_94 = arith.constant 1.000000e+00 : f32
    %412 = vector.broadcast %cst_94 : f32 to vector<2x256xf32>
    %413 = arith.addf %412, %411 : vector<2x256xf32>
    %414 = arith.divf %412, %413 : vector<2x256xf32>
    %415 = vector.extract_strided_slice %414 {offsets = [0, 0], sizes = [2, 128], strides = [1, 1]} : vector<2x256xf32> to vector<2x128xf32>
    %416 = vector.extract_strided_slice %414 {offsets = [0, 128], sizes = [2, 128], strides = [1, 1]} : vector<2x256xf32> to vector<2x128xf32>
    %417 = vector.extract_strided_slice %403 {offsets = [0, 256], sizes = [2, 128], strides = [1, 1]} : vector<2x384xf32> to vector<2x128xf32>
    %418 = vector.extract_strided_slice %406 {offsets = [0, 256], sizes = [2, 128], strides = [1, 1]} : vector<2x384xf32> to vector<2x128xf32>
    %419 = arith.addf %418, %226 : vector<2x128xf32>
    %420 = arith.mulf %415, %419 : vector<2x128xf32>
    %421 = arith.addf %417, %420 : vector<2x128xf32>
    %422 = math.tanh %421 : vector<2x128xf32>
    %cst_95 = arith.constant 1.000000e+00 : f32
    %423 = vector.broadcast %cst_95 : f32 to vector<2x128xf32>
    %424 = arith.subf %423, %416 : vector<2x128xf32>
    %425 = arith.mulf %424, %422 : vector<2x128xf32>
    %426 = arith.mulf %416, %402 : vector<2x128xf32>
    %427 = arith.addf %425, %426 : vector<2x128xf32>
    %c0_96 = arith.constant 0 : index
    %c0_97 = arith.constant 0 : index
    %428 = vector.load %arg10[%c0_96, %c0_97] : memref<128x3xf32, #tpu.memory_space<vmem>>, vector<128x3xf32>
    %cst_98 = arith.constant dense<0.000000e+00> : vector<2x3xf32>
    %429 = tpu.matmul %427, %428, %cst_98 {dimension_numbers = #tpu.dot_dimension_numbers<[1], [0], [0], [1], [0, 0, 1, 1], [], []>} : vector<2x128xf32>, vector<128x3xf32>, vector<2x3xf32> -> vector<2x3xf32>
    %c0_99 = arith.constant 0 : index
    %c0_100 = arith.constant 0 : index
    %430 = vector.load %arg1[%c0_99, %c0_100] : memref<2x5xf32, #tpu.memory_space<vmem>>, vector<2x5xf32>
    %c0_101 = arith.constant 0 : index
    %c0_102 = arith.constant 0 : index
    %431 = vector.load %arg11[%c0_101, %c0_102] : memref<5x3xf32, #tpu.memory_space<vmem>>, vector<5x3xf32>
    %cst_103 = arith.constant dense<0.000000e+00> : vector<2x3xf32>
    %432 = tpu.matmul %430, %431, %cst_103 {dimension_numbers = #tpu.dot_dimension_numbers<[1], [0], [0], [1], [0, 0, 1, 1], [], []>} : vector<2x5xf32>, vector<5x3xf32>, vector<2x3xf32> -> vector<2x3xf32>
    %433 = arith.addf %429, %432 : vector<2x3xf32>
    %c0_104 = arith.constant 0 : index
    %c0_105 = arith.constant 0 : index
    %434 = vector.load %arg12[%c0_104, %c0_105] : memref<1x3xf32, #tpu.memory_space<vmem>>, vector<1x3xf32>
    %435 = vector.broadcast %434 : vector<1x3xf32> to vector<2x3xf32>
    %436 = arith.addf %433, %435 : vector<2x3xf32>
    %c0_106 = arith.constant 0 : index
    %c0_107 = arith.constant 0 : index
    %437 = vector.load %arg13[%c0_106, %c0_107] : memref<2x3xf32, #tpu.memory_space<vmem>>, vector<2x3xf32>
    tpu.vector_store %arg13[%c0_106, %c0_107], %436 {strides = array<i32>} : memref<2x3xf32, #tpu.memory_space<vmem>>, vector<2x3xf32>,
    return
  }
}

</mosaic_0001>

<llo_original>
// kernel: tpu_custom_call.1
$region0: #{tpu_custom_call.1}
  #allocation0 [shape = 'u32[]', space=smem, size = 0x4, offset = 0x4, fixed_abs, tag = 'smem constant byte address 0x4 - core index']
  #allocation1 [shape = 'u32[144,128]{1,0:T(1,128)}', space=vmem, size = 0x12000, scoped, tag = 'internal scratch']
  %s0 = inlined_call_operand.vmem [shape: bf16[16,4], index: 0, kind: input, shape index: {}]
  %s1 = inlined_call_operand.vmem [shape: f32[2,5], index: 1, kind: input, shape index: {}]
  %s2 = inlined_call_operand.vmem [shape: bf16[4,384], index: 2, kind: input, shape index: {}]
  %s3 = inlined_call_operand.hbm [shape: bf16[128,384], index: 3, kind: input, shape index: {}]
  %s4 = inlined_call_operand.vmem [shape: f32[1,384], index: 4, kind: input, shape index: {}]
  %s5 = inlined_call_operand.vmem [shape: f32[1,128], index: 5, kind: input, shape index: {}]
  %s6 = inlined_call_operand.hbm [shape: bf16[128,384], index: 6, kind: input, shape index: {}]
  %s7 = inlined_call_operand.hbm [shape: bf16[128,384], index: 7, kind: input, shape index: {}]
  %s8 = inlined_call_operand.vmem [shape: f32[1,384], index: 8, kind: input, shape index: {}]
  %s9 = inlined_call_operand.vmem [shape: f32[1,128], index: 9, kind: input, shape index: {}]
  %s10 = inlined_call_operand.vmem [shape: f32[128,3], index: 10, kind: input, shape index: {}]
  %s11 = inlined_call_operand.vmem [shape: f32[5,3], index: 11, kind: input, shape index: {}]
  %s12 = inlined_call_operand.vmem [shape: f32[1,3], index: 12, kind: input, shape index: {}]
  %s13 = inlined_call_operand.hbm [shape: f32[2,3], index: 13, kind: output, shape index: {}]
  %s14 = sld [smem:[#allocation0]]
  $region74: #{tpu_custom_call.1} parent=0
    _
  %s16 = ssub.s32 1, %s14
  %s17 = scalar_select 0, %s16, %s14
  $region1: #{tpu_custom_call.1} parent=0
    #allocation2 [shape = 'u8[98304]{0}', space=vmem, size = 0x18000, scoped, tag = 'input window, operand 3, single buffered']
    #allocation3 [shape = 's32[1]{0}', space=sflag, size = 0x4, scoped, tag = 'scoped memory for tpu_custom_call.1']
    #allocation4 [shape = 's32[1]{0}', space=sflag, size = 0x4, scoped, tag = 'scoped memory for tpu_custom_call.1']
    #allocation5 [shape = 'u8[98304]{0}', space=vmem, size = 0x18000, scoped, tag = 'input window, operand 6, single buffered']
    #allocation6 [shape = 's32[1]{0}', space=sflag, size = 0x4, scoped, tag = 'scoped memory for tpu_custom_call.1']
    #allocation7 [shape = 'u8[98304]{0}', space=vmem, size = 0x18000, scoped, tag = 'input window, operand 7, single buffered']
    #allocation8 [shape = 'u8[1024]{0}', space=vmem, size = 0x400, scoped, tag = 'output window, operand 0, single buffered']
    %18 = vsyncpa [#allocation3], 0
    %19 = vsyncpa [#allocation6], 0
    %20 = vsyncpa [#allocation4], 0
    // Predicated region
    $region2: #{tpu_custom_call.1} parent=1 // pred_check
      _
    $region3: #{tpu_custom_call.1} parent=1 // pred_check_branch
      %22 = sbr.rel (0) target = $region5
    $region4: #{tpu_custom_call.1} parent=1 // pred_region
      _
    $region5: #{tpu_custom_call.1} parent=1 // pred_fallthru
      _
    // Predicated region
    $region6: #{tpu_custom_call.1} parent=1 // pred_check
      _
    $region7: #{tpu_custom_call.1} parent=1 // pred_check_branch
      %24 = sbr.rel (0) target = $region9
    $region8: #{tpu_custom_call.1} parent=1 // pred_region
      _
    $region9: #{tpu_custom_call.1} parent=1 // pred_fallthru
      _
    // Predicated region
    $region10: #{tpu_custom_call.1} parent=1 // pred_check
      _
    $region11: #{tpu_custom_call.1} parent=1 // pred_check_branch
      %26 = sbr.rel (0) target = $region13
    $region12: #{tpu_custom_call.1} parent=1 // pred_region
      _
    $region13: #{tpu_custom_call.1} parent=1 // pred_fallthru
      _
    // Predicated region
    $region14: #{tpu_custom_call.1} parent=1 // pred_check
      _
    $region15: #{tpu_custom_call.1} parent=1 // pred_check_branch
      %28 = sbr.rel (0) target = $region17
    $region16: #{tpu_custom_call.1} parent=1 // pred_region
      %s30 = ssub.s32 3072, 3072
      %31 = vsyncadd [#allocation3], %s30
      %s32 = sshll.u32 [#allocation2], 4
      %s33 = int_to_ptr.vmem [resolvable:$true] %s32
      %38 = dma.hbm_to_vmem [thread:$0]  %s3, 3072, %s33, [#allocation3], 192, 192, 12
    $region17: #{tpu_custom_call.1} parent=1 // pred_fallthru
      _
    // Predicated region
    $region18: #{tpu_custom_call.1} parent=1 // pred_check
      _
    $region19: #{tpu_custom_call.1} parent=1 // pred_check_branch
      %40 = sbr.rel (0) target = $region21
    $region20: #{tpu_custom_call.1} parent=1 // pred_region
      _
    $region21: #{tpu_custom_call.1} parent=1 // pred_fallthru
      _
    // Predicated region
    $region22: #{tpu_custom_call.1} parent=1 // pred_check
      _
    $region23: #{tpu_custom_call.1} parent=1 // pred_check_branch
      %42 = sbr.rel (0) target = $region25
    $region24: #{tpu_custom_call.1} parent=1 // pred_region
      _
    $region25: #{tpu_custom_call.1} parent=1 // pred_fallthru
      _
    // Predicated region
    $region26: #{tpu_custom_call.1} parent=1 // pred_check
      _
    $region27: #{tpu_custom_call.1} parent=1 // pred_check_branch
      %44 = sbr.rel (0) target = $region29
    $region28: #{tpu_custom_call.1} parent=1 // pred_region
      %s46 = ssub.s32 3072, 3072
      %47 = vsyncadd [#allocation6], %s46
      %s48 = sshll.u32 [#allocation5], 4
      %s49 = int_to_ptr.vmem [resolvable:$true] %s48
      %54 = dma.hbm_to_vmem [thread:$0]  %s6, 3072, %s49, [#allocation6], 192, 192, 12
    $region29: #{tpu_custom_call.1} parent=1 // pred_fallthru
      _
    // Predicated region
    $region30: #{tpu_custom_call.1} parent=1 // pred_check
      _
    $region31: #{tpu_custom_call.1} parent=1 // pred_check_branch
      %56 = sbr.rel (0) target = $region33
    $region32: #{tpu_custom_call.1} parent=1 // pred_region
      %s58 = ssub.s32 3072, 3072
      %59 = vsyncadd [#allocation6], %s58
      %s60 = sshll.u32 [#allocation7], 4
      %s61 = int_to_ptr.vmem [resolvable:$true] %s60
      %66 = dma.hbm_to_vmem [thread:$0]  %s7, 3072, %s61, [#allocation6], 192, 192, 12
    $region33: #{tpu_custom_call.1} parent=1 // pred_fallthru
      _
    // Predicated region
    $region34: #{tpu_custom_call.1} parent=1 // pred_check
      _
    $region35: #{tpu_custom_call.1} parent=1 // pred_check_branch
      %68 = sbr.rel (0) target = $region37
    $region36: #{tpu_custom_call.1} parent=1 // pred_region
      _
    $region37: #{tpu_custom_call.1} parent=1 // pred_fallthru
      _
    // Predicated region
    $region38: #{tpu_custom_call.1} parent=1 // pred_check
      _
    $region39: #{tpu_custom_call.1} parent=1 // pred_check_branch
      %70 = sbr.rel (0) target = $region41
    $region40: #{tpu_custom_call.1} parent=1 // pred_region
      _
    $region41: #{tpu_custom_call.1} parent=1 // pred_fallthru
      _
    // Predicated region
    $region42: #{tpu_custom_call.1} parent=1 // pred_check
      _
    $region43: #{tpu_custom_call.1} parent=1 // pred_check_branch
      %72 = sbr.rel (0) target = $region45
    $region44: #{tpu_custom_call.1} parent=1 // pred_region
      _
    $region45: #{tpu_custom_call.1} parent=1 // pred_fallthru
      _
    // Predicated region
    $region46: #{tpu_custom_call.1} parent=1 // pred_check
      _
    $region47: #{tpu_custom_call.1} parent=1 // pred_check_branch
      %74 = sbr.rel (0) target = $region49
    $region48: #{tpu_custom_call.1} parent=1 // pred_region
      _
    $region49: #{tpu_custom_call.1} parent=1 // pred_fallthru
      _
    // Predicated region
    $region50: #{tpu_custom_call.1} parent=1 // pred_check
      _
    $region51: #{tpu_custom_call.1} parent=1 // pred_check_branch
      %76 = sbr.rel (0) target = $region53
    $region52: #{tpu_custom_call.1} parent=1 // pred_region
      _
    $region53: #{tpu_custom_call.1} parent=1 // pred_fallthru
      _
    // Predicated region
    $region54: #{tpu_custom_call.1} parent=1 // pred_check
      _
    $region55: #{tpu_custom_call.1} parent=1 // pred_check_branch
      %78 = sbr.rel (0) target = $region57
    $region56: #{tpu_custom_call.1} parent=1 // pred_region
      %79 = dma.done [#allocation3], 3072
    $region57: #{tpu_custom_call.1} parent=1 // pred_fallthru
      _
    // Predicated region
    $region58: #{tpu_custom_call.1} parent=1 // pred_check
      _
    $region59: #{tpu_custom_call.1} parent=1 // pred_check_branch
      %81 = sbr.rel (0) target = $region61
    $region60: #{tpu_custom_call.1} parent=1 // pred_region
      %82 = dma.done [#allocation6], 3072
    $region61: #{tpu_custom_call.1} parent=1 // pred_fallthru
      _
    // Predicated region
    $region62: #{tpu_custom_call.1} parent=1 // pred_check
      _
    $region63: #{tpu_custom_call.1} parent=1 // pred_check_branch
      %84 = sbr.rel (0) target = $region65
    $region64: #{tpu_custom_call.1} parent=1 // pred_region
      %85 = dma.done [#allocation6], 3072
    $region65: #{tpu_custom_call.1} parent=1 // pred_fallthru
      _
    %v87 = vld [vmem:[%s0] sm:$0xf]
    %v88 = vld [vmem:[%s0 + $0x4] sm:$0xf]
    %v89 = vld [vmem:[%s2] sm:$0x3f]
    %v90 = vld [vmem:[%s4] sm:$0x7]
    %v92 = vlaneseq
    %v93 = vshrl.u32 %v92, 7
    %v94 = vsub.s32 0, %v93
    %v95 = vrot.slane %v90, %v94
    %v96 = vlaneseq
    %v97 = vshrl.u32 %v96, 7
    %v98 = vsub.s32 1, %v97
    %v99 = vrot.slane %v90, %v98
    %v100 = vlaneseq
    %v101 = vshrl.u32 %v100, 7
    %v102 = vsub.s32 2, %v101
    %v103 = vrot.slane %v90, %v102
    %v109 = vunpack.c.l.b16 %v87
    %v110 = vunpack.c.l.b16 %v88
    %v111 = vpack.c.b16 %v110, %v109
    %v113 = vcombine.high %v89, %v89
    %v115 = vunpack.c.l.s4 1983009808
    %v116 = vunpack.c.0.s8 %v115
    %v117 = vlaneseq
    %v118 = vshrl.u32 %v117, 7
    %v119 = vsub.s32 %v116, %v118
    %v120 = vrot.slane %v89, %v119
    %v122 = vunpack.c.l.s4 1983009808
    %v123 = vunpack.c.0.s8 %v122
    %v124 = vlaneseq
    %v125 = vshrl.u32 %v124, 7
    %v126 = vsub.s32 %v123, %v125
    %v127 = vrot.slane %v113, %v126
    %v128 = vcombine.high %v120, %v120
    %vm129 = vcmask 31744
    %v131 = vsel %vm129, %v111, 0
    %vm133 = vcmask 1041408
    %v135 = vsel %vm133, %v120, 0
    %v138 = vsel %vm133, %v128, 0
    %v141 = vsel %vm133, %v127, 0
    %143 = vmatprep.subr.bf16.mxu0 0
    %144 = vmatpush1.bf16.msra.mxu0 0
    %145 = vmatprep.subr.bf16.mxu0 0
    %146 = vmatpush1.bf16.msra.mxu0 0
    %147 = vmatprep.subr.bf16.mxu0 0
    %148 = vmatpush1.bf16.msra.mxu0 0
    %149 = vmatprep.subr.bf16.mxu0 0
    %150 = vmatpush1.bf16.msra.mxu0 0
    %151 = vmatprep.subr.bf16.mxu0 0
    %152 = vmatpush1.bf16.msra.mxu0 0
    %153 = vmatprep.subr.bf16.mxu0 0
    %154 = vmatpush1.bf16.msra.mxu0 0
    %155 = vmatprep.subr.bf16.mxu0 0
    %156 = vmatpush1.bf16.msra.mxu0 0
    %157 = vmatprep.subr.bf16.mxu0 %v138
    %158 = vmatpush1.bf16.msra.mxu0 %v135
    %159 = vmatprep.subr.bf16.mxu0 0
    %160 = vmatpush2.bf16.msra.mxu0 0
    %161 = vmatprep.subr.bf16.mxu0 0
    %162 = vmatpush2.bf16.msra.mxu0 0
    %163 = vmatprep.subr.bf16.mxu0 0
    %164 = vmatpush2.bf16.msra.mxu0 0
    %165 = vmatprep.subr.bf16.mxu0 0
    %166 = vmatpush2.bf16.msra.mxu0 0
    %167 = vmatprep.subr.bf16.mxu0 0
    %168 = vmatpush2.bf16.msra.mxu0 0
    %169 = vmatprep.subr.bf16.mxu0 0
    %170 = vmatpush2.bf16.msra.mxu0 0
    %171 = vmatprep.subr.bf16.mxu0 0
    %172 = vmatpush2.bf16.msra.mxu0 0
    %173 = vmatprep.subr.bf16.mxu0 0
    %174 = vmatpush2.bf16.msra.mxu0 0
    %175 = vmatprep.mubr.bf16.mxu0 0
    %176 = vmatmul.mubr.bf16.gmra.mxu0 %v131
    %v177 = vpop.f32.mrf.mxu0
    %v178 = vadd.f32 %v95, %v177
    %v179 = vpop.f32.mrf.mxu0
    %v180 = vadd.f32 %v99, %v179
    %v181 = vpop.f32.mrf.mxu0
    %v182 = vadd.f32 %v95, %v181
    %v183 = vpop.f32.mrf.mxu0
    %v184 = vadd.f32 %v99, %v183
    %185 = vdwg.mxu0
    %186 = vmatprep.subr.bf16.mxu0 0
    %187 = vmatpush1.bf16.msra.mxu0 0
    %188 = vmatprep.subr.bf16.mxu0 0
    %189 = vmatpush1.bf16.msra.mxu0 0
    %190 = vmatprep.subr.bf16.mxu0 0
    %191 = vmatpush1.bf16.msra.mxu0 0
    %192 = vmatprep.subr.bf16.mxu0 0
    %193 = vmatpush1.bf16.msra.mxu0 0
    %194 = vmatprep.subr.bf16.mxu0 0
    %195 = vmatpush1.bf16.msra.mxu0 0
    %196 = vmatprep.subr.bf16.mxu0 0
    %197 = vmatpush1.bf16.msra.mxu0 0
    %198 = vmatprep.subr.bf16.mxu0 0
    %199 = vmatpush1.bf16.msra.mxu0 0
    %200 = vmatprep.subr.bf16.mxu0 0
    %201 = vmatpush1.bf16.msra.mxu0 %v141
    %202 = vmatprep.subr.bf16.mxu0 0
    %203 = vmatpush2.bf16.msra.mxu0 0
    %204 = vmatprep.subr.bf16.mxu0 0
    %205 = vmatpush2.bf16.msra.mxu0 0
    %206 = vmatprep.subr.bf16.mxu0 0
    %207 = vmatpush2.bf16.msra.mxu0 0
    %208 = vmatprep.subr.bf16.mxu0 0
    %209 = vmatpush2.bf16.msra.mxu0 0
    %210 = vmatprep.subr.bf16.mxu0 0
    %211 = vmatpush2.bf16.msra.mxu0 0
    %212 = vmatprep.subr.bf16.mxu0 0
    %213 = vmatpush2.bf16.msra.mxu0 0
    %214 = vmatprep.subr.bf16.mxu0 0
    %215 = vmatpush2.bf16.msra.mxu0 0
    %216 = vmatprep.subr.bf16.mxu0 0
    %217 = vmatpush2.bf16.msra.mxu0 0
    %218 = vmatprep.mubr.bf16.mxu0 0
    %219 = vmatmul.mubr.bf16.gmra.mxu0 %v131
    %v220 = vpop.f32.mrf.mxu0
    %v221 = vadd.f32 %v103, %v220
    %v222 = vpop.f32.mrf.mxu0
    %v223 = vpop.f32.mrf.mxu0
    %v224 = vadd.f32 %v103, %v223
    %v225 = vpop.f32.mrf.mxu0
    %226 = vdwg.mxu0
    %v227 = vld [vmem:[%s5] sm:$0x1]
    %v229 = vlaneseq
    %v230 = vshrl.u32 %v229, 7
    %v231 = vsub.s32 0, %v230
    %v232 = vrot.slane %v227, %v231
    %v234 = vld [vmem:[#allocation2] sm:$0xff]
    %v235 = vld [vmem:[#allocation2 + $0x8] sm:$0xf]
    %v236 = vld [vmem:[#allocation2 + $0xc] sm:$0xff]
    %v237 = vld [vmem:[#allocation2 + $0x14] sm:$0xf]
    %v238 = vld [vmem:[#allocation2 + $0x18] sm:$0xff]
    %v239 = vld [vmem:[#allocation2 + $0x20] sm:$0xf]
    %v240 = vld [vmem:[#allocation2 + $0x24] sm:$0xff]
    %v241 = vld [vmem:[#allocation2 + $0x2c] sm:$0xf]
    %v242 = vld [vmem:[#allocation2 + $0x30] sm:$0xff]
    %v243 = vld [vmem:[#allocation2 + $0x38] sm:$0xf]
    %v244 = vld [vmem:[#allocation2 + $0x3c] sm:$0xff]
    %v245 = vld [vmem:[#allocation2 + $0x44] sm:$0xf]
    %v246 = vld [vmem:[#allocation2 + $0x48] sm:$0xff]
    %v247 = vld [vmem:[#allocation2 + $0x50] sm:$0xf]
    %v248 = vld [vmem:[#allocation2 + $0x54] sm:$0xff]
    %v249 = vld [vmem:[#allocation2 + $0x5c] sm:$0xf]
    %v250 = vld [vmem:[#allocation2 + $0x60] sm:$0xff]
    %v251 = vld [vmem:[#allocation2 + $0x68] sm:$0xf]
    %v252 = vld [vmem:[#allocation2 + $0x6c] sm:$0xff]
    %v253 = vld [vmem:[#allocation2 + $0x74] sm:$0xf]
    %v254 = vld [vmem:[#allocation2 + $0x78] sm:$0xff]
    %v255 = vld [vmem:[#allocation2 + $0x80] sm:$0xf]
    %v256 = vld [vmem:[#allocation2 + $0x84] sm:$0xff]
    %v257 = vld [vmem:[#allocation2 + $0x8c] sm:$0xf]
    %v258 = vld [vmem:[#allocation2 + $0x90] sm:$0xff]
    %v259 = vld [vmem:[#allocation2 + $0x98] sm:$0xf]
    %v260 = vld [vmem:[#allocation2 + $0x9c] sm:$0xff]
    %v261 = vld [vmem:[#allocation2 + $0xa4] sm:$0xf]
    %v262 = vld [vmem:[#allocation2 + $0xa8] sm:$0xff]
    %v263 = vld [vmem:[#allocation2 + $0xb0] sm:$0xf]
    %v264 = vld [vmem:[#allocation2 + $0xb4] sm:$0xff]
    %v265 = vld [vmem:[#allocation2 + $0xbc] sm:$0xf]
    %v298 = vunpack.c.l.b16 %v234
    %v299 = vunpack.c.h.b16 %v234
    %v300 = vunpack.c.l.b16 %v235
    %v301 = vunpack.c.l.b16 %v236
    %v302 = vunpack.c.h.b16 %v236
    %v303 = vunpack.c.l.b16 %v237
    %v304 = vunpack.c.l.b16 %v238
    %v305 = vunpack.c.h.b16 %v238
    %v306 = vunpack.c.l.b16 %v239
    %v307 = vunpack.c.l.b16 %v240
    %v308 = vunpack.c.h.b16 %v240
    %v309 = vunpack.c.l.b16 %v241
    %v310 = vunpack.c.l.b16 %v242
    %v311 = vunpack.c.h.b16 %v242
    %v312 = vunpack.c.l.b16 %v243
    %v313 = vunpack.c.l.b16 %v244
    %v314 = vunpack.c.h.b16 %v244
    %v315 = vunpack.c.l.b16 %v245
    %v316 = vunpack.c.l.b16 %v246
    %v317 = vunpack.c.h.b16 %v246
    %v318 = vunpack.c.l.b16 %v247
    %v319 = vunpack.c.l.b16 %v248
    %v320 = vunpack.c.h.b16 %v248
    %v321 = vunpack.c.l.b16 %v249
    %v322 = vunpack.c.l.b16 %v250
    %v323 = vunpack.c.h.b16 %v250
    %v324 = vunpack.c.l.b16 %v251
    %v325 = vunpack.c.l.b16 %v252
    %v326 = vunpack.c.h.b16 %v252
    %v327 = vunpack.c.l.b16 %v253
    %v328 = vunpack.c.l.b16 %v254
    %v329 = vunpack.c.h.b16 %v254
    %v330 = vunpack.c.l.b16 %v255
    %v331 = vunpack.c.l.b16 %v256
    %v332 = vunpack.c.h.b16 %v256
    %v333 = vunpack.c.l.b16 %v257
    %v334 = vunpack.c.l.b16 %v258
    %v335 = vunpack.c.h.b16 %v258
    %v336 = vunpack.c.l.b16 %v259
    %v337 = vunpack.c.l.b16 %v260
    %v338 = vunpack.c.h.b16 %v260
    %v339 = vunpack.c.l.b16 %v261
    %v340 = vunpack.c.l.b16 %v262
    %v341 = vunpack.c.h.b16 %v262
    %v342 = vunpack.c.l.b16 %v263
    %v343 = vunpack.c.l.b16 %v264
    %v344 = vunpack.c.h.b16 %v264
    %v345 = vunpack.c.l.b16 %v265
    %v346 = vpack.c.b16 %v301, %v298
    %v347 = vpack.c.b16 %v302, %v299
    %v348 = vpack.c.b16 %v303, %v300
    %v349 = vpack.c.b16 %v307, %v304
    %v350 = vpack.c.b16 %v308, %v305
    %v351 = vpack.c.b16 %v309, %v306
    %v352 = vpack.c.b16 %v313, %v310
    %v353 = vpack.c.b16 %v314, %v311
    %v354 = vpack.c.b16 %v315, %v312
    %v355 = vpack.c.b16 %v319, %v316
    %v356 = vpack.c.b16 %v320, %v317
    %v357 = vpack.c.b16 %v321, %v318
    %v358 = vpack.c.b16 %v325, %v322
    %v359 = vpack.c.b16 %v326, %v323
    %v360 = vpack.c.b16 %v327, %v324
    %v361 = vpack.c.b16 %v331, %v328
    %v362 = vpack.c.b16 %v332, %v329
    %v363 = vpack.c.b16 %v333, %v330
    %v364 = vpack.c.b16 %v337, %v334
    %v365 = vpack.c.b16 %v338, %v335
    %v366 = vpack.c.b16 %v339, %v336
    %v367 = vpack.c.b16 %v343, %v340
    %v368 = vpack.c.b16 %v344, %v341
    %v369 = vpack.c.b16 %v345, %v342
    %394 = vmatprep.subr.bf16.mxu0 %v368
    %395 = vmatpush1.bf16.msra.mxu0 %v367
    %396 = vmatprep.subr.bf16.mxu0 %v365
    %397 = vmatpush1.bf16.msra.mxu0 %v364
    %398 = vmatprep.subr.bf16.mxu0 %v362
    %399 = vmatpush1.bf16.msra.mxu0 %v361
    %400 = vmatprep.subr.bf16.mxu0 %v359
    %401 = vmatpush1.bf16.msra.mxu0 %v358
    %402 = vmatprep.subr.bf16.mxu0 %v356
    %403 = vmatpush1.bf16.msra.mxu0 %v355
    %404 = vmatprep.subr.bf16.mxu0 %v353
    %405 = vmatpush1.bf16.msra.mxu0 %v352
    %406 = vmatprep.subr.bf16.mxu0 %v350
    %407 = vmatpush1.bf16.msra.mxu0 %v349
    %408 = vmatprep.subr.bf16.mxu0 %v347
    %409 = vmatpush1.bf16.msra.mxu0 %v346
    %410 = vmatprep.subr.bf16.mxu0 0
    %411 = vmatpush2.bf16.msra.mxu0 0
    %412 = vmatprep.subr.bf16.mxu0 0
    %413 = vmatpush2.bf16.msra.mxu0 0
    %414 = vmatprep.subr.bf16.mxu0 0
    %415 = vmatpush2.bf16.msra.mxu0 0
    %416 = vmatprep.subr.bf16.mxu0 0
    %417 = vmatpush2.bf16.msra.mxu0 0
    %418 = vmatprep.subr.bf16.mxu0 0
    %419 = vmatpush2.bf16.msra.mxu0 0
    %420 = vmatprep.subr.bf16.mxu0 0
    %421 = vmatpush2.bf16.msra.mxu0 0
    %422 = vmatprep.subr.bf16.mxu0 0
    %423 = vmatpush2.bf16.msra.mxu0 0
    %424 = vmatprep.subr.bf16.mxu0 0
    %425 = vmatpush2.bf16.msra.mxu0 0
    %426 = vmatprep.mubr.bf16.mxu0 0
    %427 = vmatmul.mubr.bf16.gmra.mxu0 0
    %v428 = vpop.f32.mrf.mxu0
    %v429 = vadd.f32 0.0, %v428
    %v430 = vpop.f32.mrf.mxu0
    %v431 = vadd.f32 0.0, %v430
    %v432 = vpop.f32.mrf.mxu0
    %v433 = vpop.f32.mrf.mxu0
    %434 = vdwg.mxu0
    %435 = vmatprep.subr.bf16.mxu0 0
    %436 = vmatpush1.bf16.msra.mxu0 %v369
    %437 = vmatprep.subr.bf16.mxu0 0
    %438 = vmatpush1.bf16.msra.mxu0 %v366
    %439 = vmatprep.subr.bf16.mxu0 0
    %440 = vmatpush1.bf16.msra.mxu0 %v363
    %441 = vmatprep.subr.bf16.mxu0 0
    %442 = vmatpush1.bf16.msra.mxu0 %v360
    %443 = vmatprep.subr.bf16.mxu0 0
    %444 = vmatpush1.bf16.msra.mxu0 %v357
    %445 = vmatprep.subr.bf16.mxu0 0
    %446 = vmatpush1.bf16.msra.mxu0 %v354
    %447 = vmatprep.subr.bf16.mxu0 0
    %448 = vmatpush1.bf16.msra.mxu0 %v351
    %449 = vmatprep.subr.bf16.mxu0 0
    %450 = vmatpush1.bf16.msra.mxu0 %v348
    %451 = vmatprep.subr.bf16.mxu0 0
    %452 = vmatpush2.bf16.msra.mxu0 0
    %453 = vmatprep.subr.bf16.mxu0 0
    %454 = vmatpush2.bf16.msra.mxu0 0
    %455 = vmatprep.subr.bf16.mxu0 0
    %456 = vmatpush2.bf16.msra.mxu0 0
    %457 = vmatprep.subr.bf16.mxu0 0
    %458 = vmatpush2.bf16.msra.mxu0 0
    %459 = vmatprep.subr.bf16.mxu0 0
    %460 = vmatpush2.bf16.msra.mxu0 0
    %461 = vmatprep.subr.bf16.mxu0 0
    %462 = vmatpush2.bf16.msra.mxu0 0
    %463 = vmatprep.subr.bf16.mxu0 0
    %464 = vmatpush2.bf16.msra.mxu0 0
    %465 = vmatprep.subr.bf16.mxu0 0
    %466 = vmatpush2.bf16.msra.mxu0 0
    %467 = vmatprep.mubr.bf16.mxu0 0
    %468 = vmatmul.mubr.bf16.gmra.mxu0 0
    %v469 = vpop.f32.mrf.mxu0
    %v470 = vadd.f32 0.0, %v469
    %v471 = vpop.f32.mrf.mxu0
    %v472 = vpop.f32.mrf.mxu0
    %v473 = vpop.f32.mrf.mxu0
    %474 = vdwg.mxu0
    %v475 = vadd.f32 %v178, %v429
    %v476 = vadd.f32 %v180, %v431
    %v477 = vxor.u32 %v475, 2147483648
    %v478 = vxor.u32 %v476, 2147483648
    %v479 = vmul.f32 %v477, 1.442695
    %v480 = vpow.pop %v479
    %v481 = vmul.f32 %v478, 1.442695
    %v482 = vpow.pop %v481
    %v483 = vadd.f32 %v480, 1.0
    %v484 = vadd.f32 %v482, 1.0
    %v485 = vrcp.pop %v483
    %v486 = vmul.f32 1.0, %v485
    %v487 = vrcp.pop %v484
    %v488 = vmul.f32 1.0, %v487
    %v489 = vadd.f32 %v470, %v232
    %v490 = vmul.f32 %v486, %v489
    %v491 = vadd.f32 %v221, %v490
    %v492 = vtanh.pop %v491
    %v493 = vsub.f32 1.0, %v488
    %v494 = vmul.f32 %v493, %v492
    %v495 = vmul.f32 %v488, 0.0
    %v496 = vadd.f32 %v494, %v495
    %v497 = vpack.c.bf16 %v496, %v496
    %498 = vmatprep.subr.bf16.mxu0 %v368
    %499 = vmatpush1.bf16.msra.mxu0 %v367
    %500 = vmatprep.subr.bf16.mxu0 %v365
    %501 = vmatpush1.bf16.msra.mxu0 %v364
    %502 = vmatprep.subr.bf16.mxu0 %v362
    %503 = vmatpush1.bf16.msra.mxu0 %v361
    %504 = vmatprep.subr.bf16.mxu0 %v359
    %505 = vmatpush1.bf16.msra.mxu0 %v358
    %506 = vmatprep.subr.bf16.mxu0 %v356
    %507 = vmatpush1.bf16.msra.mxu0 %v355
    %508 = vmatprep.subr.bf16.mxu0 %v353
    %509 = vmatpush1.bf16.msra.mxu0 %v352
    %510 = vmatprep.subr.bf16.mxu0 %v350
    %511 = vmatpush1.bf16.msra.mxu0 %v349
    %512 = vmatprep.subr.bf16.mxu0 %v347
    %513 = vmatpush1.bf16.msra.mxu0 %v346
    %514 = vmatprep.subr.bf16.mxu0 0
    %515 = vmatpush2.bf16.msra.mxu0 0
    %516 = vmatprep.subr.bf16.mxu0 0
    %517 = vmatpush2.bf16.msra.mxu0 0
    %518 = vmatprep.subr.bf16.mxu0 0
    %519 = vmatpush2.bf16.msra.mxu0 0
    %520 = vmatprep.subr.bf16.mxu0 0
    %521 = vmatpush2.bf16.msra.mxu0 0
    %522 = vmatprep.subr.bf16.mxu0 0
    %523 = vmatpush2.bf16.msra.mxu0 0
    %524 = vmatprep.subr.bf16.mxu0 0
    %525 = vmatpush2.bf16.msra.mxu0 0
    %526 = vmatprep.subr.bf16.mxu0 0
    %527 = vmatpush2.bf16.msra.mxu0 0
    %528 = vmatprep.subr.bf16.mxu0 0
    %529 = vmatpush2.bf16.msra.mxu0 0
    %530 = vmatprep.mubr.bf16.mxu0 0
    %531 = vmatmul.mubr.bf16.gmra.mxu0 %v497
    %v532 = vpop.f32.mrf.mxu0
    %v533 = vadd.f32 0.0, %v532
    %v534 = vpop.f32.mrf.mxu0
    %v535 = vadd.f32 0.0, %v534
    %v536 = vpop.f32.mrf.mxu0
    %v537 = vpop.f32.mrf.mxu0
    %538 = vdwg.mxu0
    %539 = vmatprep.subr.bf16.mxu0 0
    %540 = vmatpush1.bf16.msra.mxu0 %v369
    %541 = vmatprep.subr.bf16.mxu0 0
    %542 = vmatpush1.bf16.msra.mxu0 %v366
    %543 = vmatprep.subr.bf16.mxu0 0
    %544 = vmatpush1.bf16.msra.mxu0 %v363
    %545 = vmatprep.subr.bf16.mxu0 0
    %546 = vmatpush1.bf16.msra.mxu0 %v360
    %547 = vmatprep.subr.bf16.mxu0 0
    %548 = vmatpush1.bf16.msra.mxu0 %v357
    %549 = vmatprep.subr.bf16.mxu0 0
    %550 = vmatpush1.bf16.msra.mxu0 %v354
    %551 = vmatprep.subr.bf16.mxu0 0
    %552 = vmatpush1.bf16.msra.mxu0 %v351
    %553 = vmatprep.subr.bf16.mxu0 0
    %554 = vmatpush1.bf16.msra.mxu0 %v348
    %555 = vmatprep.subr.bf16.mxu0 0
    %556 = vmatpush2.bf16.msra.mxu0 0
    %557 = vmatprep.subr.bf16.mxu0 0
    %558 = vmatpush2.bf16.msra.mxu0 0
    %559 = vmatprep.subr.bf16.mxu0 0
    %560 = vmatpush2.bf16.msra.mxu0 0
    %561 = vmatprep.subr.bf16.mxu0 0
    %562 = vmatpush2.bf16.msra.mxu0 0
    %563 = vmatprep.subr.bf16.mxu0 0
    %564 = vmatpush2.bf16.msra.mxu0 0
    %565 = vmatprep.subr.bf16.mxu0 0
    %566 = vmatpush2.bf16.msra.mxu0 0
    %567 = vmatprep.subr.bf16.mxu0 0
    %568 = vmatpush2.bf16.msra.mxu0 0
    %569 = vmatprep.subr.bf16.mxu0 0
    %570 = vmatpush2.bf16.msra.mxu0 0
    %571 = vmatprep.mubr.bf16.mxu0 0
    %572 = vmatmul.mubr.bf16.gmra.mxu0 %v497
    %v573 = vpop.f32.mrf.mxu0
    %v574 = vadd.f32 0.0, %v573
    %v575 = vpop.f32.mrf.mxu0
    %v576 = vpop.f32.mrf.mxu0
    %v577 = vpop.f32.mrf.mxu0
    %578 = vdwg.mxu0
    %v581 = vrot.slane %v533, 6
    %v582 = vrot.slane %v535, 6
    %v585 = vadd.f32 %v178, %v581
    %v586 = vadd.f32 %v180, %v582
    %v587 = vxor.u32 %v585, 2147483648
    %v588 = vxor.u32 %v586, 2147483648
    %v589 = vmul.f32 %v587, 1.442695
    %v590 = vpow.pop %v589
    %v591 = vmul.f32 %v588, 1.442695
    %v592 = vpow.pop %v591
    %v593 = vadd.f32 %v590, 1.0
    %v594 = vadd.f32 %v592, 1.0
    %v595 = vrcp.pop %v593
    %v596 = vmul.f32 1.0, %v595
    %v597 = vrcp.pop %v594
    %v598 = vmul.f32 1.0, %v597
    %v599 = vadd.f32 %v574, %v232
    %v601 = vrot.slane %v599, 6
    %v603 = vmul.f32 %v596, %v601
    %v604 = vadd.f32 %v221, %v603
    %v605 = vtanh.pop %v604
    %v606 = vsub.f32 1.0, %v598
    %v607 = vmul.f32 %v606, %v605
    %v609 = vrot.slane %v496, 6
    %v611 = vmul.f32 %v598, %v609
    %v612 = vadd.f32 %v607, %v611
    %v613 = vpack.c.bf16 %v612, %v612
    %v615 = vrot.slane %v613, 1
    %617 = vmatprep.subr.bf16.mxu0 %v368
    %618 = vmatpush1.bf16.msra.mxu0 %v367
    %619 = vmatprep.subr.bf16.mxu0 %v365
    %620 = vmatpush1.bf16.msra.mxu0 %v364
    %621 = vmatprep.subr.bf16.mxu0 %v362
    %622 = vmatpush1.bf16.msra.mxu0 %v361
    %623 = vmatprep.subr.bf16.mxu0 %v359
    %624 = vmatpush1.bf16.msra.mxu0 %v358
    %625 = vmatprep.subr.bf16.mxu0 %v356
    %626 = vmatpush1.bf16.msra.mxu0 %v355
    %627 = vmatprep.subr.bf16.mxu0 %v353
    %628 = vmatpush1.bf16.msra.mxu0 %v352
    %629 = vmatprep.subr.bf16.mxu0 %v350
    %630 = vmatpush1.bf16.msra.mxu0 %v349
    %631 = vmatprep.subr.bf16.mxu0 %v347
    %632 = vmatpush1.bf16.msra.mxu0 %v346
    %633 = vmatprep.subr.bf16.mxu0 0
    %634 = vmatpush2.bf16.msra.mxu0 0
    %635 = vmatprep.subr.bf16.mxu0 0
    %636 = vmatpush2.bf16.msra.mxu0 0
    %637 = vmatprep.subr.bf16.mxu0 0
    %638 = vmatpush2.bf16.msra.mxu0 0
    %639 = vmatprep.subr.bf16.mxu0 0
    %640 = vmatpush2.bf16.msra.mxu0 0
    %641 = vmatprep.subr.bf16.mxu0 0
    %642 = vmatpush2.bf16.msra.mxu0 0
    %643 = vmatprep.subr.bf16.mxu0 0
    %644 = vmatpush2.bf16.msra.mxu0 0
    %645 = vmatprep.subr.bf16.mxu0 0
    %646 = vmatpush2.bf16.msra.mxu0 0
    %647 = vmatprep.subr.bf16.mxu0 0
    %648 = vmatpush2.bf16.msra.mxu0 0
    %649 = vmatprep.mubr.bf16.mxu0 0
    %650 = vmatmul.mubr.bf16.gmra.mxu0 %v615
    %v651 = vpop.f32.mrf.mxu0
    %v652 = vadd.f32 0.0, %v651
    %v653 = vpop.f32.mrf.mxu0
    %v654 = vadd.f32 0.0, %v653
    %v655 = vpop.f32.mrf.mxu0
    %v656 = vpop.f32.mrf.mxu0
    %657 = vdwg.mxu0
    %658 = vmatprep.subr.bf16.mxu0 0
    %659 = vmatpush1.bf16.msra.mxu0 %v369
    %660 = vmatprep.subr.bf16.mxu0 0
    %661 = vmatpush1.bf16.msra.mxu0 %v366
    %662 = vmatprep.subr.bf16.mxu0 0
    %663 = vmatpush1.bf16.msra.mxu0 %v363
    %664 = vmatprep.subr.bf16.mxu0 0
    %665 = vmatpush1.bf16.msra.mxu0 %v360
    %666 = vmatprep.subr.bf16.mxu0 0
    %667 = vmatpush1.bf16.msra.mxu0 %v357
    %668 = vmatprep.subr.bf16.mxu0 0
    %669 = vmatpush1.bf16.msra.mxu0 %v354
    %670 = vmatprep.subr.bf16.mxu0 0
    %671 = vmatpush1.bf16.msra.mxu0 %v351
    %672 = vmatprep.subr.bf16.mxu0 0
    %673 = vmatpush1.bf16.msra.mxu0 %v348
    %674 = vmatprep.subr.bf16.mxu0 0
    %675 = vmatpush2.bf16.msra.mxu0 0
    %676 = vmatprep.subr.bf16.mxu0 0
    %677 = vmatpush2.bf16.msra.mxu0 0
    %678 = vmatprep.subr.bf16.mxu0 0
    %679 = vmatpush2.bf16.msra.mxu0 0
    %680 = vmatprep.subr.bf16.mxu0 0
    %681 = vmatpush2.bf16.msra.mxu0 0
    %682 = vmatprep.subr.bf16.mxu0 0
    %683 = vmatpush2.bf16.msra.mxu0 0
    %684 = vmatprep.subr.bf16.mxu0 0
    %685 = vmatpush2.bf16.msra.mxu0 0
    %686 = vmatprep.subr.bf16.mxu0 0
    %687 = vmatpush2.bf16.msra.mxu0 0
    %688 = vmatprep.subr.bf16.mxu0 0
    %689 = vmatpush2.bf16.msra.mxu0 0
    %690 = vmatprep.mubr.bf16.mxu0 0
    %691 = vmatmul.mubr.bf16.gmra.mxu0 %v615
    %v692 = vpop.f32.mrf.mxu0
    %v693 = vadd.f32 0.0, %v692
    %v694 = vpop.f32.mrf.mxu0
    %v695 = vpop.f32.mrf.mxu0
    %v696 = vpop.f32.mrf.mxu0
    %697 = vdwg.mxu0
    %v700 = vrot.slane %v652, 4
    %v701 = vrot.slane %v654, 4
    %v704 = vadd.f32 %v178, %v700
    %v705 = vadd.f32 %v180, %v701
    %v706 = vxor.u32 %v704, 2147483648
    %v707 = vxor.u32 %v705, 2147483648
    %v708 = vmul.f32 %v706, 1.442695
    %v709 = vpow.pop %v708
    %v710 = vmul.f32 %v707, 1.442695
    %v711 = vpow.pop %v710
    %v712 = vadd.f32 %v709, 1.0
    %v713 = vadd.f32 %v711, 1.0
    %v714 = vrcp.pop %v712
    %v715 = vmul.f32 1.0, %v714
    %v716 = vrcp.pop %v713
    %v717 = vmul.f32 1.0, %v716
    %v718 = vadd.f32 %v693, %v232
    %v720 = vrot.slane %v718, 4
    %v722 = vmul.f32 %v715, %v720
    %v723 = vadd.f32 %v221, %v722
    %v724 = vtanh.pop %v723
    %v725 = vsub.f32 1.0, %v717
    %v726 = vmul.f32 %v725, %v724
    %v728 = vrot.slane %v612, 6
    %v730 = vmul.f32 %v717, %v728
    %v731 = vadd.f32 %v726, %v730
    %v732 = vpack.c.bf16 %v731, %v731
    %v734 = vrot.slane %v732, 2
    %736 = vmatprep.subr.bf16.mxu0 %v368
    %737 = vmatpush1.bf16.msra.mxu0 %v367
    %738 = vmatprep.subr.bf16.mxu0 %v365
    %739 = vmatpush1.bf16.msra.mxu0 %v364
    %740 = vmatprep.subr.bf16.mxu0 %v362
    %741 = vmatpush1.bf16.msra.mxu0 %v361
    %742 = vmatprep.subr.bf16.mxu0 %v359
    %743 = vmatpush1.bf16.msra.mxu0 %v358
    %744 = vmatprep.subr.bf16.mxu0 %v356
    %745 = vmatpush1.bf16.msra.mxu0 %v355
    %746 = vmatprep.subr.bf16.mxu0 %v353
    %747 = vmatpush1.bf16.msra.mxu0 %v352
    %748 = vmatprep.subr.bf16.mxu0 %v350
    %749 = vmatpush1.bf16.msra.mxu0 %v349
    %750 = vmatprep.subr.bf16.mxu0 %v347
    %751 = vmatpush1.bf16.msra.mxu0 %v346
    %752 = vmatprep.subr.bf16.mxu0 0
    %753 = vmatpush2.bf16.msra.mxu0 0
    %754 = vmatprep.subr.bf16.mxu0 0
    %755 = vmatpush2.bf16.msra.mxu0 0
    %756 = vmatprep.subr.bf16.mxu0 0
    %757 = vmatpush2.bf16.msra.mxu0 0
    %758 = vmatprep.subr.bf16.mxu0 0
    %759 = vmatpush2.bf16.msra.mxu0 0
    %760 = vmatprep.subr.bf16.mxu0 0
    %761 = vmatpush2.bf16.msra.mxu0 0
    %762 = vmatprep.subr.bf16.mxu0 0
    %763 = vmatpush2.bf16.msra.mxu0 0
    %764 = vmatprep.subr.bf16.mxu0 0
    %765 = vmatpush2.bf16.msra.mxu0 0
    %766 = vmatprep.subr.bf16.mxu0 0
    %767 = vmatpush2.bf16.msra.mxu0 0
    %768 = vmatprep.mubr.bf16.mxu0 0
    %769 = vmatmul.mubr.bf16.gmra.mxu0 %v734
    %v770 = vpop.f32.mrf.mxu0
    %v771 = vadd.f32 0.0, %v770
    %v772 = vpop.f32.mrf.mxu0
    %v773 = vadd.f32 0.0, %v772
    %v774 = vpop.f32.mrf.mxu0
    %v775 = vpop.f32.mrf.mxu0
    %776 = vdwg.mxu0
    %777 = vmatprep.subr.bf16.mxu0 0
    %778 = vmatpush1.bf16.msra.mxu0 %v369
    %779 = vmatprep.subr.bf16.mxu0 0
    %780 = vmatpush1.bf16.msra.mxu0 %v366
    %781 = vmatprep.subr.bf16.mxu0 0
    %782 = vmatpush1.bf16.msra.mxu0 %v363
    %783 = vmatprep.subr.bf16.mxu0 0
    %784 = vmatpush1.bf16.msra.mxu0 %v360
    %785 = vmatprep.subr.bf16.mxu0 0
    %786 = vmatpush1.bf16.msra.mxu0 %v357
    %787 = vmatprep.subr.bf16.mxu0 0
    %788 = vmatpush1.bf16.msra.mxu0 %v354
    %789 = vmatprep.subr.bf16.mxu0 0
    %790 = vmatpush1.bf16.msra.mxu0 %v351
    %791 = vmatprep.subr.bf16.mxu0 0
    %792 = vmatpush1.bf16.msra.mxu0 %v348
    %793 = vmatprep.subr.bf16.mxu0 0
    %794 = vmatpush2.bf16.msra.mxu0 0
    %795 = vmatprep.subr.bf16.mxu0 0
    %796 = vmatpush2.bf16.msra.mxu0 0
    %797 = vmatprep.subr.bf16.mxu0 0
    %798 = vmatpush2.bf16.msra.mxu0 0
    %799 = vmatprep.subr.bf16.mxu0 0
    %800 = vmatpush2.bf16.msra.mxu0 0
    %801 = vmatprep.subr.bf16.mxu0 0
    %802 = vmatpush2.bf16.msra.mxu0 0
    %803 = vmatprep.subr.bf16.mxu0 0
    %804 = vmatpush2.bf16.msra.mxu0 0
    %805 = vmatprep.subr.bf16.mxu0 0
    %806 = vmatpush2.bf16.msra.mxu0 0
    %807 = vmatprep.subr.bf16.mxu0 0
    %808 = vmatpush2.bf16.msra.mxu0 0
    %809 = vmatprep.mubr.bf16.mxu0 0
    %810 = vmatmul.mubr.bf16.gmra.mxu0 %v734
    %v811 = vpop.f32.mrf.mxu0
    %v812 = vadd.f32 0.0, %v811
    %v813 = vpop.f32.mrf.mxu0
    %v814 = vpop.f32.mrf.mxu0
    %v815 = vpop.f32.mrf.mxu0
    %816 = vdwg.mxu0
    %v819 = vrot.slane %v771, 2
    %v820 = vrot.slane %v773, 2
    %v823 = vadd.f32 %v178, %v819
    %v824 = vadd.f32 %v180, %v820
    %v825 = vxor.u32 %v823, 2147483648
    %v826 = vxor.u32 %v824, 2147483648
    %v827 = vmul.f32 %v825, 1.442695
    %v828 = vpow.pop %v827
    %v829 = vmul.f32 %v826, 1.442695
    %v830 = vpow.pop %v829
    %v831 = vadd.f32 %v828, 1.0
    %v832 = vadd.f32 %v830, 1.0
    %v833 = vrcp.pop %v831
    %v834 = vmul.f32 1.0, %v833
    %v835 = vrcp.pop %v832
    %v836 = vmul.f32 1.0, %v835
    %v837 = vadd.f32 %v812, %v232
    %v839 = vrot.slane %v837, 2
    %v841 = vmul.f32 %v834, %v839
    %v842 = vadd.f32 %v221, %v841
    %v843 = vtanh.pop %v842
    %v844 = vsub.f32 1.0, %v836
    %v845 = vmul.f32 %v844, %v843
    %v847 = vrot.slane %v731, 6
    %v849 = vmul.f32 %v836, %v847
    %v850 = vadd.f32 %v845, %v849
    %v851 = vpack.c.bf16 %v850, %v850
    %v853 = vrot.slane %v851, 3
    %855 = vmatprep.subr.bf16.mxu0 %v368
    %856 = vmatpush1.bf16.msra.mxu0 %v367
    %857 = vmatprep.subr.bf16.mxu0 %v365
    %858 = vmatpush1.bf16.msra.mxu0 %v364
    %859 = vmatprep.subr.bf16.mxu0 %v362
    %860 = vmatpush1.bf16.msra.mxu0 %v361
    %861 = vmatprep.subr.bf16.mxu0 %v359
    %862 = vmatpush1.bf16.msra.mxu0 %v358
    %863 = vmatprep.subr.bf16.mxu0 %v356
    %864 = vmatpush1.bf16.msra.mxu0 %v355
    %865 = vmatprep.subr.bf16.mxu0 %v353
    %866 = vmatpush1.bf16.msra.mxu0 %v352
    %867 = vmatprep.subr.bf16.mxu0 %v350
    %868 = vmatpush1.bf16.msra.mxu0 %v349
    %869 = vmatprep.subr.bf16.mxu0 %v347
    %870 = vmatpush1.bf16.msra.mxu0 %v346
    %871 = vmatprep.subr.bf16.mxu0 0
    %872 = vmatpush2.bf16.msra.mxu0 0
    %873 = vmatprep.subr.bf16.mxu0 0
    %874 = vmatpush2.bf16.msra.mxu0 0
    %875 = vmatprep.subr.bf16.mxu0 0
    %876 = vmatpush2.bf16.msra.mxu0 0
    %877 = vmatprep.subr.bf16.mxu0 0
    %878 = vmatpush2.bf16.msra.mxu0 0
    %879 = vmatprep.subr.bf16.mxu0 0
    %880 = vmatpush2.bf16.msra.mxu0 0
    %881 = vmatprep.subr.bf16.mxu0 0
    %882 = vmatpush2.bf16.msra.mxu0 0
    %883 = vmatprep.subr.bf16.mxu0 0
    %884 = vmatpush2.bf16.msra.mxu0 0
    %885 = vmatprep.subr.bf16.mxu0 0
    %886 = vmatpush2.bf16.msra.mxu0 0
    %887 = vmatprep.mubr.bf16.mxu0 0
    %888 = vmatmul.mubr.bf16.gmra.mxu0 %v853
    %v889 = vpop.f32.mrf.mxu0
    %v890 = vadd.f32 0.0, %v889
    %v891 = vpop.f32.mrf.mxu0
    %v892 = vadd.f32 0.0, %v891
    %v893 = vpop.f32.mrf.mxu0
    %v894 = vpop.f32.mrf.mxu0
    %895 = vdwg.mxu0
    %896 = vmatprep.subr.bf16.mxu0 0
    %897 = vmatpush1.bf16.msra.mxu0 %v369
    %898 = vmatprep.subr.bf16.mxu0 0
    %899 = vmatpush1.bf16.msra.mxu0 %v366
    %900 = vmatprep.subr.bf16.mxu0 0
    %901 = vmatpush1.bf16.msra.mxu0 %v363
    %902 = vmatprep.subr.bf16.mxu0 0
    %903 = vmatpush1.bf16.msra.mxu0 %v360
    %904 = vmatprep.subr.bf16.mxu0 0
    %905 = vmatpush1.bf16.msra.mxu0 %v357
    %906 = vmatprep.subr.bf16.mxu0 0
    %907 = vmatpush1.bf16.msra.mxu0 %v354
    %908 = vmatprep.subr.bf16.mxu0 0
    %909 = vmatpush1.bf16.msra.mxu0 %v351
    %910 = vmatprep.subr.bf16.mxu0 0
    %911 = vmatpush1.bf16.msra.mxu0 %v348
    %912 = vmatprep.subr.bf16.mxu0 0
    %913 = vmatpush2.bf16.msra.mxu0 0
    %914 = vmatprep.subr.bf16.mxu0 0
    %915 = vmatpush2.bf16.msra.mxu0 0
    %916 = vmatprep.subr.bf16.mxu0 0
    %917 = vmatpush2.bf16.msra.mxu0 0
    %918 = vmatprep.subr.bf16.mxu0 0
    %919 = vmatpush2.bf16.msra.mxu0 0
    %920 = vmatprep.subr.bf16.mxu0 0
    %921 = vmatpush2.bf16.msra.mxu0 0
    %922 = vmatprep.subr.bf16.mxu0 0
    %923 = vmatpush2.bf16.msra.mxu0 0
    %924 = vmatprep.subr.bf16.mxu0 0
    %925 = vmatpush2.bf16.msra.mxu0 0
    %926 = vmatprep.subr.bf16.mxu0 0
    %927 = vmatpush2.bf16.msra.mxu0 0
    %928 = vmatprep.mubr.bf16.mxu0 0
    %929 = vmatmul.mubr.bf16.gmra.mxu0 %v853
    %v930 = vpop.f32.mrf.mxu0
    %v931 = vadd.f32 0.0, %v930
    %v932 = vpop.f32.mrf.mxu0
    %v933 = vpop.f32.mrf.mxu0
    %v934 = vpop.f32.mrf.mxu0
    %935 = vdwg.mxu0
    %v936 = vadd.f32 %v182, %v890
    %v937 = vadd.f32 %v184, %v892
    %v938 = vxor.u32 %v936, 2147483648
    %v939 = vxor.u32 %v937, 2147483648
    %v940 = vmul.f32 %v938, 1.442695
    %v941 = vpow.pop %v940
    %v942 = vmul.f32 %v939, 1.442695
    %v943 = vpow.pop %v942
    %v944 = vadd.f32 %v941, 1.0
    %v945 = vadd.f32 %v943, 1.0
    %v946 = vrcp.pop %v944
    %v947 = vmul.f32 1.0, %v946
    %v948 = vrcp.pop %v945
    %v949 = vmul.f32 1.0, %v948
    %v950 = vadd.f32 %v931, %v232
    %v951 = vmul.f32 %v947, %v950
    %v952 = vadd.f32 %v224, %v951
    %v953 = vtanh.pop %v952
    %v954 = vsub.f32 1.0, %v949
    %v955 = vmul.f32 %v954, %v953
    %v957 = vrot.slane %v850, 6
    %v959 = vmul.f32 %v949, %v957
    %v960 = vadd.f32 %v955, %v959
    %v961 = vpack.c.bf16 %v960, %v960
    %962 = vmatprep.subr.bf16.mxu0 %v368
    %963 = vmatpush1.bf16.msra.mxu0 %v367
    %964 = vmatprep.subr.bf16.mxu0 %v365
    %965 = vmatpush1.bf16.msra.mxu0 %v364
    %966 = vmatprep.subr.bf16.mxu0 %v362
    %967 = vmatpush1.bf16.msra.mxu0 %v361
    %968 = vmatprep.subr.bf16.mxu0 %v359
    %969 = vmatpush1.bf16.msra.mxu0 %v358
    %970 = vmatprep.subr.bf16.mxu0 %v356
    %971 = vmatpush1.bf16.msra.mxu0 %v355
    %972 = vmatprep.subr.bf16.mxu0 %v353
    %973 = vmatpush1.bf16.msra.mxu0 %v352
    %974 = vmatprep.subr.bf16.mxu0 %v350
    %975 = vmatpush1.bf16.msra.mxu0 %v349
    %976 = vmatprep.subr.bf16.mxu0 %v347
    %977 = vmatpush1.bf16.msra.mxu0 %v346
    %978 = vmatprep.subr.bf16.mxu0 0
    %979 = vmatpush2.bf16.msra.mxu0 0
    %980 = vmatprep.subr.bf16.mxu0 0
    %981 = vmatpush2.bf16.msra.mxu0 0
    %982 = vmatprep.subr.bf16.mxu0 0
    %983 = vmatpush2.bf16.msra.mxu0 0
    %984 = vmatprep.subr.bf16.mxu0 0
    %985 = vmatpush2.bf16.msra.mxu0 0
    %986 = vmatprep.subr.bf16.mxu0 0
    %987 = vmatpush2.bf16.msra.mxu0 0
    %988 = vmatprep.subr.bf16.mxu0 0
    %989 = vmatpush2.bf16.msra.mxu0 0
    %990 = vmatprep.subr.bf16.mxu0 0
    %991 = vmatpush2.bf16.msra.mxu0 0
    %992 = vmatprep.subr.bf16.mxu0 0
    %993 = vmatpush2.bf16.msra.mxu0 0
    %994 = vmatprep.mubr.bf16.mxu0 0
    %995 = vmatmul.mubr.bf16.gmra.mxu0 %v961
    %v996 = vpop.f32.mrf.mxu0
    %v997 = vadd.f32 0.0, %v996
    %v998 = vpop.f32.mrf.mxu0
    %v999 = vadd.f32 0.0, %v998
    %v1000 = vpop.f32.mrf.mxu0
    %v1001 = vpop.f32.mrf.mxu0
    %1002 = vdwg.mxu0
    %1003 = vmatprep.subr.bf16.mxu0 0
    %1004 = vmatpush1.bf16.msra.mxu0 %v369
    %1005 = vmatprep.subr.bf16.mxu0 0
    %1006 = vmatpush1.bf16.msra.mxu0 %v366
    %1007 = vmatprep.subr.bf16.mxu0 0
    %1008 = vmatpush1.bf16.msra.mxu0 %v363
    %1009 = vmatprep.subr.bf16.mxu0 0
    %1010 = vmatpush1.bf16.msra.mxu0 %v360
    %1011 = vmatprep.subr.bf16.mxu0 0
    %1012 = vmatpush1.bf16.msra.mxu0 %v357
    %1013 = vmatprep.subr.bf16.mxu0 0
    %1014 = vmatpush1.bf16.msra.mxu0 %v354
    %1015 = vmatprep.subr.bf16.mxu0 0
    %1016 = vmatpush1.bf16.msra.mxu0 %v351
    %1017 = vmatprep.subr.bf16.mxu0 0
    %1018 = vmatpush1.bf16.msra.mxu0 %v348
    %1019 = vmatprep.subr.bf16.mxu0 0
    %1020 = vmatpush2.bf16.msra.mxu0 0
    %1021 = vmatprep.subr.bf16.mxu0 0
    %1022 = vmatpush2.bf16.msra.mxu0 0
    %1023 = vmatprep.subr.bf16.mxu0 0
    %1024 = vmatpush2.bf16.msra.mxu0 0
    %1025 = vmatprep.subr.bf16.mxu0 0
    %1026 = vmatpush2.bf16.msra.mxu0 0
    %1027 = vmatprep.subr.bf16.mxu0 0
    %1028 = vmatpush2.bf16.msra.mxu0 0
    %1029 = vmatprep.subr.bf16.mxu0 0
    %1030 = vmatpush2.bf16.msra.mxu0 0
    %1031 = vmatprep.subr.bf16.mxu0 0
    %1032 = vmatpush2.bf16.msra.mxu0 0
    %1033 = vmatprep.subr.bf16.mxu0 0
    %1034 = vmatpush2.bf16.msra.mxu0 0
    %1035 = vmatprep.mubr.bf16.mxu0 0
    %1036 = vmatmul.mubr.bf16.gmra.mxu0 %v961
    %v1037 = vpop.f32.mrf.mxu0
    %v1038 = vadd.f32 0.0, %v1037
    %v1039 = vpop.f32.mrf.mxu0
    %v1040 = vpop.f32.mrf.mxu0
    %v1041 = vpop.f32.mrf.mxu0
    %1042 = vdwg.mxu0
    %v1045 = vrot.slane %v997, 6
    %v1046 = vrot.slane %v999, 6
    %v1049 = vadd.f32 %v182, %v1045
    %v1050 = vadd.f32 %v184, %v1046
    %v1051 = vxor.u32 %v1049, 2147483648
    %v1052 = vxor.u32 %v1050, 2147483648
    %v1053 = vmul.f32 %v1051, 1.442695
    %v1054 = vpow.pop %v1053
    %v1055 = vmul.f32 %v1052, 1.442695
    %v1056 = vpow.pop %v1055
    %v1057 = vadd.f32 %v1054, 1.0
    %v1058 = vadd.f32 %v1056, 1.0
    %v1059 = vrcp.pop %v1057
    %v1060 = vmul.f32 1.0, %v1059
    %v1061 = vrcp.pop %v1058
    %v1062 = vmul.f32 1.0, %v1061
    %v1063 = vadd.f32 %v1038, %v232
    %v1065 = vrot.slane %v1063, 6
    %v1067 = vmul.f32 %v1060, %v1065
    %v1068 = vadd.f32 %v224, %v1067
    %v1069 = vtanh.pop %v1068
    %v1070 = vsub.f32 1.0, %v1062
    %v1071 = vmul.f32 %v1070, %v1069
    %v1073 = vrot.slane %v960, 6
    %v1075 = vmul.f32 %v1062, %v1073
    %v1076 = vadd.f32 %v1071, %v1075
    %v1077 = vpack.c.bf16 %v1076, %v1076
    %v1079 = vrot.slane %v1077, 1
    %1081 = vmatprep.subr.bf16.mxu0 %v368
    %1082 = vmatpush1.bf16.msra.mxu0 %v367
    %1083 = vmatprep.subr.bf16.mxu0 %v365
    %1084 = vmatpush1.bf16.msra.mxu0 %v364
    %1085 = vmatprep.subr.bf16.mxu0 %v362
    %1086 = vmatpush1.bf16.msra.mxu0 %v361
    %1087 = vmatprep.subr.bf16.mxu0 %v359
    %1088 = vmatpush1.bf16.msra.mxu0 %v358
    %1089 = vmatprep.subr.bf16.mxu0 %v356
    %1090 = vmatpush1.bf16.msra.mxu0 %v355
    %1091 = vmatprep.subr.bf16.mxu0 %v353
    %1092 = vmatpush1.bf16.msra.mxu0 %v352
    %1093 = vmatprep.subr.bf16.mxu0 %v350
    %1094 = vmatpush1.bf16.msra.mxu0 %v349
    %1095 = vmatprep.subr.bf16.mxu0 %v347
    %1096 = vmatpush1.bf16.msra.mxu0 %v346
    %1097 = vmatprep.subr.bf16.mxu0 0
    %1098 = vmatpush2.bf16.msra.mxu0 0
    %1099 = vmatprep.subr.bf16.mxu0 0
    %1100 = vmatpush2.bf16.msra.mxu0 0
    %1101 = vmatprep.subr.bf16.mxu0 0
    %1102 = vmatpush2.bf16.msra.mxu0 0
    %1103 = vmatprep.subr.bf16.mxu0 0
    %1104 = vmatpush2.bf16.msra.mxu0 0
    %1105 = vmatprep.subr.bf16.mxu0 0
    %1106 = vmatpush2.bf16.msra.mxu0 0
    %1107 = vmatprep.subr.bf16.mxu0 0
    %1108 = vmatpush2.bf16.msra.mxu0 0
    %1109 = vmatprep.subr.bf16.mxu0 0
    %1110 = vmatpush2.bf16.msra.mxu0 0
    %1111 = vmatprep.subr.bf16.mxu0 0
    %1112 = vmatpush2.bf16.msra.mxu0 0
    %1113 = vmatprep.mubr.bf16.mxu0 0
    %1114 = vmatmul.mubr.bf16.gmra.mxu0 %v1079
    %v1115 = vpop.f32.mrf.mxu0
    %v1116 = vadd.f32 0.0, %v1115
    %v1117 = vpop.f32.mrf.mxu0
    %v1118 = vadd.f32 0.0, %v1117
    %v1119 = vpop.f32.mrf.mxu0
    %v1120 = vpop.f32.mrf.mxu0
    %1121 = vdwg.mxu0
    %1122 = vmatprep.subr.bf16.mxu0 0
    %1123 = vmatpush1.bf16.msra.mxu0 %v369
    %1124 = vmatprep.subr.bf16.mxu0 0
    %1125 = vmatpush1.bf16.msra.mxu0 %v366
    %1126 = vmatprep.subr.bf16.mxu0 0
    %1127 = vmatpush1.bf16.msra.mxu0 %v363
    %1128 = vmatprep.subr.bf16.mxu0 0
    %1129 = vmatpush1.bf16.msra.mxu0 %v360
    %1130 = vmatprep.subr.bf16.mxu0 0
    %1131 = vmatpush1.bf16.msra.mxu0 %v357
    %1132 = vmatprep.subr.bf16.mxu0 0
    %1133 = vmatpush1.bf16.msra.mxu0 %v354
    %1134 = vmatprep.subr.bf16.mxu0 0
    %1135 = vmatpush1.bf16.msra.mxu0 %v351
    %1136 = vmatprep.subr.bf16.mxu0 0
    %1137 = vmatpush1.bf16.msra.mxu0 %v348
    %1138 = vmatprep.subr.bf16.mxu0 0
    %1139 = vmatpush2.bf16.msra.mxu0 0
    %1140 = vmatprep.subr.bf16.mxu0 0
    %1141 = vmatpush2.bf16.msra.mxu0 0
    %1142 = vmatprep.subr.bf16.mxu0 0
    %1143 = vmatpush2.bf16.msra.mxu0 0
    %1144 = vmatprep.subr.bf16.mxu0 0
    %1145 = vmatpush2.bf16.msra.mxu0 0
    %1146 = vmatprep.subr.bf16.mxu0 0
    %1147 = vmatpush2.bf16.msra.mxu0 0
    %1148 = vmatprep.subr.bf16.mxu0 0
    %1149 = vmatpush2.bf16.msra.mxu0 0
    %1150 = vmatprep.subr.bf16.mxu0 0
    %1151 = vmatpush2.bf16.msra.mxu0 0
    %1152 = vmatprep.subr.bf16.mxu0 0
    %1153 = vmatpush2.bf16.msra.mxu0 0
    %1154 = vmatprep.mubr.bf16.mxu0 0
    %1155 = vmatmul.mubr.bf16.gmra.mxu0 %v1079
    %v1156 = vpop.f32.mrf.mxu0
    %v1157 = vadd.f32 0.0, %v1156
    %v1158 = vpop.f32.mrf.mxu0
    %v1159 = vpop.f32.mrf.mxu0
    %v1160 = vpop.f32.mrf.mxu0
    %1161 = vdwg.mxu0
    %v1164 = vrot.slane %v1116, 4
    %v1165 = vrot.slane %v1118, 4
    %v1168 = vadd.f32 %v182, %v1164
    %v1169 = vadd.f32 %v184, %v1165
    %v1170 = vxor.u32 %v1168, 2147483648
    %v1171 = vxor.u32 %v1169, 2147483648
    %v1172 = vmul.f32 %v1170, 1.442695
    %v1173 = vpow.pop %v1172
    %v1174 = vmul.f32 %v1171, 1.442695
    %v1175 = vpow.pop %v1174
    %v1176 = vadd.f32 %v1173, 1.0
    %v1177 = vadd.f32 %v1175, 1.0
    %v1178 = vrcp.pop %v1176
    %v1179 = vmul.f32 1.0, %v1178
    %v1180 = vrcp.pop %v1177
    %v1181 = vmul.f32 1.0, %v1180
    %v1182 = vadd.f32 %v1157, %v232
    %v1184 = vrot.slane %v1182, 4
    %v1186 = vmul.f32 %v1179, %v1184
    %v1187 = vadd.f32 %v224, %v1186
    %v1188 = vtanh.pop %v1187
    %v1189 = vsub.f32 1.0, %v1181
    %v1190 = vmul.f32 %v1189, %v1188
    %v1192 = vrot.slane %v1076, 6
    %v1194 = vmul.f32 %v1181, %v1192
    %v1195 = vadd.f32 %v1190, %v1194
    %v1196 = vpack.c.bf16 %v1195, %v1195
    %v1198 = vrot.slane %v1196, 2
    %1200 = vmatprep.subr.bf16.mxu0 %v368
    %1201 = vmatpush1.bf16.msra.mxu0 %v367
    %1202 = vmatprep.subr.bf16.mxu0 %v365
    %1203 = vmatpush1.bf16.msra.mxu0 %v364
    %1204 = vmatprep.subr.bf16.mxu0 %v362
    %1205 = vmatpush1.bf16.msra.mxu0 %v361
    %1206 = vmatprep.subr.bf16.mxu0 %v359
    %1207 = vmatpush1.bf16.msra.mxu0 %v358
    %1208 = vmatprep.subr.bf16.mxu0 %v356
    %1209 = vmatpush1.bf16.msra.mxu0 %v355
    %1210 = vmatprep.subr.bf16.mxu0 %v353
    %1211 = vmatpush1.bf16.msra.mxu0 %v352
    %1212 = vmatprep.subr.bf16.mxu0 %v350
    %1213 = vmatpush1.bf16.msra.mxu0 %v349
    %1214 = vmatprep.subr.bf16.mxu0 %v347
    %1215 = vmatpush1.bf16.msra.mxu0 %v346
    %1216 = vmatprep.subr.bf16.mxu0 0
    %1217 = vmatpush2.bf16.msra.mxu0 0
    %1218 = vmatprep.subr.bf16.mxu0 0
    %1219 = vmatpush2.bf16.msra.mxu0 0
    %1220 = vmatprep.subr.bf16.mxu0 0
    %1221 = vmatpush2.bf16.msra.mxu0 0
    %1222 = vmatprep.subr.bf16.mxu0 0
    %1223 = vmatpush2.bf16.msra.mxu0 0
    %1224 = vmatprep.subr.bf16.mxu0 0
    %1225 = vmatpush2.bf16.msra.mxu0 0
    %1226 = vmatprep.subr.bf16.mxu0 0
    %1227 = vmatpush2.bf16.msra.mxu0 0
    %1228 = vmatprep.subr.bf16.mxu0 0
    %1229 = vmatpush2.bf16.msra.mxu0 0
    %1230 = vmatprep.subr.bf16.mxu0 0
    %1231 = vmatpush2.bf16.msra.mxu0 0
    %1232 = vmatprep.mubr.bf16.mxu0 0
    %1233 = vmatmul.mubr.bf16.gmra.mxu0 %v1198
    %v1234 = vpop.f32.mrf.mxu0
    %v1235 = vadd.f32 0.0, %v1234
    %v1236 = vpop.f32.mrf.mxu0
    %v1237 = vadd.f32 0.0, %v1236
    %v1238 = vpop.f32.mrf.mxu0
    %v1239 = vpop.f32.mrf.mxu0
    %1240 = vdwg.mxu0
    %1241 = vmatprep.subr.bf16.mxu0 0
    %1242 = vmatpush1.bf16.msra.mxu0 %v369
    %1243 = vmatprep.subr.bf16.mxu0 0
    %1244 = vmatpush1.bf16.msra.mxu0 %v366
    %1245 = vmatprep.subr.bf16.mxu0 0
    %1246 = vmatpush1.bf16.msra.mxu0 %v363
    %1247 = vmatprep.subr.bf16.mxu0 0
    %1248 = vmatpush1.bf16.msra.mxu0 %v360
    %1249 = vmatprep.subr.bf16.mxu0 0
    %1250 = vmatpush1.bf16.msra.mxu0 %v357
    %1251 = vmatprep.subr.bf16.mxu0 0
    %1252 = vmatpush1.bf16.msra.mxu0 %v354
    %1253 = vmatprep.subr.bf16.mxu0 0
    %1254 = vmatpush1.bf16.msra.mxu0 %v351
    %1255 = vmatprep.subr.bf16.mxu0 0
    %1256 = vmatpush1.bf16.msra.mxu0 %v348
    %1257 = vmatprep.subr.bf16.mxu0 0
    %1258 = vmatpush2.bf16.msra.mxu0 0
    %1259 = vmatprep.subr.bf16.mxu0 0
    %1260 = vmatpush2.bf16.msra.mxu0 0
    %1261 = vmatprep.subr.bf16.mxu0 0
    %1262 = vmatpush2.bf16.msra.mxu0 0
    %1263 = vmatprep.subr.bf16.mxu0 0
    %1264 = vmatpush2.bf16.msra.mxu0 0
    %1265 = vmatprep.subr.bf16.mxu0 0
    %1266 = vmatpush2.bf16.msra.mxu0 0
    %1267 = vmatprep.subr.bf16.mxu0 0
    %1268 = vmatpush2.bf16.msra.mxu0 0
    %1269 = vmatprep.subr.bf16.mxu0 0
    %1270 = vmatpush2.bf16.msra.mxu0 0
    %1271 = vmatprep.subr.bf16.mxu0 0
    %1272 = vmatpush2.bf16.msra.mxu0 0
    %1273 = vmatprep.mubr.bf16.mxu0 0
    %1274 = vmatmul.mubr.bf16.gmra.mxu0 %v1198
    %v1275 = vpop.f32.mrf.mxu0
    %v1276 = vadd.f32 0.0, %v1275
    %v1277 = vpop.f32.mrf.mxu0
    %v1278 = vpop.f32.mrf.mxu0
    %v1279 = vpop.f32.mrf.mxu0
    %1280 = vdwg.mxu0
    %v1283 = vrot.slane %v1235, 2
    %v1284 = vrot.slane %v1237, 2
    %v1287 = vadd.f32 %v182, %v1283
    %v1288 = vadd.f32 %v184, %v1284
    %v1289 = vxor.u32 %v1287, 2147483648
    %v1290 = vxor.u32 %v1288, 2147483648
    %v1291 = vmul.f32 %v1289, 1.442695
    %v1292 = vpow.pop %v1291
    %v1293 = vmul.f32 %v1290, 1.442695
    %v1294 = vpow.pop %v1293
    %v1295 = vadd.f32 %v1292, 1.0
    %v1296 = vadd.f32 %v1294, 1.0
    %v1297 = vrcp.pop %v1295
    %v1298 = vmul.f32 1.0, %v1297
    %v1299 = vrcp.pop %v1296
    %v1300 = vmul.f32 1.0, %v1299
    %v1301 = vadd.f32 %v1276, %v232
    %v1303 = vrot.slane %v1301, 2
    %v1305 = vmul.f32 %v1298, %v1303
    %v1306 = vadd.f32 %v224, %v1305
    %v1307 = vtanh.pop %v1306
    %v1308 = vsub.f32 1.0, %v1300
    %v1309 = vmul.f32 %v1308, %v1307
    %v1311 = vrot.slane %v1195, 6
    %v1313 = vmul.f32 %v1300, %v1311
    %v1314 = vadd.f32 %v1309, %v1313
    %v1315 = vpack.c.bf16 %v1314, %v1314
    %v1317 = vrot.slane %v961, 4
    %v1318 = vrot.slane %v1077, 4
    %v1319 = vrot.slane %v1196, 4
    %v1321 = vrot.slane %v1315, 4
    %vm1322 = vcmask 1040384
    %v1325 = vsel %vm1322, %v497, %v613
    %v1327 = vsel %vm133, %v1325, %v732
    %vm1328 = vcmask 1042432
    %v1330 = vsel %vm1328, %v1327, %v851
    %vm1331 = vcmask 1043456
    %v1333 = vsel %vm1331, %v1330, %v1317
    %vm1334 = vcmask 1044480
    %v1336 = vsel %vm1334, %v1333, %v1318
    %vm1337 = vcmask 1045504
    %v1339 = vsel %vm1337, %v1336, %v1319
    %vm1340 = vcmask 1046528
    %v1342 = vsel %vm1340, %v1339, %v1321
    %v1344 = vld [vmem:[#allocation5] sm:$0xff]
    %v1345 = vld [vmem:[#allocation5 + $0x8] sm:$0xf]
    %v1346 = vld [vmem:[#allocation5 + $0xc] sm:$0xff]
    %v1347 = vld [vmem:[#allocation5 + $0x14] sm:$0xf]
    %v1348 = vld [vmem:[#allocation5 + $0x18] sm:$0xff]
    %v1349 = vld [vmem:[#allocation5 + $0x20] sm:$0xf]
    %v1350 = vld [vmem:[#allocation5 + $0x24] sm:$0xff]
    %v1351 = vld [vmem:[#allocation5 + $0x2c] sm:$0xf]
    %v1352 = vld [vmem:[#allocation5 + $0x30] sm:$0xff]
    %v1353 = vld [vmem:[#allocation5 + $0x38] sm:$0xf]
    %v1354 = vld [vmem:[#allocation5 + $0x3c] sm:$0xff]
    %v1355 = vld [vmem:[#allocation5 + $0x44] sm:$0xf]
    %v1356 = vld [vmem:[#allocation5 + $0x48] sm:$0xff]
    %v1357 = vld [vmem:[#allocation5 + $0x50] sm:$0xf]
    %v1358 = vld [vmem:[#allocation5 + $0x54] sm:$0xff]
    %v1359 = vld [vmem:[#allocation5 + $0x5c] sm:$0xf]
    %v1360 = vld [vmem:[#allocation5 + $0x60] sm:$0xff]
    %v1361 = vld [vmem:[#allocation5 + $0x68] sm:$0xf]
    %v1362 = vld [vmem:[#allocation5 + $0x6c] sm:$0xff]
    %v1363 = vld [vmem:[#allocation5 + $0x74] sm:$0xf]
    %v1364 = vld [vmem:[#allocation5 + $0x78] sm:$0xff]
    %v1365 = vld [vmem:[#allocation5 + $0x80] sm:$0xf]
    %v1366 = vld [vmem:[#allocation5 + $0x84] sm:$0xff]
    %v1367 = vld [vmem:[#allocation5 + $0x8c] sm:$0xf]
    %v1368 = vld [vmem:[#allocation5 + $0x90] sm:$0xff]
    %v1369 = vld [vmem:[#allocation5 + $0x98] sm:$0xf]
    %v1370 = vld [vmem:[#allocation5 + $0x9c] sm:$0xff]
    %v1371 = vld [vmem:[#allocation5 + $0xa4] sm:$0xf]
    %v1372 = vld [vmem:[#allocation5 + $0xa8] sm:$0xff]
    %v1373 = vld [vmem:[#allocation5 + $0xb0] sm:$0xf]
    %v1374 = vld [vmem:[#allocation5 + $0xb4] sm:$0xff]
    %v1375 = vld [vmem:[#allocation5 + $0xbc] sm:$0xf]
    %v1376 = vld [vmem:[%s8] sm:$0x7]
    %v1378 = vlaneseq
    %v1379 = vshrl.u32 %v1378, 7
    %v1380 = vsub.s32 0, %v1379
    %v1381 = vrot.slane %v1376, %v1380
    %v1382 = vlaneseq
    %v1383 = vshrl.u32 %v1382, 7
    %v1384 = vsub.s32 1, %v1383
    %v1385 = vrot.slane %v1376, %v1384
    %v1386 = vlaneseq
    %v1387 = vshrl.u32 %v1386, 7
    %v1388 = vsub.s32 2, %v1387
    %v1389 = vrot.slane %v1376, %v1388
    %v1425 = vunpack.c.l.b16 %v1344
    %v1426 = vunpack.c.h.b16 %v1344
    %v1427 = vunpack.c.l.b16 %v1345
    %v1428 = vunpack.c.l.b16 %v1346
    %v1429 = vunpack.c.h.b16 %v1346
    %v1430 = vunpack.c.l.b16 %v1347
    %v1431 = vunpack.c.l.b16 %v1348
    %v1432 = vunpack.c.h.b16 %v1348
    %v1433 = vunpack.c.l.b16 %v1349
    %v1434 = vunpack.c.l.b16 %v1350
    %v1435 = vunpack.c.h.b16 %v1350
    %v1436 = vunpack.c.l.b16 %v1351
    %v1437 = vunpack.c.l.b16 %v1352
    %v1438 = vunpack.c.h.b16 %v1352
    %v1439 = vunpack.c.l.b16 %v1353
    %v1440 = vunpack.c.l.b16 %v1354
    %v1441 = vunpack.c.h.b16 %v1354
    %v1442 = vunpack.c.l.b16 %v1355
    %v1443 = vunpack.c.l.b16 %v1356
    %v1444 = vunpack.c.h.b16 %v1356
    %v1445 = vunpack.c.l.b16 %v1357
    %v1446 = vunpack.c.l.b16 %v1358
    %v1447 = vunpack.c.h.b16 %v1358
    %v1448 = vunpack.c.l.b16 %v1359
    %v1449 = vunpack.c.l.b16 %v1360
    %v1450 = vunpack.c.h.b16 %v1360
    %v1451 = vunpack.c.l.b16 %v1361
    %v1452 = vunpack.c.l.b16 %v1362
    %v1453 = vunpack.c.h.b16 %v1362
    %v1454 = vunpack.c.l.b16 %v1363
    %v1455 = vunpack.c.l.b16 %v1364
    %v1456 = vunpack.c.h.b16 %v1364
    %v1457 = vunpack.c.l.b16 %v1365
    %v1458 = vunpack.c.l.b16 %v1366
    %v1459 = vunpack.c.h.b16 %v1366
    %v1460 = vunpack.c.l.b16 %v1367
    %v1461 = vunpack.c.l.b16 %v1368
    %v1462 = vunpack.c.h.b16 %v1368
    %v1463 = vunpack.c.l.b16 %v1369
    %v1464 = vunpack.c.l.b16 %v1370
    %v1465 = vunpack.c.h.b16 %v1370
    %v1466 = vunpack.c.l.b16 %v1371
    %v1467 = vunpack.c.l.b16 %v1372
    %v1468 = vunpack.c.h.b16 %v1372
    %v1469 = vunpack.c.l.b16 %v1373
    %v1470 = vunpack.c.l.b16 %v1374
    %v1471 = vunpack.c.h.b16 %v1374
    %v1472 = vunpack.c.l.b16 %v1375
    %v1473 = vpack.c.b16 %v1428, %v1425
    %v1474 = vpack.c.b16 %v1429, %v1426
    %v1475 = vpack.c.b16 %v1430, %v1427
    %v1476 = vpack.c.b16 %v1434, %v1431
    %v1477 = vpack.c.b16 %v1435, %v1432
    %v1478 = vpack.c.b16 %v1436, %v1433
    %v1479 = vpack.c.b16 %v1440, %v1437
    %v1480 = vpack.c.b16 %v1441, %v1438
    %v1481 = vpack.c.b16 %v1442, %v1439
    %v1482 = vpack.c.b16 %v1446, %v1443
    %v1483 = vpack.c.b16 %v1447, %v1444
    %v1484 = vpack.c.b16 %v1448, %v1445
    %v1485 = vpack.c.b16 %v1452, %v1449
    %v1486 = vpack.c.b16 %v1453, %v1450
    %v1487 = vpack.c.b16 %v1454, %v1451
    %v1488 = vpack.c.b16 %v1458, %v1455
    %v1489 = vpack.c.b16 %v1459, %v1456
    %v1490 = vpack.c.b16 %v1460, %v1457
    %v1491 = vpack.c.b16 %v1464, %v1461
    %v1492 = vpack.c.b16 %v1465, %v1462
    %v1493 = vpack.c.b16 %v1466, %v1463
    %v1494 = vpack.c.b16 %v1470, %v1467
    %v1495 = vpack.c.b16 %v1471, %v1468
    %v1496 = vpack.c.b16 %v1472, %v1469
    %1521 = vmatprep.subr.bf16.mxu0 %v1495
    %1522 = vmatpush1.bf16.msra.mxu0 %v1494
    %1523 = vmatprep.subr.bf16.mxu0 %v1492
    %1524 = vmatpush1.bf16.msra.mxu0 %v1491
    %1525 = vmatprep.subr.bf16.mxu0 %v1489
    %1526 = vmatpush1.bf16.msra.mxu0 %v1488
    %1527 = vmatprep.subr.bf16.mxu0 %v1486
    %1528 = vmatpush1.bf16.msra.mxu0 %v1485
    %1529 = vmatprep.subr.bf16.mxu0 %v1483
    %1530 = vmatpush1.bf16.msra.mxu0 %v1482
    %1531 = vmatprep.subr.bf16.mxu0 %v1480
    %1532 = vmatpush1.bf16.msra.mxu0 %v1479
    %1533 = vmatprep.subr.bf16.mxu0 %v1477
    %1534 = vmatpush1.bf16.msra.mxu0 %v1476
    %1535 = vmatprep.subr.bf16.mxu0 %v1474
    %1536 = vmatpush1.bf16.msra.mxu0 %v1473
    %1537 = vmatprep.subr.bf16.mxu0 0
    %1538 = vmatpush2.bf16.msra.mxu0 0
    %1539 = vmatprep.subr.bf16.mxu0 0
    %1540 = vmatpush2.bf16.msra.mxu0 0
    %1541 = vmatprep.subr.bf16.mxu0 0
    %1542 = vmatpush2.bf16.msra.mxu0 0
    %1543 = vmatprep.subr.bf16.mxu0 0
    %1544 = vmatpush2.bf16.msra.mxu0 0
    %1545 = vmatprep.subr.bf16.mxu0 0
    %1546 = vmatpush2.bf16.msra.mxu0 0
    %1547 = vmatprep.subr.bf16.mxu0 0
    %1548 = vmatpush2.bf16.msra.mxu0 0
    %1549 = vmatprep.subr.bf16.mxu0 0
    %1550 = vmatpush2.bf16.msra.mxu0 0
    %1551 = vmatprep.subr.bf16.mxu0 0
    %1552 = vmatpush2.bf16.msra.mxu0 0
    %1553 = vmatprep.mubr.bf16.mxu0 0
    %1554 = vmatmul.mubr.bf16.gmra.mxu0 %v1342
    %v1555 = vpop.f32.mrf.mxu0
    %v1556 = vadd.f32 %v1381, %v1555
    %v1557 = vpop.f32.mrf.mxu0
    %v1558 = vadd.f32 %v1385, %v1557
    %v1559 = vpop.f32.mrf.mxu0
    %v1560 = vadd.f32 %v1381, %v1559
    %v1561 = vpop.f32.mrf.mxu0
    %v1562 = vadd.f32 %v1385, %v1561
    %1563 = vdwg.mxu0
    %1564 = vmatprep.subr.bf16.mxu0 0
    %1565 = vmatpush1.bf16.msra.mxu0 %v1496
    %1566 = vmatprep.subr.bf16.mxu0 0
    %1567 = vmatpush1.bf16.msra.mxu0 %v1493
    %1568 = vmatprep.subr.bf16.mxu0 0
    %1569 = vmatpush1.bf16.msra.mxu0 %v1490
    %1570 = vmatprep.subr.bf16.mxu0 0
    %1571 = vmatpush1.bf16.msra.mxu0 %v1487
    %1572 = vmatprep.subr.bf16.mxu0 0
    %1573 = vmatpush1.bf16.msra.mxu0 %v1484
    %1574 = vmatprep.subr.bf16.mxu0 0
    %1575 = vmatpush1.bf16.msra.mxu0 %v1481
    %1576 = vmatprep.subr.bf16.mxu0 0
    %1577 = vmatpush1.bf16.msra.mxu0 %v1478
    %1578 = vmatprep.subr.bf16.mxu0 0
    %1579 = vmatpush1.bf16.msra.mxu0 %v1475
    %1580 = vmatprep.subr.bf16.mxu0 0
    %1581 = vmatpush2.bf16.msra.mxu0 0
    %1582 = vmatprep.subr.bf16.mxu0 0
    %1583 = vmatpush2.bf16.msra.mxu0 0
    %1584 = vmatprep.subr.bf16.mxu0 0
    %1585 = vmatpush2.bf16.msra.mxu0 0
    %1586 = vmatprep.subr.bf16.mxu0 0
    %1587 = vmatpush2.bf16.msra.mxu0 0
    %1588 = vmatprep.subr.bf16.mxu0 0
    %1589 = vmatpush2.bf16.msra.mxu0 0
    %1590 = vmatprep.subr.bf16.mxu0 0
    %1591 = vmatpush2.bf16.msra.mxu0 0
    %1592 = vmatprep.subr.bf16.mxu0 0
    %1593 = vmatpush2.bf16.msra.mxu0 0
    %1594 = vmatprep.subr.bf16.mxu0 0
    %1595 = vmatpush2.bf16.msra.mxu0 0
    %1596 = vmatprep.mubr.bf16.mxu0 0
    %1597 = vmatmul.mubr.bf16.gmra.mxu0 %v1342
    %v1598 = vpop.f32.mrf.mxu0
    %v1599 = vadd.f32 %v1389, %v1598
    %v1600 = vpop.f32.mrf.mxu0
    %v1601 = vpop.f32.mrf.mxu0
    %v1602 = vadd.f32 %v1389, %v1601
    %v1603 = vpop.f32.mrf.mxu0
    %1604 = vdwg.mxu0
    %v1605 = vld [vmem:[%s9] sm:$0x1]
    %v1607 = vlaneseq
    %v1608 = vshrl.u32 %v1607, 7
    %v1609 = vsub.s32 0, %v1608
    %v1610 = vrot.slane %v1605, %v1609
    %v1612 = vld [vmem:[#allocation7] sm:$0xff]
    %v1613 = vld [vmem:[#allocation7 + $0x8] sm:$0xf]
    %v1614 = vld [vmem:[#allocation7 + $0xc] sm:$0xff]
    %v1615 = vld [vmem:[#allocation7 + $0x14] sm:$0xf]
    %v1616 = vld [vmem:[#allocation7 + $0x18] sm:$0xff]
    %v1617 = vld [vmem:[#allocation7 + $0x20] sm:$0xf]
    %v1618 = vld [vmem:[#allocation7 + $0x24] sm:$0xff]
    %v1619 = vld [vmem:[#allocation7 + $0x2c] sm:$0xf]
    %v1620 = vld [vmem:[#allocation7 + $0x30] sm:$0xff]
    %v1621 = vld [vmem:[#allocation7 + $0x38] sm:$0xf]
    %v1622 = vld [vmem:[#allocation7 + $0x3c] sm:$0xff]
    %v1623 = vld [vmem:[#allocation7 + $0x44] sm:$0xf]
    %v1624 = vld [vmem:[#allocation7 + $0x48] sm:$0xff]
    %v1625 = vld [vmem:[#allocation7 + $0x50] sm:$0xf]
    %v1626 = vld [vmem:[#allocation7 + $0x54] sm:$0xff]
    %v1627 = vld [vmem:[#allocation7 + $0x5c] sm:$0xf]
    %v1628 = vld [vmem:[#allocation7 + $0x60] sm:$0xff]
    %v1629 = vld [vmem:[#allocation7 + $0x68] sm:$0xf]
    %v1630 = vld [vmem:[#allocation7 + $0x6c] sm:$0xff]
    %v1631 = vld [vmem:[#allocation7 + $0x74] sm:$0xf]
    %v1632 = vld [vmem:[#allocation7 + $0x78] sm:$0xff]
    %v1633 = vld [vmem:[#allocation7 + $0x80] sm:$0xf]
    %v1634 = vld [vmem:[#allocation7 + $0x84] sm:$0xff]
    %v1635 = vld [vmem:[#allocation7 + $0x8c] sm:$0xf]
    %v1636 = vld [vmem:[#allocation7 + $0x90] sm:$0xff]
    %v1637 = vld [vmem:[#allocation7 + $0x98] sm:$0xf]
    %v1638 = vld [vmem:[#allocation7 + $0x9c] sm:$0xff]
    %v1639 = vld [vmem:[#allocation7 + $0xa4] sm:$0xf]
    %v1640 = vld [vmem:[#allocation7 + $0xa8] sm:$0xff]
    %v1641 = vld [vmem:[#allocation7 + $0xb0] sm:$0xf]
    %v1642 = vld [vmem:[#allocation7 + $0xb4] sm:$0xff]
    %v1643 = vld [vmem:[#allocation7 + $0xbc] sm:$0xf]
    %v1676 = vunpack.c.l.b16 %v1612
    %v1677 = vunpack.c.h.b16 %v1612
    %v1678 = vunpack.c.l.b16 %v1613
    %v1679 = vunpack.c.l.b16 %v1614
    %v1680 = vunpack.c.h.b16 %v1614
    %v1681 = vunpack.c.l.b16 %v1615
    %v1682 = vunpack.c.l.b16 %v1616
    %v1683 = vunpack.c.h.b16 %v1616
    %v1684 = vunpack.c.l.b16 %v1617
    %v1685 = vunpack.c.l.b16 %v1618
    %v1686 = vunpack.c.h.b16 %v1618
    %v1687 = vunpack.c.l.b16 %v1619
    %v1688 = vunpack.c.l.b16 %v1620
    %v1689 = vunpack.c.h.b16 %v1620
    %v1690 = vunpack.c.l.b16 %v1621
    %v1691 = vunpack.c.l.b16 %v1622
    %v1692 = vunpack.c.h.b16 %v1622
    %v1693 = vunpack.c.l.b16 %v1623
    %v1694 = vunpack.c.l.b16 %v1624
    %v1695 = vunpack.c.h.b16 %v1624
    %v1696 = vunpack.c.l.b16 %v1625
    %v1697 = vunpack.c.l.b16 %v1626
    %v1698 = vunpack.c.h.b16 %v1626
    %v1699 = vunpack.c.l.b16 %v1627
    %v1700 = vunpack.c.l.b16 %v1628
    %v1701 = vunpack.c.h.b16 %v1628
    %v1702 = vunpack.c.l.b16 %v1629
    %v1703 = vunpack.c.l.b16 %v1630
    %v1704 = vunpack.c.h.b16 %v1630
    %v1705 = vunpack.c.l.b16 %v1631
    %v1706 = vunpack.c.l.b16 %v1632
    %v1707 = vunpack.c.h.b16 %v1632
    %v1708 = vunpack.c.l.b16 %v1633
    %v1709 = vunpack.c.l.b16 %v1634
    %v1710 = vunpack.c.h.b16 %v1634
    %v1711 = vunpack.c.l.b16 %v1635
    %v1712 = vunpack.c.l.b16 %v1636
    %v1713 = vunpack.c.h.b16 %v1636
    %v1714 = vunpack.c.l.b16 %v1637
    %v1715 = vunpack.c.l.b16 %v1638
    %v1716 = vunpack.c.h.b16 %v1638
    %v1717 = vunpack.c.l.b16 %v1639
    %v1718 = vunpack.c.l.b16 %v1640
    %v1719 = vunpack.c.h.b16 %v1640
    %v1720 = vunpack.c.l.b16 %v1641
    %v1721 = vunpack.c.l.b16 %v1642
    %v1722 = vunpack.c.h.b16 %v1642
    %v1723 = vunpack.c.l.b16 %v1643
    %v1724 = vpack.c.b16 %v1679, %v1676
    %v1725 = vpack.c.b16 %v1680, %v1677
    %v1726 = vpack.c.b16 %v1681, %v1678
    %v1727 = vpack.c.b16 %v1685, %v1682
    %v1728 = vpack.c.b16 %v1686, %v1683
    %v1729 = vpack.c.b16 %v1687, %v1684
    %v1730 = vpack.c.b16 %v1691, %v1688
    %v1731 = vpack.c.b16 %v1692, %v1689
    %v1732 = vpack.c.b16 %v1693, %v1690
    %v1733 = vpack.c.b16 %v1697, %v1694
    %v1734 = vpack.c.b16 %v1698, %v1695
    %v1735 = vpack.c.b16 %v1699, %v1696
    %v1736 = vpack.c.b16 %v1703, %v1700
    %v1737 = vpack.c.b16 %v1704, %v1701
    %v1738 = vpack.c.b16 %v1705, %v1702
    %v1739 = vpack.c.b16 %v1709, %v1706
    %v1740 = vpack.c.b16 %v1710, %v1707
    %v1741 = vpack.c.b16 %v1711, %v1708
    %v1742 = vpack.c.b16 %v1715, %v1712
    %v1743 = vpack.c.b16 %v1716, %v1713
    %v1744 = vpack.c.b16 %v1717, %v1714
    %v1745 = vpack.c.b16 %v1721, %v1718
    %v1746 = vpack.c.b16 %v1722, %v1719
    %v1747 = vpack.c.b16 %v1723, %v1720
    %1772 = vmatprep.subr.bf16.mxu0 %v1746
    %1773 = vmatpush1.bf16.msra.mxu0 %v1745
    %1774 = vmatprep.subr.bf16.mxu0 %v1743
    %1775 = vmatpush1.bf16.msra.mxu0 %v1742
    %1776 = vmatprep.subr.bf16.mxu0 %v1740
    %1777 = vmatpush1.bf16.msra.mxu0 %v1739
    %1778 = vmatprep.subr.bf16.mxu0 %v1737
    %1779 = vmatpush1.bf16.msra.mxu0 %v1736
    %1780 = vmatprep.subr.bf16.mxu0 %v1734
    %1781 = vmatpush1.bf16.msra.mxu0 %v1733
    %1782 = vmatprep.subr.bf16.mxu0 %v1731
    %1783 = vmatpush1.bf16.msra.mxu0 %v1730
    %1784 = vmatprep.subr.bf16.mxu0 %v1728
    %1785 = vmatpush1.bf16.msra.mxu0 %v1727
    %1786 = vmatprep.subr.bf16.mxu0 %v1725
    %1787 = vmatpush1.bf16.msra.mxu0 %v1724
    %1788 = vmatprep.subr.bf16.mxu0 0
    %1789 = vmatpush2.bf16.msra.mxu0 0
    %1790 = vmatprep.subr.bf16.mxu0 0
    %1791 = vmatpush2.bf16.msra.mxu0 0
    %1792 = vmatprep.subr.bf16.mxu0 0
    %1793 = vmatpush2.bf16.msra.mxu0 0
    %1794 = vmatprep.subr.bf16.mxu0 0
    %1795 = vmatpush2.bf16.msra.mxu0 0
    %1796 = vmatprep.subr.bf16.mxu0 0
    %1797 = vmatpush2.bf16.msra.mxu0 0
    %1798 = vmatprep.subr.bf16.mxu0 0
    %1799 = vmatpush2.bf16.msra.mxu0 0
    %1800 = vmatprep.subr.bf16.mxu0 0
    %1801 = vmatpush2.bf16.msra.mxu0 0
    %1802 = vmatprep.subr.bf16.mxu0 0
    %1803 = vmatpush2.bf16.msra.mxu0 0
    %1804 = vmatprep.mubr.bf16.mxu0 0
    %1805 = vmatmul.mubr.bf16.gmra.mxu0 0
    %v1806 = vpop.f32.mrf.mxu0
    %v1807 = vadd.f32 0.0, %v1806
    %v1808 = vpop.f32.mrf.mxu0
    %v1809 = vadd.f32 0.0, %v1808
    %v1810 = vpop.f32.mrf.mxu0
    %v1811 = vpop.f32.mrf.mxu0
    %1812 = vdwg.mxu0
    %1813 = vmatprep.subr.bf16.mxu0 0
    %1814 = vmatpush1.bf16.msra.mxu0 %v1747
    %1815 = vmatprep.subr.bf16.mxu0 0
    %1816 = vmatpush1.bf16.msra.mxu0 %v1744
    %1817 = vmatprep.subr.bf16.mxu0 0
    %1818 = vmatpush1.bf16.msra.mxu0 %v1741
    %1819 = vmatprep.subr.bf16.mxu0 0
    %1820 = vmatpush1.bf16.msra.mxu0 %v1738
    %1821 = vmatprep.subr.bf16.mxu0 0
    %1822 = vmatpush1.bf16.msra.mxu0 %v1735
    %1823 = vmatprep.subr.bf16.mxu0 0
    %1824 = vmatpush1.bf16.msra.mxu0 %v1732
    %1825 = vmatprep.subr.bf16.mxu0 0
    %1826 = vmatpush1.bf16.msra.mxu0 %v1729
    %1827 = vmatprep.subr.bf16.mxu0 0
    %1828 = vmatpush1.bf16.msra.mxu0 %v1726
    %1829 = vmatprep.subr.bf16.mxu0 0
    %1830 = vmatpush2.bf16.msra.mxu0 0
    %1831 = vmatprep.subr.bf16.mxu0 0
    %1832 = vmatpush2.bf16.msra.mxu0 0
    %1833 = vmatprep.subr.bf16.mxu0 0
    %1834 = vmatpush2.bf16.msra.mxu0 0
    %1835 = vmatprep.subr.bf16.mxu0 0
    %1836 = vmatpush2.bf16.msra.mxu0 0
    %1837 = vmatprep.subr.bf16.mxu0 0
    %1838 = vmatpush2.bf16.msra.mxu0 0
    %1839 = vmatprep.subr.bf16.mxu0 0
    %1840 = vmatpush2.bf16.msra.mxu0 0
    %1841 = vmatprep.subr.bf16.mxu0 0
    %1842 = vmatpush2.bf16.msra.mxu0 0
    %1843 = vmatprep.subr.bf16.mxu0 0
    %1844 = vmatpush2.bf16.msra.mxu0 0
    %1845 = vmatprep.mubr.bf16.mxu0 0
    %1846 = vmatmul.mubr.bf16.gmra.mxu0 0
    %v1847 = vpop.f32.mrf.mxu0
    %v1848 = vadd.f32 0.0, %v1847
    %v1849 = vpop.f32.mrf.mxu0
    %v1850 = vpop.f32.mrf.mxu0
    %v1851 = vpop.f32.mrf.mxu0
    %1852 = vdwg.mxu0
    %v1853 = vadd.f32 %v1556, %v1807
    %v1854 = vadd.f32 %v1558, %v1809
    %v1855 = vxor.u32 %v1853, 2147483648
    %v1856 = vxor.u32 %v1854, 2147483648
    %v1857 = vmul.f32 %v1855, 1.442695
    %v1858 = vpow.pop %v1857
    %v1859 = vmul.f32 %v1856, 1.442695
    %v1860 = vpow.pop %v1859
    %v1861 = vadd.f32 %v1858, 1.0
    %v1862 = vadd.f32 %v1860, 1.0
    %v1863 = vrcp.pop %v1861
    %v1864 = vmul.f32 1.0, %v1863
    %v1865 = vrcp.pop %v1862
    %v1866 = vmul.f32 1.0, %v1865
    %v1867 = vadd.f32 %v1848, %v1610
    %v1868 = vmul.f32 %v1864, %v1867
    %v1869 = vadd.f32 %v1599, %v1868
    %v1870 = vtanh.pop %v1869
    %v1871 = vsub.f32 1.0, %v1866
    %v1872 = vmul.f32 %v1871, %v1870
    %v1873 = vmul.f32 %v1866, 0.0
    %v1874 = vadd.f32 %v1872, %v1873
    %v1875 = vpack.c.bf16 %v1874, %v1874
    %1876 = vmatprep.subr.bf16.mxu0 %v1746
    %1877 = vmatpush1.bf16.msra.mxu0 %v1745
    %1878 = vmatprep.subr.bf16.mxu0 %v1743
    %1879 = vmatpush1.bf16.msra.mxu0 %v1742
    %1880 = vmatprep.subr.bf16.mxu0 %v1740
    %1881 = vmatpush1.bf16.msra.mxu0 %v1739
    %1882 = vmatprep.subr.bf16.mxu0 %v1737
    %1883 = vmatpush1.bf16.msra.mxu0 %v1736
    %1884 = vmatprep.subr.bf16.mxu0 %v1734
    %1885 = vmatpush1.bf16.msra.mxu0 %v1733
    %1886 = vmatprep.subr.bf16.mxu0 %v1731
    %1887 = vmatpush1.bf16.msra.mxu0 %v1730
    %1888 = vmatprep.subr.bf16.mxu0 %v1728
    %1889 = vmatpush1.bf16.msra.mxu0 %v1727
    %1890 = vmatprep.subr.bf16.mxu0 %v1725
    %1891 = vmatpush1.bf16.msra.mxu0 %v1724
    %1892 = vmatprep.subr.bf16.mxu0 0
    %1893 = vmatpush2.bf16.msra.mxu0 0
    %1894 = vmatprep.subr.bf16.mxu0 0
    %1895 = vmatpush2.bf16.msra.mxu0 0
    %1896 = vmatprep.subr.bf16.mxu0 0
    %1897 = vmatpush2.bf16.msra.mxu0 0
    %1898 = vmatprep.subr.bf16.mxu0 0
    %1899 = vmatpush2.bf16.msra.mxu0 0
    %1900 = vmatprep.subr.bf16.mxu0 0
    %1901 = vmatpush2.bf16.msra.mxu0 0
    %1902 = vmatprep.subr.bf16.mxu0 0
    %1903 = vmatpush2.bf16.msra.mxu0 0
    %1904 = vmatprep.subr.bf16.mxu0 0
    %1905 = vmatpush2.bf16.msra.mxu0 0
    %1906 = vmatprep.subr.bf16.mxu0 0
    %1907 = vmatpush2.bf16.msra.mxu0 0
    %1908 = vmatprep.mubr.bf16.mxu0 0
    %1909 = vmatmul.mubr.bf16.gmra.mxu0 %v1875
    %v1910 = vpop.f32.mrf.mxu0
    %v1911 = vadd.f32 0.0, %v1910
    %v1912 = vpop.f32.mrf.mxu0
    %v1913 = vadd.f32 0.0, %v1912
    %v1914 = vpop.f32.mrf.mxu0
    %v1915 = vpop.f32.mrf.mxu0
    %1916 = vdwg.mxu0
    %1917 = vmatprep.subr.bf16.mxu0 0
    %1918 = vmatpush1.bf16.msra.mxu0 %v1747
    %1919 = vmatprep.subr.bf16.mxu0 0
    %1920 = vmatpush1.bf16.msra.mxu0 %v1744
    %1921 = vmatprep.subr.bf16.mxu0 0
    %1922 = vmatpush1.bf16.msra.mxu0 %v1741
    %1923 = vmatprep.subr.bf16.mxu0 0
    %1924 = vmatpush1.bf16.msra.mxu0 %v1738
    %1925 = vmatprep.subr.bf16.mxu0 0
    %1926 = vmatpush1.bf16.msra.mxu0 %v1735
    %1927 = vmatprep.subr.bf16.mxu0 0
    %1928 = vmatpush1.bf16.msra.mxu0 %v1732
    %1929 = vmatprep.subr.bf16.mxu0 0
    %1930 = vmatpush1.bf16.msra.mxu0 %v1729
    %1931 = vmatprep.subr.bf16.mxu0 0
    %1932 = vmatpush1.bf16.msra.mxu0 %v1726
    %1933 = vmatprep.subr.bf16.mxu0 0
    %1934 = vmatpush2.bf16.msra.mxu0 0
    %1935 = vmatprep.subr.bf16.mxu0 0
    %1936 = vmatpush2.bf16.msra.mxu0 0
    %1937 = vmatprep.subr.bf16.mxu0 0
    %1938 = vmatpush2.bf16.msra.mxu0 0
    %1939 = vmatprep.subr.bf16.mxu0 0
    %1940 = vmatpush2.bf16.msra.mxu0 0
    %1941 = vmatprep.subr.bf16.mxu0 0
    %1942 = vmatpush2.bf16.msra.mxu0 0
    %1943 = vmatprep.subr.bf16.mxu0 0
    %1944 = vmatpush2.bf16.msra.mxu0 0
    %1945 = vmatprep.subr.bf16.mxu0 0
    %1946 = vmatpush2.bf16.msra.mxu0 0
    %1947 = vmatprep.subr.bf16.mxu0 0
    %1948 = vmatpush2.bf16.msra.mxu0 0
    %1949 = vmatprep.mubr.bf16.mxu0 0
    %1950 = vmatmul.mubr.bf16.gmra.mxu0 %v1875
    %v1951 = vpop.f32.mrf.mxu0
    %v1952 = vadd.f32 0.0, %v1951
    %v1953 = vpop.f32.mrf.mxu0
    %v1954 = vpop.f32.mrf.mxu0
    %v1955 = vpop.f32.mrf.mxu0
    %1956 = vdwg.mxu0
    %v1959 = vrot.slane %v1911, 6
    %v1960 = vrot.slane %v1913, 6
    %v1963 = vadd.f32 %v1556, %v1959
    %v1964 = vadd.f32 %v1558, %v1960
    %v1965 = vxor.u32 %v1963, 2147483648
    %v1966 = vxor.u32 %v1964, 2147483648
    %v1967 = vmul.f32 %v1965, 1.442695
    %v1968 = vpow.pop %v1967
    %v1969 = vmul.f32 %v1966, 1.442695
    %v1970 = vpow.pop %v1969
    %v1971 = vadd.f32 %v1968, 1.0
    %v1972 = vadd.f32 %v1970, 1.0
    %v1973 = vrcp.pop %v1971
    %v1974 = vmul.f32 1.0, %v1973
    %v1975 = vrcp.pop %v1972
    %v1976 = vmul.f32 1.0, %v1975
    %v1977 = vadd.f32 %v1952, %v1610
    %v1979 = vrot.slane %v1977, 6
    %v1981 = vmul.f32 %v1974, %v1979
    %v1982 = vadd.f32 %v1599, %v1981
    %v1983 = vtanh.pop %v1982
    %v1984 = vsub.f32 1.0, %v1976
    %v1985 = vmul.f32 %v1984, %v1983
    %v1987 = vrot.slane %v1874, 6
    %v1989 = vmul.f32 %v1976, %v1987
    %v1990 = vadd.f32 %v1985, %v1989
    %v1991 = vpack.c.bf16 %v1990, %v1990
    %v1993 = vrot.slane %v1991, 1
    %1995 = vmatprep.subr.bf16.mxu0 %v1746
    %1996 = vmatpush1.bf16.msra.mxu0 %v1745
    %1997 = vmatprep.subr.bf16.mxu0 %v1743
    %1998 = vmatpush1.bf16.msra.mxu0 %v1742
    %1999 = vmatprep.subr.bf16.mxu0 %v1740
    %2000 = vmatpush1.bf16.msra.mxu0 %v1739
    %2001 = vmatprep.subr.bf16.mxu0 %v1737
    %2002 = vmatpush1.bf16.msra.mxu0 %v1736
    %2003 = vmatprep.subr.bf16.mxu0 %v1734
    %2004 = vmatpush1.bf16.msra.mxu0 %v1733
    %2005 = vmatprep.subr.bf16.mxu0 %v1731
    %2006 = vmatpush1.bf16.msra.mxu0 %v1730
    %2007 = vmatprep.subr.bf16.mxu0 %v1728
    %2008 = vmatpush1.bf16.msra.mxu0 %v1727
    %2009 = vmatprep.subr.bf16.mxu0 %v1725
    %2010 = vmatpush1.bf16.msra.mxu0 %v1724
    %2011 = vmatprep.subr.bf16.mxu0 0
    %2012 = vmatpush2.bf16.msra.mxu0 0
    %2013 = vmatprep.subr.bf16.mxu0 0
    %2014 = vmatpush2.bf16.msra.mxu0 0
    %2015 = vmatprep.subr.bf16.mxu0 0
    %2016 = vmatpush2.bf16.msra.mxu0 0
    %2017 = vmatprep.subr.bf16.mxu0 0
    %2018 = vmatpush2.bf16.msra.mxu0 0
    %2019 = vmatprep.subr.bf16.mxu0 0
    %2020 = vmatpush2.bf16.msra.mxu0 0
    %2021 = vmatprep.subr.bf16.mxu0 0
    %2022 = vmatpush2.bf16.msra.mxu0 0
    %2023 = vmatprep.subr.bf16.mxu0 0
    %2024 = vmatpush2.bf16.msra.mxu0 0
    %2025 = vmatprep.subr.bf16.mxu0 0
    %2026 = vmatpush2.bf16.msra.mxu0 0
    %2027 = vmatprep.mubr.bf16.mxu0 0
    %2028 = vmatmul.mubr.bf16.gmra.mxu0 %v1993
    %v2029 = vpop.f32.mrf.mxu0
    %v2030 = vadd.f32 0.0, %v2029
    %v2031 = vpop.f32.mrf.mxu0
    %v2032 = vadd.f32 0.0, %v2031
    %v2033 = vpop.f32.mrf.mxu0
    %v2034 = vpop.f32.mrf.mxu0
    %2035 = vdwg.mxu0
    %2036 = vmatprep.subr.bf16.mxu0 0
    %2037 = vmatpush1.bf16.msra.mxu0 %v1747
    %2038 = vmatprep.subr.bf16.mxu0 0
    %2039 = vmatpush1.bf16.msra.mxu0 %v1744
    %2040 = vmatprep.subr.bf16.mxu0 0
    %2041 = vmatpush1.bf16.msra.mxu0 %v1741
    %2042 = vmatprep.subr.bf16.mxu0 0
    %2043 = vmatpush1.bf16.msra.mxu0 %v1738
    %2044 = vmatprep.subr.bf16.mxu0 0
    %2045 = vmatpush1.bf16.msra.mxu0 %v1735
    %2046 = vmatprep.subr.bf16.mxu0 0
    %2047 = vmatpush1.bf16.msra.mxu0 %v1732
    %2048 = vmatprep.subr.bf16.mxu0 0
    %2049 = vmatpush1.bf16.msra.mxu0 %v1729
    %2050 = vmatprep.subr.bf16.mxu0 0
    %2051 = vmatpush1.bf16.msra.mxu0 %v1726
    %2052 = vmatprep.subr.bf16.mxu0 0
    %2053 = vmatpush2.bf16.msra.mxu0 0
    %2054 = vmatprep.subr.bf16.mxu0 0
    %2055 = vmatpush2.bf16.msra.mxu0 0
    %2056 = vmatprep.subr.bf16.mxu0 0
    %2057 = vmatpush2.bf16.msra.mxu0 0
    %2058 = vmatprep.subr.bf16.mxu0 0
    %2059 = vmatpush2.bf16.msra.mxu0 0
    %2060 = vmatprep.subr.bf16.mxu0 0
    %2061 = vmatpush2.bf16.msra.mxu0 0
    %2062 = vmatprep.subr.bf16.mxu0 0
    %2063 = vmatpush2.bf16.msra.mxu0 0
    %2064 = vmatprep.subr.bf16.mxu0 0
    %2065 = vmatpush2.bf16.msra.mxu0 0
    %2066 = vmatprep.subr.bf16.mxu0 0
    %2067 = vmatpush2.bf16.msra.mxu0 0
    %2068 = vmatprep.mubr.bf16.mxu0 0
    %2069 = vmatmul.mubr.bf16.gmra.mxu0 %v1993
    %v2070 = vpop.f32.mrf.mxu0
    %v2071 = vadd.f32 0.0, %v2070
    %v2072 = vpop.f32.mrf.mxu0
    %v2073 = vpop.f32.mrf.mxu0
    %v2074 = vpop.f32.mrf.mxu0
    %2075 = vdwg.mxu0
    %v2078 = vrot.slane %v2030, 4
    %v2079 = vrot.slane %v2032, 4
    %v2082 = vadd.f32 %v1556, %v2078
    %v2083 = vadd.f32 %v1558, %v2079
    %v2084 = vxor.u32 %v2082, 2147483648
    %v2085 = vxor.u32 %v2083, 2147483648
    %v2086 = vmul.f32 %v2084, 1.442695
    %v2087 = vpow.pop %v2086
    %v2088 = vmul.f32 %v2085, 1.442695
    %v2089 = vpow.pop %v2088
    %v2090 = vadd.f32 %v2087, 1.0
    %v2091 = vadd.f32 %v2089, 1.0
    %v2092 = vrcp.pop %v2090
    %v2093 = vmul.f32 1.0, %v2092
    %v2094 = vrcp.pop %v2091
    %v2095 = vmul.f32 1.0, %v2094
    %v2096 = vadd.f32 %v2071, %v1610
    %v2098 = vrot.slane %v2096, 4
    %v2100 = vmul.f32 %v2093, %v2098
    %v2101 = vadd.f32 %v1599, %v2100
    %v2102 = vtanh.pop %v2101
    %v2103 = vsub.f32 1.0, %v2095
    %v2104 = vmul.f32 %v2103, %v2102
    %v2106 = vrot.slane %v1990, 6
    %v2108 = vmul.f32 %v2095, %v2106
    %v2109 = vadd.f32 %v2104, %v2108
    %v2110 = vpack.c.bf16 %v2109, %v2109
    %v2112 = vrot.slane %v2110, 2
    %2114 = vmatprep.subr.bf16.mxu0 %v1746
    %2115 = vmatpush1.bf16.msra.mxu0 %v1745
    %2116 = vmatprep.subr.bf16.mxu0 %v1743
    %2117 = vmatpush1.bf16.msra.mxu0 %v1742
    %2118 = vmatprep.subr.bf16.mxu0 %v1740
    %2119 = vmatpush1.bf16.msra.mxu0 %v1739
    %2120 = vmatprep.subr.bf16.mxu0 %v1737
    %2121 = vmatpush1.bf16.msra.mxu0 %v1736
    %2122 = vmatprep.subr.bf16.mxu0 %v1734
    %2123 = vmatpush1.bf16.msra.mxu0 %v1733
    %2124 = vmatprep.subr.bf16.mxu0 %v1731
    %2125 = vmatpush1.bf16.msra.mxu0 %v1730
    %2126 = vmatprep.subr.bf16.mxu0 %v1728
    %2127 = vmatpush1.bf16.msra.mxu0 %v1727
    %2128 = vmatprep.subr.bf16.mxu0 %v1725
    %2129 = vmatpush1.bf16.msra.mxu0 %v1724
    %2130 = vmatprep.subr.bf16.mxu0 0
    %2131 = vmatpush2.bf16.msra.mxu0 0
    %2132 = vmatprep.subr.bf16.mxu0 0
    %2133 = vmatpush2.bf16.msra.mxu0 0
    %2134 = vmatprep.subr.bf16.mxu0 0
    %2135 = vmatpush2.bf16.msra.mxu0 0
    %2136 = vmatprep.subr.bf16.mxu0 0
    %2137 = vmatpush2.bf16.msra.mxu0 0
    %2138 = vmatprep.subr.bf16.mxu0 0
    %2139 = vmatpush2.bf16.msra.mxu0 0
    %2140 = vmatprep.subr.bf16.mxu0 0
    %2141 = vmatpush2.bf16.msra.mxu0 0
    %2142 = vmatprep.subr.bf16.mxu0 0
    %2143 = vmatpush2.bf16.msra.mxu0 0
    %2144 = vmatprep.subr.bf16.mxu0 0
    %2145 = vmatpush2.bf16.msra.mxu0 0
    %2146 = vmatprep.mubr.bf16.mxu0 0
    %2147 = vmatmul.mubr.bf16.gmra.mxu0 %v2112
    %v2148 = vpop.f32.mrf.mxu0
    %v2149 = vadd.f32 0.0, %v2148
    %v2150 = vpop.f32.mrf.mxu0
    %v2151 = vadd.f32 0.0, %v2150
    %v2152 = vpop.f32.mrf.mxu0
    %v2153 = vpop.f32.mrf.mxu0
    %2154 = vdwg.mxu0
    %2155 = vmatprep.subr.bf16.mxu0 0
    %2156 = vmatpush1.bf16.msra.mxu0 %v1747
    %2157 = vmatprep.subr.bf16.mxu0 0
    %2158 = vmatpush1.bf16.msra.mxu0 %v1744
    %2159 = vmatprep.subr.bf16.mxu0 0
    %2160 = vmatpush1.bf16.msra.mxu0 %v1741
    %2161 = vmatprep.subr.bf16.mxu0 0
    %2162 = vmatpush1.bf16.msra.mxu0 %v1738
    %2163 = vmatprep.subr.bf16.mxu0 0
    %2164 = vmatpush1.bf16.msra.mxu0 %v1735
    %2165 = vmatprep.subr.bf16.mxu0 0
    %2166 = vmatpush1.bf16.msra.mxu0 %v1732
    %2167 = vmatprep.subr.bf16.mxu0 0
    %2168 = vmatpush1.bf16.msra.mxu0 %v1729
    %2169 = vmatprep.subr.bf16.mxu0 0
    %2170 = vmatpush1.bf16.msra.mxu0 %v1726
    %2171 = vmatprep.subr.bf16.mxu0 0
    %2172 = vmatpush2.bf16.msra.mxu0 0
    %2173 = vmatprep.subr.bf16.mxu0 0
    %2174 = vmatpush2.bf16.msra.mxu0 0
    %2175 = vmatprep.subr.bf16.mxu0 0
    %2176 = vmatpush2.bf16.msra.mxu0 0
    %2177 = vmatprep.subr.bf16.mxu0 0
    %2178 = vmatpush2.bf16.msra.mxu0 0
    %2179 = vmatprep.subr.bf16.mxu0 0
    %2180 = vmatpush2.bf16.msra.mxu0 0
    %2181 = vmatprep.subr.bf16.mxu0 0
    %2182 = vmatpush2.bf16.msra.mxu0 0
    %2183 = vmatprep.subr.bf16.mxu0 0
    %2184 = vmatpush2.bf16.msra.mxu0 0
    %2185 = vmatprep.subr.bf16.mxu0 0
    %2186 = vmatpush2.bf16.msra.mxu0 0
    %2187 = vmatprep.mubr.bf16.mxu0 0
    %2188 = vmatmul.mubr.bf16.gmra.mxu0 %v2112
    %v2189 = vpop.f32.mrf.mxu0
    %v2190 = vadd.f32 0.0, %v2189
    %v2191 = vpop.f32.mrf.mxu0
    %v2192 = vpop.f32.mrf.mxu0
    %v2193 = vpop.f32.mrf.mxu0
    %2194 = vdwg.mxu0
    %v2197 = vrot.slane %v2149, 2
    %v2198 = vrot.slane %v2151, 2
    %v2201 = vadd.f32 %v1556, %v2197
    %v2202 = vadd.f32 %v1558, %v2198
    %v2203 = vxor.u32 %v2201, 2147483648
    %v2204 = vxor.u32 %v2202, 2147483648
    %v2205 = vmul.f32 %v2203, 1.442695
    %v2206 = vpow.pop %v2205
    %v2207 = vmul.f32 %v2204, 1.442695
    %v2208 = vpow.pop %v2207
    %v2209 = vadd.f32 %v2206, 1.0
    %v2210 = vadd.f32 %v2208, 1.0
    %v2211 = vrcp.pop %v2209
    %v2212 = vmul.f32 1.0, %v2211
    %v2213 = vrcp.pop %v2210
    %v2214 = vmul.f32 1.0, %v2213
    %v2215 = vadd.f32 %v2190, %v1610
    %v2217 = vrot.slane %v2215, 2
    %v2219 = vmul.f32 %v2212, %v2217
    %v2220 = vadd.f32 %v1599, %v2219
    %v2221 = vtanh.pop %v2220
    %v2222 = vsub.f32 1.0, %v2214
    %v2223 = vmul.f32 %v2222, %v2221
    %v2225 = vrot.slane %v2109, 6
    %v2227 = vmul.f32 %v2214, %v2225
    %v2228 = vadd.f32 %v2223, %v2227
    %v2229 = vpack.c.bf16 %v2228, %v2228
    %v2231 = vrot.slane %v2229, 3
    %2233 = vmatprep.subr.bf16.mxu0 %v1746
    %2234 = vmatpush1.bf16.msra.mxu0 %v1745
    %2235 = vmatprep.subr.bf16.mxu0 %v1743
    %2236 = vmatpush1.bf16.msra.mxu0 %v1742
    %2237 = vmatprep.subr.bf16.mxu0 %v1740
    %2238 = vmatpush1.bf16.msra.mxu0 %v1739
    %2239 = vmatprep.subr.bf16.mxu0 %v1737
    %2240 = vmatpush1.bf16.msra.mxu0 %v1736
    %2241 = vmatprep.subr.bf16.mxu0 %v1734
    %2242 = vmatpush1.bf16.msra.mxu0 %v1733
    %2243 = vmatprep.subr.bf16.mxu0 %v1731
    %2244 = vmatpush1.bf16.msra.mxu0 %v1730
    %2245 = vmatprep.subr.bf16.mxu0 %v1728
    %2246 = vmatpush1.bf16.msra.mxu0 %v1727
    %2247 = vmatprep.subr.bf16.mxu0 %v1725
    %2248 = vmatpush1.bf16.msra.mxu0 %v1724
    %2249 = vmatprep.subr.bf16.mxu0 0
    %2250 = vmatpush2.bf16.msra.mxu0 0
    %2251 = vmatprep.subr.bf16.mxu0 0
    %2252 = vmatpush2.bf16.msra.mxu0 0
    %2253 = vmatprep.subr.bf16.mxu0 0
    %2254 = vmatpush2.bf16.msra.mxu0 0
    %2255 = vmatprep.subr.bf16.mxu0 0
    %2256 = vmatpush2.bf16.msra.mxu0 0
    %2257 = vmatprep.subr.bf16.mxu0 0
    %2258 = vmatpush2.bf16.msra.mxu0 0
    %2259 = vmatprep.subr.bf16.mxu0 0
    %2260 = vmatpush2.bf16.msra.mxu0 0
    %2261 = vmatprep.subr.bf16.mxu0 0
    %2262 = vmatpush2.bf16.msra.mxu0 0
    %2263 = vmatprep.subr.bf16.mxu0 0
    %2264 = vmatpush2.bf16.msra.mxu0 0
    %2265 = vmatprep.mubr.bf16.mxu0 0
    %2266 = vmatmul.mubr.bf16.gmra.mxu0 %v2231
    %v2267 = vpop.f32.mrf.mxu0
    %v2268 = vadd.f32 0.0, %v2267
    %v2269 = vpop.f32.mrf.mxu0
    %v2270 = vadd.f32 0.0, %v2269
    %v2271 = vpop.f32.mrf.mxu0
    %v2272 = vpop.f32.mrf.mxu0
    %2273 = vdwg.mxu0
    %2274 = vmatprep.subr.bf16.mxu0 0
    %2275 = vmatpush1.bf16.msra.mxu0 %v1747
    %2276 = vmatprep.subr.bf16.mxu0 0
    %2277 = vmatpush1.bf16.msra.mxu0 %v1744
    %2278 = vmatprep.subr.bf16.mxu0 0
    %2279 = vmatpush1.bf16.msra.mxu0 %v1741
    %2280 = vmatprep.subr.bf16.mxu0 0
    %2281 = vmatpush1.bf16.msra.mxu0 %v1738
    %2282 = vmatprep.subr.bf16.mxu0 0
    %2283 = vmatpush1.bf16.msra.mxu0 %v1735
    %2284 = vmatprep.subr.bf16.mxu0 0
    %2285 = vmatpush1.bf16.msra.mxu0 %v1732
    %2286 = vmatprep.subr.bf16.mxu0 0
    %2287 = vmatpush1.bf16.msra.mxu0 %v1729
    %2288 = vmatprep.subr.bf16.mxu0 0
    %2289 = vmatpush1.bf16.msra.mxu0 %v1726
    %2290 = vmatprep.subr.bf16.mxu0 0
    %2291 = vmatpush2.bf16.msra.mxu0 0
    %2292 = vmatprep.subr.bf16.mxu0 0
    %2293 = vmatpush2.bf16.msra.mxu0 0
    %2294 = vmatprep.subr.bf16.mxu0 0
    %2295 = vmatpush2.bf16.msra.mxu0 0
    %2296 = vmatprep.subr.bf16.mxu0 0
    %2297 = vmatpush2.bf16.msra.mxu0 0
    %2298 = vmatprep.subr.bf16.mxu0 0
    %2299 = vmatpush2.bf16.msra.mxu0 0
    %2300 = vmatprep.subr.bf16.mxu0 0
    %2301 = vmatpush2.bf16.msra.mxu0 0
    %2302 = vmatprep.subr.bf16.mxu0 0
    %2303 = vmatpush2.bf16.msra.mxu0 0
    %2304 = vmatprep.subr.bf16.mxu0 0
    %2305 = vmatpush2.bf16.msra.mxu0 0
    %2306 = vmatprep.mubr.bf16.mxu0 0
    %2307 = vmatmul.mubr.bf16.gmra.mxu0 %v2231
    %v2308 = vpop.f32.mrf.mxu0
    %v2309 = vadd.f32 0.0, %v2308
    %v2310 = vpop.f32.mrf.mxu0
    %v2311 = vpop.f32.mrf.mxu0
    %v2312 = vpop.f32.mrf.mxu0
    %2313 = vdwg.mxu0
    %v2314 = vadd.f32 %v1560, %v2268
    %v2315 = vadd.f32 %v1562, %v2270
    %v2316 = vxor.u32 %v2314, 2147483648
    %v2317 = vxor.u32 %v2315, 2147483648
    %v2318 = vmul.f32 %v2316, 1.442695
    %v2319 = vpow.pop %v2318
    %v2320 = vmul.f32 %v2317, 1.442695
    %v2321 = vpow.pop %v2320
    %v2322 = vadd.f32 %v2319, 1.0
    %v2323 = vadd.f32 %v2321, 1.0
    %v2324 = vrcp.pop %v2322
    %v2325 = vmul.f32 1.0, %v2324
    %v2326 = vrcp.pop %v2323
    %v2327 = vmul.f32 1.0, %v2326
    %v2328 = vadd.f32 %v2309, %v1610
    %v2329 = vmul.f32 %v2325, %v2328
    %v2330 = vadd.f32 %v1602, %v2329
    %v2331 = vtanh.pop %v2330
    %v2332 = vsub.f32 1.0, %v2327
    %v2333 = vmul.f32 %v2332, %v2331
    %v2335 = vrot.slane %v2228, 6
    %v2337 = vmul.f32 %v2327, %v2335
    %v2338 = vadd.f32 %v2333, %v2337
    %v2339 = vpack.c.bf16 %v2338, %v2338
    %2340 = vmatprep.subr.bf16.mxu0 %v1746
    %2341 = vmatpush1.bf16.msra.mxu0 %v1745
    %2342 = vmatprep.subr.bf16.mxu0 %v1743
    %2343 = vmatpush1.bf16.msra.mxu0 %v1742
    %2344 = vmatprep.subr.bf16.mxu0 %v1740
    %2345 = vmatpush1.bf16.msra.mxu0 %v1739
    %2346 = vmatprep.subr.bf16.mxu0 %v1737
    %2347 = vmatpush1.bf16.msra.mxu0 %v1736
    %2348 = vmatprep.subr.bf16.mxu0 %v1734
    %2349 = vmatpush1.bf16.msra.mxu0 %v1733
    %2350 = vmatprep.subr.bf16.mxu0 %v1731
    %2351 = vmatpush1.bf16.msra.mxu0 %v1730
    %2352 = vmatprep.subr.bf16.mxu0 %v1728
    %2353 = vmatpush1.bf16.msra.mxu0 %v1727
    %2354 = vmatprep.subr.bf16.mxu0 %v1725
    %2355 = vmatpush1.bf16.msra.mxu0 %v1724
    %2356 = vmatprep.subr.bf16.mxu0 0
    %2357 = vmatpush2.bf16.msra.mxu0 0
    %2358 = vmatprep.subr.bf16.mxu0 0
    %2359 = vmatpush2.bf16.msra.mxu0 0
    %2360 = vmatprep.subr.bf16.mxu0 0
    %2361 = vmatpush2.bf16.msra.mxu0 0
    %2362 = vmatprep.subr.bf16.mxu0 0
    %2363 = vmatpush2.bf16.msra.mxu0 0
    %2364 = vmatprep.subr.bf16.mxu0 0
    %2365 = vmatpush2.bf16.msra.mxu0 0
    %2366 = vmatprep.subr.bf16.mxu0 0
    %2367 = vmatpush2.bf16.msra.mxu0 0
    %2368 = vmatprep.subr.bf16.mxu0 0
    %2369 = vmatpush2.bf16.msra.mxu0 0
    %2370 = vmatprep.subr.bf16.mxu0 0
    %2371 = vmatpush2.bf16.msra.mxu0 0
    %2372 = vmatprep.mubr.bf16.mxu0 0
    %2373 = vmatmul.mubr.bf16.gmra.mxu0 %v2339
    %v2374 = vpop.f32.mrf.mxu0
    %v2375 = vadd.f32 0.0, %v2374
    %v2376 = vpop.f32.mrf.mxu0
    %v2377 = vadd.f32 0.0, %v2376
    %v2378 = vpop.f32.mrf.mxu0
    %v2379 = vpop.f32.mrf.mxu0
    %2380 = vdwg.mxu0
    %2381 = vmatprep.subr.bf16.mxu0 0
    %2382 = vmatpush1.bf16.msra.mxu0 %v1747
    %2383 = vmatprep.subr.bf16.mxu0 0
    %2384 = vmatpush1.bf16.msra.mxu0 %v1744
    %2385 = vmatprep.subr.bf16.mxu0 0
    %2386 = vmatpush1.bf16.msra.mxu0 %v1741
    %2387 = vmatprep.subr.bf16.mxu0 0
    %2388 = vmatpush1.bf16.msra.mxu0 %v1738
    %2389 = vmatprep.subr.bf16.mxu0 0
    %2390 = vmatpush1.bf16.msra.mxu0 %v1735
    %2391 = vmatprep.subr.bf16.mxu0 0
    %2392 = vmatpush1.bf16.msra.mxu0 %v1732
    %2393 = vmatprep.subr.bf16.mxu0 0
    %2394 = vmatpush1.bf16.msra.mxu0 %v1729
    %2395 = vmatprep.subr.bf16.mxu0 0
    %2396 = vmatpush1.bf16.msra.mxu0 %v1726
    %2397 = vmatprep.subr.bf16.mxu0 0
    %2398 = vmatpush2.bf16.msra.mxu0 0
    %2399 = vmatprep.subr.bf16.mxu0 0
    %2400 = vmatpush2.bf16.msra.mxu0 0
    %2401 = vmatprep.subr.bf16.mxu0 0
    %2402 = vmatpush2.bf16.msra.mxu0 0
    %2403 = vmatprep.subr.bf16.mxu0 0
    %2404 = vmatpush2.bf16.msra.mxu0 0
    %2405 = vmatprep.subr.bf16.mxu0 0
    %2406 = vmatpush2.bf16.msra.mxu0 0
    %2407 = vmatprep.subr.bf16.mxu0 0
    %2408 = vmatpush2.bf16.msra.mxu0 0
    %2409 = vmatprep.subr.bf16.mxu0 0
    %2410 = vmatpush2.bf16.msra.mxu0 0
    %2411 = vmatprep.subr.bf16.mxu0 0
    %2412 = vmatpush2.bf16.msra.mxu0 0
    %2413 = vmatprep.mubr.bf16.mxu0 0
    %2414 = vmatmul.mubr.bf16.gmra.mxu0 %v2339
    %v2415 = vpop.f32.mrf.mxu0
    %v2416 = vadd.f32 0.0, %v2415
    %v2417 = vpop.f32.mrf.mxu0
    %v2418 = vpop.f32.mrf.mxu0
    %v2419 = vpop.f32.mrf.mxu0
    %2420 = vdwg.mxu0
    %v2423 = vrot.slane %v2375, 6
    %v2424 = vrot.slane %v2377, 6
    %v2427 = vadd.f32 %v1560, %v2423
    %v2428 = vadd.f32 %v1562, %v2424
    %v2429 = vxor.u32 %v2427, 2147483648
    %v2430 = vxor.u32 %v2428, 2147483648
    %v2431 = vmul.f32 %v2429, 1.442695
    %v2432 = vpow.pop %v2431
    %v2433 = vmul.f32 %v2430, 1.442695
    %v2434 = vpow.pop %v2433
    %v2435 = vadd.f32 %v2432, 1.0
    %v2436 = vadd.f32 %v2434, 1.0
    %v2437 = vrcp.pop %v2435
    %v2438 = vmul.f32 1.0, %v2437
    %v2439 = vrcp.pop %v2436
    %v2440 = vmul.f32 1.0, %v2439
    %v2441 = vadd.f32 %v2416, %v1610
    %v2443 = vrot.slane %v2441, 6
    %v2445 = vmul.f32 %v2438, %v2443
    %v2446 = vadd.f32 %v1602, %v2445
    %v2447 = vtanh.pop %v2446
    %v2448 = vsub.f32 1.0, %v2440
    %v2449 = vmul.f32 %v2448, %v2447
    %v2451 = vrot.slane %v2338, 6
    %v2453 = vmul.f32 %v2440, %v2451
    %v2454 = vadd.f32 %v2449, %v2453
    %v2455 = vpack.c.bf16 %v2454, %v2454
    %v2457 = vrot.slane %v2455, 1
    %2459 = vmatprep.subr.bf16.mxu0 %v1746
    %2460 = vmatpush1.bf16.msra.mxu0 %v1745
    %2461 = vmatprep.subr.bf16.mxu0 %v1743
    %2462 = vmatpush1.bf16.msra.mxu0 %v1742
    %2463 = vmatprep.subr.bf16.mxu0 %v1740
    %2464 = vmatpush1.bf16.msra.mxu0 %v1739
    %2465 = vmatprep.subr.bf16.mxu0 %v1737
    %2466 = vmatpush1.bf16.msra.mxu0 %v1736
    %2467 = vmatprep.subr.bf16.mxu0 %v1734
    %2468 = vmatpush1.bf16.msra.mxu0 %v1733
    %2469 = vmatprep.subr.bf16.mxu0 %v1731
    %2470 = vmatpush1.bf16.msra.mxu0 %v1730
    %2471 = vmatprep.subr.bf16.mxu0 %v1728
    %2472 = vmatpush1.bf16.msra.mxu0 %v1727
    %2473 = vmatprep.subr.bf16.mxu0 %v1725
    %2474 = vmatpush1.bf16.msra.mxu0 %v1724
    %2475 = vmatprep.subr.bf16.mxu0 0
    %2476 = vmatpush2.bf16.msra.mxu0 0
    %2477 = vmatprep.subr.bf16.mxu0 0
    %2478 = vmatpush2.bf16.msra.mxu0 0
    %2479 = vmatprep.subr.bf16.mxu0 0
    %2480 = vmatpush2.bf16.msra.mxu0 0
    %2481 = vmatprep.subr.bf16.mxu0 0
    %2482 = vmatpush2.bf16.msra.mxu0 0
    %2483 = vmatprep.subr.bf16.mxu0 0
    %2484 = vmatpush2.bf16.msra.mxu0 0
    %2485 = vmatprep.subr.bf16.mxu0 0
    %2486 = vmatpush2.bf16.msra.mxu0 0
    %2487 = vmatprep.subr.bf16.mxu0 0
    %2488 = vmatpush2.bf16.msra.mxu0 0
    %2489 = vmatprep.subr.bf16.mxu0 0
    %2490 = vmatpush2.bf16.msra.mxu0 0
    %2491 = vmatprep.mubr.bf16.mxu0 0
    %2492 = vmatmul.mubr.bf16.gmra.mxu0 %v2457
    %v2493 = vpop.f32.mrf.mxu0
    %v2494 = vadd.f32 0.0, %v2493
    %v2495 = vpop.f32.mrf.mxu0
    %v2496 = vadd.f32 0.0, %v2495
    %v2497 = vpop.f32.mrf.mxu0
    %v2498 = vpop.f32.mrf.mxu0
    %2499 = vdwg.mxu0
    %2500 = vmatprep.subr.bf16.mxu0 0
    %2501 = vmatpush1.bf16.msra.mxu0 %v1747
    %2502 = vmatprep.subr.bf16.mxu0 0
    %2503 = vmatpush1.bf16.msra.mxu0 %v1744
    %2504 = vmatprep.subr.bf16.mxu0 0
    %2505 = vmatpush1.bf16.msra.mxu0 %v1741
    %2506 = vmatprep.subr.bf16.mxu0 0
    %2507 = vmatpush1.bf16.msra.mxu0 %v1738
    %2508 = vmatprep.subr.bf16.mxu0 0
    %2509 = vmatpush1.bf16.msra.mxu0 %v1735
    %2510 = vmatprep.subr.bf16.mxu0 0
    %2511 = vmatpush1.bf16.msra.mxu0 %v1732
    %2512 = vmatprep.subr.bf16.mxu0 0
    %2513 = vmatpush1.bf16.msra.mxu0 %v1729
    %2514 = vmatprep.subr.bf16.mxu0 0
    %2515 = vmatpush1.bf16.msra.mxu0 %v1726
    %2516 = vmatprep.subr.bf16.mxu0 0
    %2517 = vmatpush2.bf16.msra.mxu0 0
    %2518 = vmatprep.subr.bf16.mxu0 0
    %2519 = vmatpush2.bf16.msra.mxu0 0
    %2520 = vmatprep.subr.bf16.mxu0 0
    %2521 = vmatpush2.bf16.msra.mxu0 0
    %2522 = vmatprep.subr.bf16.mxu0 0
    %2523 = vmatpush2.bf16.msra.mxu0 0
    %2524 = vmatprep.subr.bf16.mxu0 0
    %2525 = vmatpush2.bf16.msra.mxu0 0
    %2526 = vmatprep.subr.bf16.mxu0 0
    %2527 = vmatpush2.bf16.msra.mxu0 0
    %2528 = vmatprep.subr.bf16.mxu0 0
    %2529 = vmatpush2.bf16.msra.mxu0 0
    %2530 = vmatprep.subr.bf16.mxu0 0
    %2531 = vmatpush2.bf16.msra.mxu0 0
    %2532 = vmatprep.mubr.bf16.mxu0 0
    %2533 = vmatmul.mubr.bf16.gmra.mxu0 %v2457
    %v2534 = vpop.f32.mrf.mxu0
    %v2535 = vadd.f32 0.0, %v2534
    %v2536 = vpop.f32.mrf.mxu0
    %v2537 = vpop.f32.mrf.mxu0
    %v2538 = vpop.f32.mrf.mxu0
    %2539 = vdwg.mxu0
    %v2542 = vrot.slane %v2494, 4
    %v2543 = vrot.slane %v2496, 4
    %v2546 = vadd.f32 %v1560, %v2542
    %v2547 = vadd.f32 %v1562, %v2543
    %v2548 = vxor.u32 %v2546, 2147483648
    %v2549 = vxor.u32 %v2547, 2147483648
    %v2550 = vmul.f32 %v2548, 1.442695
    %v2551 = vpow.pop %v2550
    %v2552 = vmul.f32 %v2549, 1.442695
    %v2553 = vpow.pop %v2552
    %v2554 = vadd.f32 %v2551, 1.0
    %v2555 = vadd.f32 %v2553, 1.0
    %v2556 = vrcp.pop %v2554
    %v2557 = vmul.f32 1.0, %v2556
    %v2558 = vrcp.pop %v2555
    %v2559 = vmul.f32 1.0, %v2558
    %v2560 = vadd.f32 %v2535, %v1610
    %v2562 = vrot.slane %v2560, 4
    %v2564 = vmul.f32 %v2557, %v2562
    %v2565 = vadd.f32 %v1602, %v2564
    %v2566 = vtanh.pop %v2565
    %v2567 = vsub.f32 1.0, %v2559
    %v2568 = vmul.f32 %v2567, %v2566
    %v2570 = vrot.slane %v2454, 6
    %v2572 = vmul.f32 %v2559, %v2570
    %v2573 = vadd.f32 %v2568, %v2572
    %v2574 = vpack.c.bf16 %v2573, %v2573
    %v2576 = vrot.slane %v2574, 2
    %2578 = vmatprep.subr.bf16.mxu0 %v1746
    %2579 = vmatpush1.bf16.msra.mxu0 %v1745
    %2580 = vmatprep.subr.bf16.mxu0 %v1743
    %2581 = vmatpush1.bf16.msra.mxu0 %v1742
    %2582 = vmatprep.subr.bf16.mxu0 %v1740
    %2583 = vmatpush1.bf16.msra.mxu0 %v1739
    %2584 = vmatprep.subr.bf16.mxu0 %v1737
    %2585 = vmatpush1.bf16.msra.mxu0 %v1736
    %2586 = vmatprep.subr.bf16.mxu0 %v1734
    %2587 = vmatpush1.bf16.msra.mxu0 %v1733
    %2588 = vmatprep.subr.bf16.mxu0 %v1731
    %2589 = vmatpush1.bf16.msra.mxu0 %v1730
    %2590 = vmatprep.subr.bf16.mxu0 %v1728
    %2591 = vmatpush1.bf16.msra.mxu0 %v1727
    %2592 = vmatprep.subr.bf16.mxu0 %v1725
    %2593 = vmatpush1.bf16.msra.mxu0 %v1724
    %2594 = vmatprep.subr.bf16.mxu0 0
    %2595 = vmatpush2.bf16.msra.mxu0 0
    %2596 = vmatprep.subr.bf16.mxu0 0
    %2597 = vmatpush2.bf16.msra.mxu0 0
    %2598 = vmatprep.subr.bf16.mxu0 0
    %2599 = vmatpush2.bf16.msra.mxu0 0
    %2600 = vmatprep.subr.bf16.mxu0 0
    %2601 = vmatpush2.bf16.msra.mxu0 0
    %2602 = vmatprep.subr.bf16.mxu0 0
    %2603 = vmatpush2.bf16.msra.mxu0 0
    %2604 = vmatprep.subr.bf16.mxu0 0
    %2605 = vmatpush2.bf16.msra.mxu0 0
    %2606 = vmatprep.subr.bf16.mxu0 0
    %2607 = vmatpush2.bf16.msra.mxu0 0
    %2608 = vmatprep.subr.bf16.mxu0 0
    %2609 = vmatpush2.bf16.msra.mxu0 0
    %2610 = vmatprep.mubr.bf16.mxu0 0
    %2611 = vmatmul.mubr.bf16.gmra.mxu0 %v2576
    %v2612 = vpop.f32.mrf.mxu0
    %v2613 = vadd.f32 0.0, %v2612
    %v2614 = vpop.f32.mrf.mxu0
    %v2615 = vadd.f32 0.0, %v2614
    %v2616 = vpop.f32.mrf.mxu0
    %v2617 = vpop.f32.mrf.mxu0
    %2618 = vdwg.mxu0
    %2619 = vmatprep.subr.bf16.mxu0 0
    %2620 = vmatpush1.bf16.msra.mxu0 %v1747
    %2621 = vmatprep.subr.bf16.mxu0 0
    %2622 = vmatpush1.bf16.msra.mxu0 %v1744
    %2623 = vmatprep.subr.bf16.mxu0 0
    %2624 = vmatpush1.bf16.msra.mxu0 %v1741
    %2625 = vmatprep.subr.bf16.mxu0 0
    %2626 = vmatpush1.bf16.msra.mxu0 %v1738
    %2627 = vmatprep.subr.bf16.mxu0 0
    %2628 = vmatpush1.bf16.msra.mxu0 %v1735
    %2629 = vmatprep.subr.bf16.mxu0 0
    %2630 = vmatpush1.bf16.msra.mxu0 %v1732
    %2631 = vmatprep.subr.bf16.mxu0 0
    %2632 = vmatpush1.bf16.msra.mxu0 %v1729
    %2633 = vmatprep.subr.bf16.mxu0 0
    %2634 = vmatpush1.bf16.msra.mxu0 %v1726
    %2635 = vmatprep.subr.bf16.mxu0 0
    %2636 = vmatpush2.bf16.msra.mxu0 0
    %2637 = vmatprep.subr.bf16.mxu0 0
    %2638 = vmatpush2.bf16.msra.mxu0 0
    %2639 = vmatprep.subr.bf16.mxu0 0
    %2640 = vmatpush2.bf16.msra.mxu0 0
    %2641 = vmatprep.subr.bf16.mxu0 0
    %2642 = vmatpush2.bf16.msra.mxu0 0
    %2643 = vmatprep.subr.bf16.mxu0 0
    %2644 = vmatpush2.bf16.msra.mxu0 0
    %2645 = vmatprep.subr.bf16.mxu0 0
    %2646 = vmatpush2.bf16.msra.mxu0 0
    %2647 = vmatprep.subr.bf16.mxu0 0
    %2648 = vmatpush2.bf16.msra.mxu0 0
    %2649 = vmatprep.subr.bf16.mxu0 0
    %2650 = vmatpush2.bf16.msra.mxu0 0
    %2651 = vmatprep.mubr.bf16.mxu0 0
    %2652 = vmatmul.mubr.bf16.gmra.mxu0 %v2576
    %v2653 = vpop.f32.mrf.mxu0
    %v2654 = vadd.f32 0.0, %v2653
    %v2655 = vpop.f32.mrf.mxu0
    %v2656 = vpop.f32.mrf.mxu0
    %v2657 = vpop.f32.mrf.mxu0
    %2658 = vdwg.mxu0
    %v2661 = vrot.slane %v2613, 2
    %v2662 = vrot.slane %v2615, 2
    %v2665 = vadd.f32 %v1560, %v2661
    %v2666 = vadd.f32 %v1562, %v2662
    %v2667 = vxor.u32 %v2665, 2147483648
    %v2668 = vxor.u32 %v2666, 2147483648
    %v2669 = vmul.f32 %v2667, 1.442695
    %v2670 = vpow.pop %v2669
    %v2671 = vmul.f32 %v2668, 1.442695
    %v2672 = vpow.pop %v2671
    %v2673 = vadd.f32 %v2670, 1.0
    %v2674 = vadd.f32 %v2672, 1.0
    %v2675 = vrcp.pop %v2673
    %v2676 = vmul.f32 1.0, %v2675
    %v2677 = vrcp.pop %v2674
    %v2678 = vmul.f32 1.0, %v2677
    %v2679 = vadd.f32 %v2654, %v1610
    %v2681 = vrot.slane %v2679, 2
    %v2683 = vmul.f32 %v2676, %v2681
    %v2684 = vadd.f32 %v1602, %v2683
    %v2685 = vtanh.pop %v2684
    %v2686 = vsub.f32 1.0, %v2678
    %v2687 = vmul.f32 %v2686, %v2685
    %v2689 = vrot.slane %v2573, 6
    %v2691 = vmul.f32 %v2678, %v2689
    %v2692 = vadd.f32 %v2687, %v2691
    %v2693 = vld [vmem:[%s10] sm:$0xff]
    %v2694 = vld [vmem:[%s10 + $0x8] sm:$0xff]
    %v2695 = vld [vmem:[%s10 + $0x10] sm:$0xff]
    %v2696 = vld [vmem:[%s10 + $0x18] sm:$0xff]
    %v2697 = vld [vmem:[%s10 + $0x20] sm:$0xff]
    %v2698 = vld [vmem:[%s10 + $0x28] sm:$0xff]
    %v2699 = vld [vmem:[%s10 + $0x30] sm:$0xff]
    %v2700 = vld [vmem:[%s10 + $0x38] sm:$0xff]
    %v2701 = vld [vmem:[%s10 + $0x40] sm:$0xff]
    %v2702 = vld [vmem:[%s10 + $0x48] sm:$0xff]
    %v2703 = vld [vmem:[%s10 + $0x50] sm:$0xff]
    %v2704 = vld [vmem:[%s10 + $0x58] sm:$0xff]
    %v2705 = vld [vmem:[%s10 + $0x60] sm:$0xff]
    %v2706 = vld [vmem:[%s10 + $0x68] sm:$0xff]
    %v2707 = vld [vmem:[%s10 + $0x70] sm:$0xff]
    %v2708 = vld [vmem:[%s10 + $0x78] sm:$0xff]
    %v2709 = vld [vmem:[%s1] sm:$0x3]
    %v2710 = vld [vmem:[%s11] sm:$0x1f]
    %vm2711 = vcmask 39936
    %v2713 = vsel %vm2711, %v2709, 0
    %v2716 = vsel %vm1334, %v2710, 0
    %2718 = vmatprep.subr.mxu0 0.0
    %2719 = vmatpush1.msra.mxu0 0.0
    %2720 = vmatprep.subr.mxu0 0.0
    %2721 = vmatpush1.msra.mxu0 0.0
    %2722 = vmatprep.subr.mxu0 0.0
    %2723 = vmatpush1.msra.mxu0 0.0
    %2724 = vmatprep.subr.mxu0 0.0
    %2725 = vmatpush1.msra.mxu0 0.0
    %2726 = vmatprep.subr.mxu0 0.0
    %2727 = vmatpush1.msra.mxu0 0.0
    %2728 = vmatprep.subr.mxu0 0.0
    %2729 = vmatpush1.msra.mxu0 0.0
    %2730 = vmatprep.subr.mxu0 0.0
    %2731 = vmatpush1.msra.mxu0 0.0
    %2732 = vmatprep.subr.mxu0 0.0
    %2733 = vmatpush1.msra.mxu0 0.0
    %2734 = vmatprep.subr.mxu0 0.0
    %2735 = vmatpush1.msra.mxu0 0.0
    %2736 = vmatprep.subr.mxu0 0.0
    %2737 = vmatpush1.msra.mxu0 0.0
    %2738 = vmatprep.subr.mxu0 0.0
    %2739 = vmatpush1.msra.mxu0 0.0
    %2740 = vmatprep.subr.mxu0 0.0
    %2741 = vmatpush1.msra.mxu0 0.0
    %2742 = vmatprep.subr.mxu0 0.0
    %2743 = vmatpush1.msra.mxu0 0.0
    %2744 = vmatprep.subr.mxu0 0.0
    %2745 = vmatpush1.msra.mxu0 0.0
    %2746 = vmatprep.subr.mxu0 0.0
    %2747 = vmatpush1.msra.mxu0 0.0
    %2748 = vmatprep.subr.mxu0 0.0
    %2749 = vmatpush1.msra.mxu0 %v2716
    %2750 = vmatprep.subr.mxu0 0.0
    %2751 = vmatpush2.msra.mxu0 0.0
    %2752 = vmatprep.subr.mxu0 0.0
    %2753 = vmatpush2.msra.mxu0 0.0
    %2754 = vmatprep.subr.mxu0 0.0
    %2755 = vmatpush2.msra.mxu0 0.0
    %2756 = vmatprep.subr.mxu0 0.0
    %2757 = vmatpush2.msra.mxu0 0.0
    %2758 = vmatprep.subr.mxu0 0.0
    %2759 = vmatpush2.msra.mxu0 0.0
    %2760 = vmatprep.subr.mxu0 0.0
    %2761 = vmatpush2.msra.mxu0 0.0
    %2762 = vmatprep.subr.mxu0 0.0
    %2763 = vmatpush2.msra.mxu0 0.0
    %2764 = vmatprep.subr.mxu0 0.0
    %2765 = vmatpush2.msra.mxu0 0.0
    %2766 = vmatprep.subr.mxu0 0.0
    %2767 = vmatpush2.msra.mxu0 0.0
    %2768 = vmatprep.subr.mxu0 0.0
    %2769 = vmatpush2.msra.mxu0 0.0
    %2770 = vmatprep.subr.mxu0 0.0
    %2771 = vmatpush2.msra.mxu0 0.0
    %2772 = vmatprep.subr.mxu0 0.0
    %2773 = vmatpush2.msra.mxu0 0.0
    %2774 = vmatprep.subr.mxu0 0.0
    %2775 = vmatpush2.msra.mxu0 0.0
    %2776 = vmatprep.subr.mxu0 0.0
    %2777 = vmatpush2.msra.mxu0 0.0
    %2778 = vmatprep.subr.mxu0 0.0
    %2779 = vmatpush2.msra.mxu0 0.0
    %2780 = vmatprep.subr.mxu0 0.0
    %2781 = vmatpush2.msra.mxu0 0.0
    %2782 = vmatprep.mubr.f32.mxu0 0.0
    %2783 = vmatmul.mubr.f32.gmra.mxu0 %v2713
    %v2784 = vpop.f32.mrf.mxu0
    %v2785 = vadd.f32 0.0, %v2784
    %v2786 = vpop.f32.mrf.mxu0
    %2787 = vdwg.mxu0
    %v2789 = vrot.slane %v2692, 6
    %2791 = vmatprep.subr.mxu0 0.0
    %2792 = vmatpush1.msra.mxu0 %v2708
    %2793 = vmatprep.subr.mxu0 0.0
    %2794 = vmatpush1.msra.mxu0 %v2707
    %2795 = vmatprep.subr.mxu0 0.0
    %2796 = vmatpush1.msra.mxu0 %v2706
    %2797 = vmatprep.subr.mxu0 0.0
    %2798 = vmatpush1.msra.mxu0 %v2705
    %2799 = vmatprep.subr.mxu0 0.0
    %2800 = vmatpush1.msra.mxu0 %v2704
    %2801 = vmatprep.subr.mxu0 0.0
    %2802 = vmatpush1.msra.mxu0 %v2703
    %2803 = vmatprep.subr.mxu0 0.0
    %2804 = vmatpush1.msra.mxu0 %v2702
    %2805 = vmatprep.subr.mxu0 0.0
    %2806 = vmatpush1.msra.mxu0 %v2701
    %2807 = vmatprep.subr.mxu0 0.0
    %2808 = vmatpush1.msra.mxu0 %v2700
    %2809 = vmatprep.subr.mxu0 0.0
    %2810 = vmatpush1.msra.mxu0 %v2699
    %2811 = vmatprep.subr.mxu0 0.0
    %2812 = vmatpush1.msra.mxu0 %v2698
    %2813 = vmatprep.subr.mxu0 0.0
    %2814 = vmatpush1.msra.mxu0 %v2697
    %2815 = vmatprep.subr.mxu0 0.0
    %2816 = vmatpush1.msra.mxu0 %v2696
    %2817 = vmatprep.subr.mxu0 0.0
    %2818 = vmatpush1.msra.mxu0 %v2695
    %2819 = vmatprep.subr.mxu0 0.0
    %2820 = vmatpush1.msra.mxu0 %v2694
    %2821 = vmatprep.subr.mxu0 0.0
    %2822 = vmatpush1.msra.mxu0 %v2693
    %2823 = vmatprep.subr.mxu0 0.0
    %2824 = vmatpush2.msra.mxu0 0.0
    %2825 = vmatprep.subr.mxu0 0.0
    %2826 = vmatpush2.msra.mxu0 0.0
    %2827 = vmatprep.subr.mxu0 0.0
    %2828 = vmatpush2.msra.mxu0 0.0
    %2829 = vmatprep.subr.mxu0 0.0
    %2830 = vmatpush2.msra.mxu0 0.0
    %2831 = vmatprep.subr.mxu0 0.0
    %2832 = vmatpush2.msra.mxu0 0.0
    %2833 = vmatprep.subr.mxu0 0.0
    %2834 = vmatpush2.msra.mxu0 0.0
    %2835 = vmatprep.subr.mxu0 0.0
    %2836 = vmatpush2.msra.mxu0 0.0
    %2837 = vmatprep.subr.mxu0 0.0
    %2838 = vmatpush2.msra.mxu0 0.0
    %2839 = vmatprep.subr.mxu0 0.0
    %2840 = vmatpush2.msra.mxu0 0.0
    %2841 = vmatprep.subr.mxu0 0.0
    %2842 = vmatpush2.msra.mxu0 0.0
    %2843 = vmatprep.subr.mxu0 0.0
    %2844 = vmatpush2.msra.mxu0 0.0
    %2845 = vmatprep.subr.mxu0 0.0
    %2846 = vmatpush2.msra.mxu0 0.0
    %2847 = vmatprep.subr.mxu0 0.0
    %2848 = vmatpush2.msra.mxu0 0.0
    %2849 = vmatprep.subr.mxu0 0.0
    %2850 = vmatpush2.msra.mxu0 0.0
    %2851 = vmatprep.subr.mxu0 0.0
    %2852 = vmatpush2.msra.mxu0 0.0
    %2853 = vmatprep.subr.mxu0 0.0
    %2854 = vmatpush2.msra.mxu0 0.0
    %2855 = vmatprep.mubr.f32.mxu0 0.0
    %2856 = vmatmul.mubr.f32.gmra.mxu0 %v2789
    %v2857 = vpop.f32.mrf.mxu0
    %v2858 = vadd.f32 %v2785, %v2857
    %v2859 = vpop.f32.mrf.mxu0
    %2860 = vdwg.mxu0
    %v2861 = vld [vmem:[%s12] sm:$0x1]
    %v2863 = vlaneseq
    %v2864 = vshrl.u32 %v2863, 7
    %v2865 = vsub.s32 0, %v2864
    %v2866 = vrot.slane %v2861, %v2865
    %v2868 = vadd.f32 %v2858, %v2866
    %vm2869 = vcmask 17408
    %2870 = vst.msk [vmem:[#allocation8] sm:$0x3] %vm2869, %v2868
    // Predicated region
    $region66: #{tpu_custom_call.1} parent=1 // pred_check
      _
    $region67: #{tpu_custom_call.1} parent=1 // pred_check_branch
      %2872 = sbr.rel (0) target = $region69
    $region68: #{tpu_custom_call.1} parent=1 // pred_region
      %s2874 = ssub.s32 32, 32
      %2875 = vsyncadd [#allocation4], %s2874
      %s2877 = sshll.u32 [#allocation8], 4
      %s2878 = int_to_ptr.vmem [resolvable:$true] %s2877
      %2880 = dma.vmem_to_hbm [thread:$0]  %s2878, 32, %s13, [#allocation4]
    $region69: #{tpu_custom_call.1} parent=1 // pred_fallthru
      _
    // Predicated region
    $region70: #{tpu_custom_call.1} parent=1 // pred_check
      _
    $region71: #{tpu_custom_call.1} parent=1 // pred_check_branch
      %2882 = sbr.rel (0) target = $region73
    $region72: #{tpu_custom_call.1} parent=1 // pred_region
      %2883 = dma.done [#allocation4], 32
    $region73: #{tpu_custom_call.1} parent=1 // pred_fallthru
      _
    %2884 = vsyncpa [#allocation3], 1
    %2885 = vsyncpa [#allocation6], 1
    %2886 = vsyncpa [#allocation4], 1

</llo_original>
